<compile_context>
chip_gen: v6e
topology: v6e:2x2x1
jax: 0.10.0
libtpu: 0.0.40
codegen_flags: <defaults>
</compile_context>

<pallas_src>
import functools

import jax
import jax.numpy as jnp
from jax.experimental import pallas as pl
from jax.experimental.pallas import tpu as pltpu

_G = 8  # guard rows at both ends of the flattened slabs (covers the +/-1 tap over-read)


# ----------------------------------------------------------------------------
# Generation-aware VMEM budgets (review items 5/6)
# ----------------------------------------------------------------------------
@functools.lru_cache(maxsize=None)
def _vmem_caps():
    cap = 64 * 1024 * 1024  # conservative default (v7x per-TC VMEM)
    try:
        info = pltpu.get_tpu_info()
        val = getattr(info, "vmem_capacity_bytes", None)
        if val:
            cap = int(val)
    except Exception:
        pass
    if cap <= 80 * 1024 * 1024:  # v7x-class: 64 MiB per TensorCore
        return {"limit": 40 << 20, "fused": 26 << 20, "tile": 14 << 20}
    # v5e / v6e class: 128 MiB VMEM
    return {"limit": 96 << 20, "fused": 72 << 20, "tile": 48 << 20}


def _rup(x, m):
    return ((x + m - 1) // m) * m


def _fused_vmem_bytes(H, W, C):
    """Rough VMEM footprint of the fused-body kernel (128-lane padded)."""
    PW = W + 2
    hp = (H + 2) * PW
    M = H * PW
    cl = _rup(C, 128)
    k9 = _rup(9 * C, 128)
    byt = (hp + 2 * _G) * cl * 4        # feat_s  (f32 resident accumulator)
    byt += (hp + 2 * _G) * cl * 2       # h_s     (bf16 intermediate)
    byt += 2 * hp * cl * 2              # feat0 input blocks (double-buffered)
    byt += 2 * hp * cl * 2              # output blocks (double-buffered)
    byt += M * k9 * 2                   # 9-tap im2col operand (bf16)
    byt += M * cl * 4                   # f32 conv accumulator / epilogue temp
    byt += 8 * 9 * C * cl * 2           # streamed weight blocks + slack
    return byt


def _tiled_vmem_bytes(tH, W, C):
    PW = W + 2
    cl = _rup(C, 128)
    k9 = _rup(9 * C, 128)
    s_in = (tH + 4) * PW
    m_h = (tH + 2) * PW
    byt = (s_in + 2 * _G) * cl * 2      # xslab (bf16)
    byt += (m_h + 2 * _G) * cl * 2      # hbuf  (bf16)
    byt += tH * PW * cl * 2             # obuf  (bf16)
    byt += m_h * k9 * 2                 # im2col operand (largest pass: conv1)
    byt += m_h * cl * 4                 # f32 accumulator
    byt += 4 * 9 * C * cl * 2           # weights
    return byt


def _pick_tile_h(H, W, C, budget):
    """Largest divisor of H whose tile footprint fits `budget` (no 64-row cap)."""
    for d in sorted((d for d in range(1, H + 1) if H % d == 0), reverse=True):
        if _tiled_vmem_bytes(d, W, C) <= budget:
            return d
    return 1


# ----------------------------------------------------------------------------
# In-kernel 3x3 conv helper: single K = 9*Cin MXU pass (review item 3)
# ----------------------------------------------------------------------------
def _conv9(src_ref, w9, base, m, pw):
    """3x3 conv over a flattened, W-padded slab held in VMEM.

    src_ref : flat slab ref; rows have width pw = W+2 with zero halo columns,
              so dy/dx tap shifts are plain row offsets (free pl.ds views).
    w9      : (9*Cin, Cout) bf16 weights, row order (dy, dx, cin).
    base    : flat offset such that tap (dy, dx) starts at base + dy*pw + dx.
    Returns a (m, Cout) float32 accumulator.  Positions in the halo columns
    (and the one guard-row over-read at each end) are garbage and must be
    discarded with a where-select by the caller.
    """
    taps = [src_ref[pl.ds(base + dy * pw + dx, m), :].astype(jnp.bfloat16)
            for dy in range(3) for dx in range(3)]
    x9 = jnp.concatenate(taps, axis=-1)                 # (m, 9*Cin) bf16
    return jnp.dot(x9, w9, preferred_element_type=jnp.float32)


# ----------------------------------------------------------------------------
# Fused kernel: the entire residual body, feature map resident in VMEM
# ----------------------------------------------------------------------------
def _make_fused_body_kernel(H, W, C):
    PW = W + 2
    HPPW = (H + 2) * PW          # padded feature-map rows (1-px zero ring)
    M = H * PW                   # interior rows written per conv
    G = _G

    def kernel(feat0_ref, w1_ref, b1_ref, w2_ref, b2_ref, out_ref,
               feat_s, h_s):
        k = pl.program_id(1)     # residual-block index (grid axis "arbitrary")

        # ---- per-image init: load feat into the resident f32 accumulator ----
        @pl.when(k == 0)
        def _init():
            # h's ring rows (outside the image) are conv2's zero padding; they
            # are written once here and never touched again.
            zrow = jnp.zeros((PW, C), h_s.dtype)
            h_s[pl.ds(G, PW), :] = zrow
            h_s[pl.ds(G + (H + 1) * PW, PW), :] = zrow
            feat_s[pl.ds(G, HPPW), :] = feat0_ref[...].astype(jnp.float32)

        # Interior-column mask: halo columns (x == 0, x == PW-1) are zeroed by
        # a select on the accumulator (review item 2).  Guard-row garbage only
        # ever reaches masked positions, so it is discarded, never multiplied.
        col = jax.lax.broadcasted_iota(jnp.int32, (M, 1), 0) % PW
        keep = jnp.logical_and(col != 0, col != PW - 1)

        w1 = w1_ref[...]         # (9C, C) bf16
        w2 = w2_ref[...]
        b1 = b1_ref[...]         # (1, C) f32
        b2 = b2_ref[...]

        # conv1 + ReLU  (single K = 9*C MXU pass; bias folded into epilogue)
        acc1 = _conv9(feat_s, w1, G - 1, M, PW)
        h_s[pl.ds(G + PW, M), :] = jnp.where(
            keep, jnp.maximum(acc1 + b1, 0.0), 0.0).astype(h_s.dtype)

        # conv2 + residual add (the f32 residual accumulator never leaves VMEM)
        acc2 = _conv9(h_s, w2, G - 1, M, PW)
        res = feat_s[pl.ds(G + PW, M), :]
        feat_s[pl.ds(G + PW, M), :] = jnp.where(keep, res + acc2 + b2, 0.0)

        @pl.when(k == pl.num_programs(1) - 1)
        def _finalize():
            out_ref[...] = feat_s[pl.ds(G, HPPW), :].astype(out_ref.dtype)

    return kernel


def _body_fused_pallas(feat0, w1s, b1s, w2s, b2s, *, H, W, vmem_limit):
    B = feat0.shape[0]
    C = w1s.shape[-1]
    n_blocks = w1s.shape[0]
    PW = W + 2
    HPPW = (H + 2) * PW
    kernel = _make_fused_body_kernel(H, W, C)
    return pl.pallas_call(
        kernel,
        out_shape=jax.ShapeDtypeStruct((B, HPPW, C), jnp.bfloat16),
        grid_spec=pltpu.PrefetchScalarGridSpec(
            num_scalar_prefetch=0,
            grid=(B, n_blocks),
            in_specs=[
                # feature map: fetched once per batch element (index ignores k)
                pl.BlockSpec((None, HPPW, C), lambda b, k: (b, 0, 0)),
                # per-block weights, streamed (auto double-buffered) over k
                pl.BlockSpec((None, 9 * C, C), lambda b, k: (k, 0, 0)),
                pl.BlockSpec((None, 1, C), lambda b, k: (k, 0, 0)),
                pl.BlockSpec((None, 9 * C, C), lambda b, k: (k, 0, 0)),
                pl.BlockSpec((None, 1, C), lambda b, k: (k, 0, 0)),
            ],
            out_specs=pl.BlockSpec((None, HPPW, C), lambda b, k: (b, 0, 0)),
            scratch_shapes=[
                pltpu.VMEM((HPPW + 2 * _G, C), jnp.float32),   # resident feat
                pltpu.VMEM((HPPW + 2 * _G, C), jnp.bfloat16),  # intermediate h
            ],
        ),
        compiler_params=pltpu.CompilerParams(
            dimension_semantics=("parallel", "arbitrary"),
            vmem_limit_bytes=vmem_limit,
        ),
    )(feat0, w1s, b1s, w2s, b2s)


# ----------------------------------------------------------------------------
# Fallback kernel (feature map too large for VMEM): per-block, row-tiled
# ----------------------------------------------------------------------------
def _make_resblock_kernel(H, W, tH, C):
    PW = W + 2
    S_IN = (tH + 4) * PW          # input slab rows (2-row halo each side)
    M_H = (tH + 2) * PW           # h rows computed (1-row halo for conv2)
    M_O = tH * PW                 # output rows of this tile
    G = _G

    def kernel(feat_hbm, w1_ref, b1_ref, w2_ref, b2_ref, out_hbm,
               xslab, hbuf, obuf, sem):
        b = pl.program_id(0)
        i = pl.program_id(1)
        n_h = pl.num_programs(1)

        # Fetch padded feat rows [i*tH, i*tH + tH + 4).
        # TODO(synk): double-buffer this slab DMA (prefetch tile i+1, defer the
        # output-copy wait) so HBM traffic overlaps compute on this path too.
        cp_in = pltpu.make_async_copy(
            feat_hbm.at[b, pl.ds(i * tH * PW, S_IN), :],
            xslab.at[pl.ds(G, S_IN), :],
            sem.at[0])
        cp_in.start()
        cp_in.wait()

        # Rows above/below the image must be zero padding (the HBM halo rows of
        # the previous block's output are never written) -> overwrite with 0.
        @pl.when(i == 0)
        def _():
            xslab[pl.ds(G, 2 * PW), :] = jnp.zeros((2 * PW, C), xslab.dtype)

        @pl.when(i == n_h - 1)
        def _():
            xslab[pl.ds(G + (tH + 2) * PW, 2 * PW), :] = jnp.zeros(
                (2 * PW, C), xslab.dtype)

        col_h = jax.lax.broadcasted_iota(jnp.int32, (M_H, 1), 0) % PW
        keep_h = jnp.logical_and(col_h != 0, col_h != PW - 1)
        col_o = jax.lax.broadcasted_iota(jnp.int32, (M_O, 1), 0) % PW
        keep_o = jnp.logical_and(col_o != 0, col_o != PW - 1)

        # conv1 + ReLU over tH + 2 rows so conv2's row halo stays in VMEM.
        acc1 = _conv9(xslab, w1_ref[...], G - 1, M_H, PW)
        hbuf[pl.ds(G, M_H), :] = jnp.where(
            keep_h, jnp.maximum(acc1 + b1_ref[...], 0.0), 0.0).astype(hbuf.dtype)

        # h outside the image is zero padding for conv2.
        @pl.when(i == 0)
        def _():
            hbuf[pl.ds(G, PW), :] = jnp.zeros((PW, C), hbuf.dtype)

        @pl.when(i == n_h - 1)
        def _():
            hbuf[pl.ds(G + (tH + 1) * PW, PW), :] = jnp.zeros(
                (PW, C), hbuf.dtype)

        # conv2 + residual (residual is a free view of the input slab).
        acc2 = _conv9(hbuf, w2_ref[...], G - 1, M_O, PW)
        res = xslab[pl.ds(G + 2 * PW, M_O), :].astype(jnp.float32)
        obuf[...] = jnp.where(
            keep_o, res + acc2 + b2_ref[...], 0.0).astype(obuf.dtype)

        cp_out = pltpu.make_async_copy(
            obuf,
            out_hbm.at[b, pl.ds((i * tH + 2) * PW, M_O), :],
            sem.at[1])
        cp_out.start()
        cp_out.wait()

    return kernel


def _resblock_pallas(feat, w1g, b1, w2g, b2, *, H, W, tH, vmem_limit):
    B = feat.shape[0]
    C = w1g.shape[-1]
    PW = W + 2
    n_h = H // tH
    S_IN = (tH + 4) * PW
    M_H = (tH + 2) * PW
    M_O = tH * PW
    kernel = _make_resblock_kernel(H, W, tH, C)
    return pl.pallas_call(
        kernel,
        out_shape=jax.ShapeDtypeStruct((B, (H + 4) * PW, C), jnp.bfloat16),
        grid_spec=pltpu.PrefetchScalarGridSpec(
            num_scalar_prefetch=0,
            grid=(B, n_h),
            in_specs=[
                pl.BlockSpec(memory_space=pl.ANY),                 # feat (HBM)
                pl.BlockSpec((9 * C, C), lambda b, i: (0, 0)),
                pl.BlockSpec((1, C), lambda b, i: (0, 0)),
                pl.BlockSpec((9 * C, C), lambda b, i: (0, 0)),
                pl.BlockSpec((1, C), lambda b, i: (0, 0)),
            ],
            out_specs=pl.BlockSpec(memory_space=pl.ANY),           # new feat
            scratch_shapes=[
                pltpu.VMEM((S_IN + 2 * _G, C), jnp.bfloat16),
                pltpu.VMEM((M_H + 2 * _G, C), jnp.bfloat16),
                pltpu.VMEM((M_O, C), jnp.bfloat16),
                pltpu.SemaphoreType.DMA((2,)),
            ],
        ),
        compiler_params=pltpu.CompilerParams(
            dimension_semantics=("parallel", "arbitrary"),
            vmem_limit_bytes=vmem_limit,
        ),
    )(feat, w1g, b1, w2g, b2)


# ----------------------------------------------------------------------------
# Parameter helpers
# ----------------------------------------------------------------------------
def _w9(w):
    """(3, 3, Cin, Cout) f32 -> (9*Cin, Cout) bf16, row order (dy, dx, cin).

    NOTE: real PyTorch Conv2d weights (Cout, Cin, 3, 3) must first be permuted
    with w.transpose(2, 3, 1, 0) to the (3, 3, Cin, Cout) layout used here.
    """
    return w.reshape(9 * w.shape[2], w.shape[3]).astype(jnp.bfloat16)


def make_content_extractor_params(key, in_nc=3, nf=64, n_blocks=16):
    """Synthetic params: w (3,3,Cin,Cout) f32, b (Cout,) f32.

    Mimics default_init_weights(scale=0.1), zero biases.
    """
    def conv_params(k, cin, cout, scale):
        std = (2.0 / (cin * 9)) ** 0.5
        w = scale * std * jax.random.normal(k, (3, 3, cin, cout), jnp.float32)
        b = jnp.zeros((cout,), jnp.float32)
        return w, b

    keys = jax.random.split(key, 1 + 2 * n_blocks)
    params = {"conv_first": conv_params(keys[0], in_nc, nf, 0.1), "body": []}
    for i in range(n_blocks):
        w1, b1 = conv_params(keys[1 + 2 * i], nf, nf, 0.1)
        w2, b2 = conv_params(keys[2 + 2 * i], nf, nf, 0.1)
        params["body"].append(((w1, b1), (w2, b2)))
    return params


# ----------------------------------------------------------------------------
# Forward pass (matches PyTorch ContentExtractor.forward semantics)
# ----------------------------------------------------------------------------
def _conv_first_xla(x_nhwc, w0, b0):
    # conv_first + LeakyReLU(0.1): negligible FLOPs, Cin=3 would waste the MXU
    # lanes in a Pallas kernel -> let XLA handle it (review item 10).
    y = jax.lax.conv_general_dilated(
        x_nhwc, w0, (1, 1), "SAME",
        dimension_numbers=("NHWC", "HWIO", "NHWC"),
        precision=jax.lax.Precision.HIGHEST) + b0
    return jnp.where(y >= 0.0, y, 0.1 * y)


@jax.jit
def content_extractor_forward(params, x_nchw):
    """x_nchw: (B, in_nc, H, W) float32 -> (B, nf, H, W) float32."""
    B, _, H, W = x_nchw.shape
    w0, b0 = params["conv_first"]
    nf = w0.shape[-1]
    PW = W + 2
    caps = _vmem_caps()
    body = params["body"]

    x = jnp.transpose(x_nchw, (0, 2, 3, 1)).astype(jnp.float32)
    feat = _conv_first_xla(x, w0, b0)                       # (B, H, W, nf) f32

    if _fused_vmem_bytes(H, W, nf) <= caps["fused"]:
        # ---- fused path: all residual blocks in one pallas_call ------------
        feat0 = jnp.pad(feat, ((0, 0), (1, 1), (1, 1), (0, 0)))
        feat0 = feat0.reshape(B, (H + 2) * PW, nf).astype(jnp.bfloat16)
        w1s = jnp.stack([_w9(blk[0][0]) for blk in body])
        b1s = jnp.stack([blk[0][1].reshape(1, nf).astype(jnp.float32)
                         for blk in body])
        w2s = jnp.stack([_w9(blk[1][0]) for blk in body])
        b2s = jnp.stack([blk[1][1].reshape(1, nf).astype(jnp.float32)
                         for blk in body])
        out = _body_fused_pallas(feat0, w1s, b1s, w2s, b2s,
                                 H=H, W=W, vmem_limit=caps["limit"])
        out = out.reshape(B, H + 2, PW, nf)[:, 1:H + 1, 1:W + 1, :]
    else:
        # ---- fallback: per-block row-tiled kernels (huge feature maps) -----
        tH = _pick_tile_h(H, W, nf, caps["tile"])
        ff = jnp.pad(feat, ((0, 0), (2, 2), (1, 1), (0, 0)))
        ff = ff.reshape(B, (H + 4) * PW, nf).astype(jnp.bfloat16)
        for (w1, b1), (w2, b2) in body:
            ff = _resblock_pallas(
                ff, _w9(w1), b1.reshape(1, nf).astype(jnp.float32),
                _w9(w2), b2.reshape(1, nf).astype(jnp.float32),
                H=H, W=W, tH=tH, vmem_limit=caps["limit"])
        out = ff.reshape(B, H + 4, PW, nf)[:, 2:H + 2, 1:W + 1, :]

    return jnp.transpose(out, (0, 3, 1, 2)).astype(jnp.float32)


# ----------------------------------------------------------------------------
# Pure-JAX reference (f32) for a sanity check
# ----------------------------------------------------------------------------
def content_extractor_reference(params, x_nchw):
    x = jnp.transpose(x_nchw, (0, 2, 3, 1)).astype(jnp.float32)

    def conv(a, w, b):
        y = jax.lax.conv_general_dilated(
            a, w, (1, 1), "SAME",
            dimension_numbers=("NHWC", "HWIO", "NHWC"),
            precision=jax.lax.Precision.HIGHEST)
        return y + b

    w0, b0 = params["conv_first"]
    feat = conv(x, w0, b0)
    feat = jnp.where(feat >= 0, feat, 0.1 * feat)
    for (w1, b1), (w2, b2) in params["body"]:
        h = jnp.maximum(conv(feat, w1, b1), 0.0)
        feat = feat + conv(h, w2, b2)
    return jnp.transpose(feat, (0, 3, 1, 2))


# ----------------------------------------------------------------------------
if __name__ == "__main__":
    # Small synthetic configuration (module defaults are nf=64, n_blocks=16).
    B, in_nc, H, W = 2, 3, 16, 16
    nf, n_blocks = 32, 4

    key = jax.random.PRNGKey(0)
    k_x, k_p = jax.random.split(key)
    x = jax.random.normal(k_x, (B, in_nc, H, W), jnp.float32)
    params = make_content_extractor_params(k_p, in_nc=in_nc, nf=nf,
                                           n_blocks=n_blocks)

    out = content_extractor_forward(params, x)
    jax.block_until_ready(out)

    assert out.shape == (B, nf, H, W), out.shape
    assert bool(jnp.isfinite(out).all())

    # bf16 matmul operands -> loose tolerance (residual chain itself is f32 now).
    ref = content_extractor_reference(params, x)
    err = float(jnp.max(jnp.abs(out - ref)))
    assert err < 7.5e-2, ("max abs error vs reference", err)

    print("KERNEL_OK")
</pallas_src>

<mosaic_0001>
module attributes {stable_mosaic.version = 11 : i64} {
  func.func @kernel(%arg0: i32, %arg1: i32, %arg2: memref<1x324x32xbf16, #tpu.memory_space<vmem>>, %arg3: memref<1x288x32xbf16, #tpu.memory_space<vmem>>, %arg4: memref<1x1x32xf32, #tpu.memory_space<vmem>>, %arg5: memref<1x288x32xbf16, #tpu.memory_space<vmem>>, %arg6: memref<1x1x32xf32, #tpu.memory_space<vmem>>, %arg7: memref<1x324x32xbf16, #tpu.memory_space<vmem>>, %arg8: memref<340x32xf32, #tpu.memory_space<vmem>>, %arg9: memref<340x32xbf16, #tpu.memory_space<vmem>>) attributes {dimension_semantics = [#tpu.dimension_semantics<parallel>, #tpu.dimension_semantics<arbitrary>], iteration_bounds = array<i64: 2, 4>, scalar_prefetch = 0 : i64, scratch_operands = 2 : i64, tpu.core_type = #tpu.core_type<tc>, window_params = [{transform_indices = @transform_0, window_bounds = array<i64: 1, 324, 32>}, {transform_indices = @transform_1, window_bounds = array<i64: 1, 288, 32>}, {transform_indices = @transform_2, window_bounds = array<i64: 1, 1, 32>}, {transform_indices = @transform_3, window_bounds = array<i64: 1, 288, 32>}, {transform_indices = @transform_4, window_bounds = array<i64: 1, 1, 32>}, {transform_indices = @transform_5, window_bounds = array<i64: 1, 324, 32>}]} {
    %c0_i32 = arith.constant 0 : i32
    %0 = arith.cmpi eq, %arg1, %c0_i32 : i32
    %1 = arith.extui %0 : i1 to i32
    %c0_i32_0 = arith.constant 0 : i32
    %2 = arith.cmpi ne, %1, %c0_i32_0 : i32
    scf.if %2 {
      %cst_55 = arith.constant 0.000000e+00 : bf16
      %86 = vector.broadcast %cst_55 : bf16 to vector<18x32xbf16>
      %c8_56 = arith.constant 8 : index
      %c0_57 = arith.constant 0 : index
      %87 = vector.load %arg9[%c8_56, %c0_57] : memref<340x32xbf16, #tpu.memory_space<vmem>>, vector<18x32xbf16>
      tpu.vector_store %arg9[%c8_56, %c0_57], %86 {strides = array<i32>} : memref<340x32xbf16, #tpu.memory_space<vmem>>, vector<18x32xbf16>,
      %c314 = arith.constant 314 : index
      %c0_58 = arith.constant 0 : index
      %88 = vector.load %arg9[%c314, %c0_58] : memref<340x32xbf16, #tpu.memory_space<vmem>>, vector<18x32xbf16>
      tpu.vector_store %arg9[%c314, %c0_58], %86 {strides = array<i32>} : memref<340x32xbf16, #tpu.memory_space<vmem>>, vector<18x32xbf16>,
      %c0_59 = arith.constant 0 : index
      %c0_60 = arith.constant 0 : index
      %c0_61 = arith.constant 0 : index
      %89 = vector.load %arg2[%c0_59, %c0_60, %c0_61] : memref<1x324x32xbf16, #tpu.memory_space<vmem>>, vector<1x324x32xbf16>
      %90 = vector.shape_cast %89 : vector<1x324x32xbf16> to vector<324x32xbf16>
      %91 = arith.extf %90 : vector<324x32xbf16> to vector<324x32xf32>
      %c8_62 = arith.constant 8 : index
      %c0_63 = arith.constant 0 : index
      %92 = vector.load %arg8[%c8_62, %c0_63] : memref<340x32xf32, #tpu.memory_space<vmem>>, vector<324x32xf32>
      tpu.vector_store %arg8[%c8_62, %c0_63], %91 {strides = array<i32>} : memref<340x32xf32, #tpu.memory_space<vmem>>, vector<324x32xf32>,
    } else {
    }
    %3 = tpu.iota {dimensions = array<i32: 0>} : vector<288x1xi32>
    %c18_i32 = arith.constant 18 : i32
    %c0_i32_1 = arith.constant 0 : i32
    %4 = arith.cmpi eq, %c18_i32, %c0_i32_1 : i32
    %c1_i32 = arith.constant 1 : i32
    %5 = arith.select %4, %c1_i32, %c18_i32 : i32
    %6 = vector.broadcast %5 : i32 to vector<288x1xi32>
    %7 = arith.remsi %3, %6 : vector<288x1xi32>
    %c0_i32_2 = arith.constant 0 : i32
    %8 = vector.broadcast %c0_i32_2 : i32 to vector<288x1xi32>
    %9 = arith.cmpi ne, %7, %8 : vector<288x1xi32>
    %c0_i32_3 = arith.constant 0 : i32
    %10 = vector.broadcast %c0_i32_3 : i32 to vector<288x1xi32>
    %11 = arith.cmpi slt, %7, %10 : vector<288x1xi32>
    %c0_i32_4 = arith.constant 0 : i32
    %12 = arith.cmpi slt, %5, %c0_i32_4 : i32
    %13 = vector.broadcast %12 : i1 to vector<288x1xi1>
    %14 = vector.broadcast %13 : vector<288x1xi1> to vector<288x1xi1>
    %15 = arith.xori %11, %14 : vector<288x1xi1>
    %16 = arith.andi %15, %9 : vector<288x1xi1>
    %17 = vector.broadcast %5 : i32 to vector<288x1xi32>
    %18 = arith.addi %7, %17 : vector<288x1xi32>
    %19 = arith.select %16, %18, %7 : vector<288x1xi1>, vector<288x1xi32>
    %c0_i32_5 = arith.constant 0 : i32
    %20 = vector.broadcast %c0_i32_5 : i32 to vector<288x1xi32>
    %21 = arith.cmpi ne, %19, %20 : vector<288x1xi32>
    %c17_i32 = arith.constant 17 : i32
    %22 = vector.broadcast %c17_i32 : i32 to vector<288x1xi32>
    %23 = arith.cmpi ne, %19, %22 : vector<288x1xi32>
    %24 = arith.andi %21, %23 : vector<288x1xi1>
    %c0 = arith.constant 0 : index
    %c0_6 = arith.constant 0 : index
    %c0_7 = arith.constant 0 : index
    %25 = vector.load %arg3[%c0, %c0_6, %c0_7] : memref<1x288x32xbf16, #tpu.memory_space<vmem>>, vector<1x288x32xbf16>
    %26 = vector.shape_cast %25 : vector<1x288x32xbf16> to vector<288x32xbf16>
    %c0_8 = arith.constant 0 : index
    %c0_9 = arith.constant 0 : index
    %c0_10 = arith.constant 0 : index
    %27 = vector.load %arg5[%c0_8, %c0_9, %c0_10] : memref<1x288x32xbf16, #tpu.memory_space<vmem>>, vector<1x288x32xbf16>
    %28 = vector.shape_cast %27 : vector<1x288x32xbf16> to vector<288x32xbf16>
    %c0_11 = arith.constant 0 : index
    %c0_12 = arith.constant 0 : index
    %c0_13 = arith.constant 0 : index
    %29 = vector.load %arg4[%c0_11, %c0_12, %c0_13] : memref<1x1x32xf32, #tpu.memory_space<vmem>>, vector<1x1x32xf32>
    %30 = vector.shape_cast %29 : vector<1x1x32xf32> to vector<1x32xf32>
    %c0_14 = arith.constant 0 : index
    %c0_15 = arith.constant 0 : index
    %c0_16 = arith.constant 0 : index
    %31 = vector.load %arg6[%c0_14, %c0_15, %c0_16] : memref<1x1x32xf32, #tpu.memory_space<vmem>>, vector<1x1x32xf32>
    %32 = vector.shape_cast %31 : vector<1x1x32xf32> to vector<1x32xf32>
    %c7 = arith.constant 7 : index
    %c0_17 = arith.constant 0 : index
    %33 = vector.load %arg8[%c7, %c0_17] : memref<340x32xf32, #tpu.memory_space<vmem>>, vector<288x32xf32>
    %34 = arith.truncf %33 : vector<288x32xf32> to vector<288x32xbf16>
    %c8 = arith.constant 8 : index
    %c0_18 = arith.constant 0 : index
    %35 = vector.load %arg8[%c8, %c0_18] : memref<340x32xf32, #tpu.memory_space<vmem>>, vector<288x32xf32>
    %36 = arith.truncf %35 : vector<288x32xf32> to vector<288x32xbf16>
    %c9 = arith.constant 9 : index
    %c0_19 = arith.constant 0 : index
    %37 = vector.load %arg8[%c9, %c0_19] : memref<340x32xf32, #tpu.memory_space<vmem>>, vector<288x32xf32>
    %38 = arith.truncf %37 : vector<288x32xf32> to vector<288x32xbf16>
    %c25 = arith.constant 25 : index
    %c0_20 = arith.constant 0 : index
    %39 = vector.load %arg8[%c25, %c0_20] : memref<340x32xf32, #tpu.memory_space<vmem>>, vector<288x32xf32>
    %40 = arith.truncf %39 : vector<288x32xf32> to vector<288x32xbf16>
    %c26 = arith.constant 26 : index
    %c0_21 = arith.constant 0 : index
    %41 = vector.load %arg8[%c26, %c0_21] : memref<340x32xf32, #tpu.memory_space<vmem>>, vector<288x32xf32>
    %42 = arith.truncf %41 : vector<288x32xf32> to vector<288x32xbf16>
    %c27 = arith.constant 27 : index
    %c0_22 = arith.constant 0 : index
    %43 = vector.load %arg8[%c27, %c0_22] : memref<340x32xf32, #tpu.memory_space<vmem>>, vector<288x32xf32>
    %44 = arith.truncf %43 : vector<288x32xf32> to vector<288x32xbf16>
    %c43 = arith.constant 43 : index
    %c0_23 = arith.constant 0 : index
    %45 = vector.load %arg8[%c43, %c0_23] : memref<340x32xf32, #tpu.memory_space<vmem>>, vector<288x32xf32>
    %46 = arith.truncf %45 : vector<288x32xf32> to vector<288x32xbf16>
    %c44 = arith.constant 44 : index
    %c0_24 = arith.constant 0 : index
    %47 = vector.load %arg8[%c44, %c0_24] : memref<340x32xf32, #tpu.memory_space<vmem>>, vector<288x32xf32>
    %48 = arith.truncf %47 : vector<288x32xf32> to vector<288x32xbf16>
    %c45 = arith.constant 45 : index
    %c0_25 = arith.constant 0 : index
    %49 = vector.load %arg8[%c45, %c0_25] : memref<340x32xf32, #tpu.memory_space<vmem>>, vector<288x32xf32>
    %50 = arith.truncf %49 : vector<288x32xf32> to vector<288x32xbf16>
    %51 = tpu.concatenate %34, %36, %38, %40, %42, %44, %46, %48, %50 in 1 : vector<288x32xbf16>, vector<288x32xbf16>, vector<288x32xbf16>, vector<288x32xbf16>, vector<288x32xbf16>, vector<288x32xbf16>, vector<288x32xbf16>, vector<288x32xbf16>, vector<288x32xbf16> -> vector<288x288xbf16>
    %cst = arith.constant dense<0.000000e+00> : vector<288x32xf32>
    %52 = tpu.matmul %51, %26, %cst {dimension_numbers = #tpu.dot_dimension_numbers<[1], [0], [0], [1], [0, 0, 1, 1], [], []>} : vector<288x288xbf16>, vector<288x32xbf16>, vector<288x32xf32> -> vector<288x32xf32>
    %53 = vector.broadcast %30 : vector<1x32xf32> to vector<288x32xf32>
    %54 = arith.addf %52, %53 : vector<288x32xf32>
    %cst_26 = arith.constant 0.000000e+00 : f32
    %55 = vector.broadcast %cst_26 : f32 to vector<288x32xf32>
    %56 = arith.maximumf %54, %55 : vector<288x32xf32>
    %cst_27 = arith.constant 0.000000e+00 : f32
    %57 = vector.shape_cast %24 : vector<288x1xi1> to vector<288x1xi1>
    %58 = vector.broadcast %57 : vector<288x1xi1> to vector<288x32xi1>
    %59 = vector.broadcast %cst_27 : f32 to vector<288x32xf32>
    %60 = arith.select %58, %56, %59 : vector<288x32xi1>, vector<288x32xf32>
    %61 = arith.truncf %60 : vector<288x32xf32> to vector<288x32xbf16>
    %c26_28 = arith.constant 26 : index
    %c0_29 = arith.constant 0 : index
    %62 = vector.load %arg9[%c26_28, %c0_29] : memref<340x32xbf16, #tpu.memory_space<vmem>>, vector<288x32xbf16>
    tpu.vector_store %arg9[%c26_28, %c0_29], %61 {strides = array<i32>} : memref<340x32xbf16, #tpu.memory_space<vmem>>, vector<288x32xbf16>,
    %c7_30 = arith.constant 7 : index
    %c0_31 = arith.constant 0 : index
    %63 = vector.load %arg9[%c7_30, %c0_31] : memref<340x32xbf16, #tpu.memory_space<vmem>>, vector<288x32xbf16>
    %c8_32 = arith.constant 8 : index
    %c0_33 = arith.constant 0 : index
    %64 = vector.load %arg9[%c8_32, %c0_33] : memref<340x32xbf16, #tpu.memory_space<vmem>>, vector<288x32xbf16>
    %c9_34 = arith.constant 9 : index
    %c0_35 = arith.constant 0 : index
    %65 = vector.load %arg9[%c9_34, %c0_35] : memref<340x32xbf16, #tpu.memory_space<vmem>>, vector<288x32xbf16>
    %c25_36 = arith.constant 25 : index
    %c0_37 = arith.constant 0 : index
    %66 = vector.load %arg9[%c25_36, %c0_37] : memref<340x32xbf16, #tpu.memory_space<vmem>>, vector<288x32xbf16>
    %c26_38 = arith.constant 26 : index
    %c0_39 = arith.constant 0 : index
    %67 = vector.load %arg9[%c26_38, %c0_39] : memref<340x32xbf16, #tpu.memory_space<vmem>>, vector<288x32xbf16>
    %c27_40 = arith.constant 27 : index
    %c0_41 = arith.constant 0 : index
    %68 = vector.load %arg9[%c27_40, %c0_41] : memref<340x32xbf16, #tpu.memory_space<vmem>>, vector<288x32xbf16>
    %c43_42 = arith.constant 43 : index
    %c0_43 = arith.constant 0 : index
    %69 = vector.load %arg9[%c43_42, %c0_43] : memref<340x32xbf16, #tpu.memory_space<vmem>>, vector<288x32xbf16>
    %c44_44 = arith.constant 44 : index
    %c0_45 = arith.constant 0 : index
    %70 = vector.load %arg9[%c44_44, %c0_45] : memref<340x32xbf16, #tpu.memory_space<vmem>>, vector<288x32xbf16>
    %c45_46 = arith.constant 45 : index
    %c0_47 = arith.constant 0 : index
    %71 = vector.load %arg9[%c45_46, %c0_47] : memref<340x32xbf16, #tpu.memory_space<vmem>>, vector<288x32xbf16>
    %72 = tpu.concatenate %63, %64, %65, %66, %67, %68, %69, %70, %71 in 1 : vector<288x32xbf16>, vector<288x32xbf16>, vector<288x32xbf16>, vector<288x32xbf16>, vector<288x32xbf16>, vector<288x32xbf16>, vector<288x32xbf16>, vector<288x32xbf16>, vector<288x32xbf16> -> vector<288x288xbf16>
    %cst_48 = arith.constant dense<0.000000e+00> : vector<288x32xf32>
    %73 = tpu.matmul %72, %28, %cst_48 {dimension_numbers = #tpu.dot_dimension_numbers<[1], [0], [0], [1], [0, 0, 1, 1], [], []>} : vector<288x288xbf16>, vector<288x32xbf16>, vector<288x32xf32> -> vector<288x32xf32>
    %c26_49 = arith.constant 26 : index
    %c0_50 = arith.constant 0 : index
    %74 = vector.load %arg8[%c26_49, %c0_50] : memref<340x32xf32, #tpu.memory_space<vmem>>, vector<288x32xf32>
    %75 = arith.addf %74, %73 : vector<288x32xf32>
    %76 = vector.broadcast %32 : vector<1x32xf32> to vector<288x32xf32>
    %77 = arith.addf %75, %76 : vector<288x32xf32>
    %cst_51 = arith.constant 0.000000e+00 : f32
    %78 = vector.shape_cast %24 : vector<288x1xi1> to vector<288x1xi1>
    %79 = vector.broadcast %78 : vector<288x1xi1> to vector<288x32xi1>
    %80 = vector.broadcast %cst_51 : f32 to vector<288x32xf32>
    %81 = arith.select %79, %77, %80 : vector<288x32xi1>, vector<288x32xf32>
    %c26_52 = arith.constant 26 : index
    %c0_53 = arith.constant 0 : index
    %82 = vector.load %arg8[%c26_52, %c0_53] : memref<340x32xf32, #tpu.memory_space<vmem>>, vector<288x32xf32>
    tpu.vector_store %arg8[%c26_52, %c0_53], %81 {strides = array<i32>} : memref<340x32xf32, #tpu.memory_space<vmem>>, vector<288x32xf32>,
    %c3_i32 = arith.constant 3 : i32
    %83 = arith.cmpi eq, %arg1, %c3_i32 : i32
    %84 = arith.extui %83 : i1 to i32
    %c0_i32_54 = arith.constant 0 : i32
    %85 = arith.cmpi ne, %84, %c0_i32_54 : i32
    scf.if %85 {
      %c8_55 = arith.constant 8 : index
      %c0_56 = arith.constant 0 : index
      %86 = vector.load %arg8[%c8_55, %c0_56] : memref<340x32xf32, #tpu.memory_space<vmem>>, vector<324x32xf32>
      %87 = arith.truncf %86 : vector<324x32xf32> to vector<324x32xbf16>
      %c0_57 = arith.constant 0 : index
      %c0_58 = arith.constant 0 : index
      %c0_59 = arith.constant 0 : index
      %88 = vector.load %arg7[%c0_57, %c0_58, %c0_59] : memref<1x324x32xbf16, #tpu.memory_space<vmem>>, vector<1x324x32xbf16>
      %89 = vector.shape_cast %88 : vector<1x324x32xbf16> to vector<324x32xbf16>
      %90 = vector.shape_cast %87 : vector<324x32xbf16> to vector<1x324x32xbf16>
      tpu.vector_store %arg7[%c0_57, %c0_58, %c0_59], %90 {strides = array<i32>} : memref<1x324x32xbf16, #tpu.memory_space<vmem>>, vector<1x324x32xbf16>,
    } else {
    }
    return
  }
  func.func @transform_0(%arg0: i32, %arg1: i32) -> (i32, i32, i32) {
    %c0_i32 = arith.constant 0 : i32
    %c0_i32_0 = arith.constant 0 : i32
    %c0_i32_1 = arith.constant 0 : i32
    return %arg0, %c0_i32, %c0_i32_0 : i32, i32, i32
  }
  func.func @transform_1(%arg0: i32, %arg1: i32) -> (i32, i32, i32) {
    %c0_i32 = arith.constant 0 : i32
    %c0_i32_0 = arith.constant 0 : i32
    %c0_i32_1 = arith.constant 0 : i32
    return %arg1, %c0_i32, %c0_i32_0 : i32, i32, i32
  }
  func.func @transform_2(%arg0: i32, %arg1: i32) -> (i32, i32, i32) {
    %c0_i32 = arith.constant 0 : i32
    %c0_i32_0 = arith.constant 0 : i32
    %c0_i32_1 = arith.constant 0 : i32
    return %arg1, %c0_i32, %c0_i32_0 : i32, i32, i32
  }
  func.func @transform_3(%arg0: i32, %arg1: i32) -> (i32, i32, i32) {
    %c0_i32 = arith.constant 0 : i32
    %c0_i32_0 = arith.constant 0 : i32
    %c0_i32_1 = arith.constant 0 : i32
    return %arg1, %c0_i32, %c0_i32_0 : i32, i32, i32
  }
  func.func @transform_4(%arg0: i32, %arg1: i32) -> (i32, i32, i32) {
    %c0_i32 = arith.constant 0 : i32
    %c0_i32_0 = arith.constant 0 : i32
    %c0_i32_1 = arith.constant 0 : i32
    return %arg1, %c0_i32, %c0_i32_0 : i32, i32, i32
  }
  func.func @transform_5(%arg0: i32, %arg1: i32) -> (i32, i32, i32) {
    %c0_i32 = arith.constant 0 : i32
    %c0_i32_0 = arith.constant 0 : i32
    %c0_i32_1 = arith.constant 0 : i32
    return %arg0, %c0_i32, %c0_i32_0 : i32, i32, i32
  }
}

</mosaic_0001>

<llo_original>
// kernel: content_extractor_forward.1
$region0: #{content_extractor_forward.1}
  #allocation0 [shape = 'u32[]', space=smem, size = 0x4, offset = 0x4, fixed_abs, tag = 'smem constant byte address 0x4 - core index']
  #allocation1 [shape = 'u32[144,128]{1,0:T(1,128)}', space=vmem, size = 0x12000, scoped, tag = 'internal scratch']
  #allocation2 [shape = 'f32[340,32]{1,0:T(8,128)}', space=vmem, size = 0x2b000, scoped, tag = 'scratch operand']
  #allocation3 [shape = 'bf16[340,32]{1,0:T(8,128)(2,1)}', space=vmem, size = 0x15800, scoped, tag = 'scratch operand']
  %s0 = inlined_call_operand.vmem [shape: bf16[2,324,32], index: 0, kind: input, shape index: {}]
  %s1 = inlined_call_operand.vmem [shape: bf16[4,288,32], index: 1, kind: input, shape index: {}]
  %s2 = inlined_call_operand.vmem [shape: f32[4,1,32], index: 2, kind: input, shape index: {}]
  %s3 = inlined_call_operand.vmem [shape: bf16[4,288,32], index: 3, kind: input, shape index: {}]
  %s4 = inlined_call_operand.vmem [shape: f32[4,1,32], index: 4, kind: input, shape index: {}]
  %s5 = inlined_call_operand.vmem [shape: bf16[2,324,32], index: 5, kind: output, shape index: {}]
  %s6 = sld [smem:[#allocation0]]
  $region61: #{content_extractor_forward.1} parent=0
    _
  %s8 = ssub.s32 1, %s6
  %s9 = scalar_select 0, %s8, %s6
  loop: start=0, step=1, limit=10
  $region2: #{content_extractor_forward.1} parent=0 // loop_pre_header
    _
  $region3: #{content_extractor_forward.1} parent=0 // loop_header
    %s11 = sphi 0, %s15
    %p12 = scmp.ge.s32.totalorder %s11, 10
    %s18 = sphi 0, %s30
    %s19 = sphi 0, %s26
    %s20 = sphi 0, %s18
    %s21 = sphi 0, %s19
    %s22 = sphi 0, %s20
    %s23 = sphi 0, %s21
    %s33 = sphi 0, %s35
    %s36 = sphi 0, %s33
    %s37 = sphi 0, %s36
    %s53 = sphi 0, %s37
    %s59 = sphi 0, %s61
    %s62 = sphi 0, %s59
    %s63 = sphi 0, %s62
    %s79 = sphi 0, %s63
    %s85 = sphi 0, %s87
    %s88 = sphi 0, %s85
    %s89 = sphi 0, %s88
    %s105 = sphi 0, %s89
    %s111 = sphi 0, %s113
    %s114 = sphi 0, %s111
    %s115 = sphi 0, %s114
    %s131 = sphi 0, %s115
    %s137 = sphi 0, %s139
    %s140 = sphi 0, %s137
    %s141 = sphi 0, %s140
    %s157 = sphi 0, %s141
    %s163 = sphi 0, %s165
    %s166 = sphi 0, %s163
    %s167 = sphi 0, %s166
    %s183 = sphi 0, %s167
  $region4: #{content_extractor_forward.1} parent=0 // loop_header_branch
    %14 = sbr.rel (%p12) target = $region8
  $region5: #{content_extractor_forward.1} parent=0 // loop_body
    %s16 = ssub.s32 %s11, 1
    %s17 = ssub.s32 %s11, 2
    %s24 = sadd.s32 1, %s19
    %p25 = scmp.ge.s32.totalorder %s24, 4
    %s26 = scalar_select %p25, 0, %s24
    %s27 = sadd.s32 1, %s18
    %s28 = scalar_select %p25, %s27, %s18
    %p29 = scmp.ge.s32.totalorder %s28, 2
    %s30 = scalar_select %p29, 0, %s28
    %s31 = ssub.s32 %s18, %s30
    %p32 = scmp.eq.s32.totalorder %s31, 0
    %s34 = sadd.s32 %s33, 1
    %s35 = scalar_select %p32, %s33, %s34
    %p38 = pneg %p32
    %p39 = scmp.eq.s32.totalorder %s11, 7
    %p40 = por %p38, %p39
    %p41 = scmp.ne.s32.totalorder %s33, %s36
    %p42 = scmp.eq.s32.totalorder %s11, 0
    %p43 = por %p41, %p42
    %p44 = scmp.ne.s32.totalorder %s33, %s36
    %p45 = scmp.eq.s32.totalorder %s16, 7
    %p46 = por %p44, %p45
    %p47 = scmp.ne.s32.totalorder %s36, %s37
    %p48 = scmp.eq.s32.totalorder %s16, 0
    %p49 = por %p47, %p48
    %p50 = scmp.ne.s32.totalorder %s36, %s37
    %p51 = scmp.eq.s32.totalorder %s17, 7
    %p52 = por %p50, %p51
    %p54 = scmp.ne.s32.totalorder %s37, %s53
    %p55 = scmp.eq.s32.totalorder %s17, 0
    %p56 = por %p54, %p55
    %s57 = ssub.s32 %s19, %s26
    %p58 = scmp.eq.s32.totalorder %s57, 0
    %s60 = sadd.s32 %s59, 1
    %s61 = scalar_select %p58, %s59, %s60
    %p64 = pneg %p58
    %p65 = scmp.eq.s32.totalorder %s11, 7
    %p66 = por %p64, %p65
    %p67 = scmp.ne.s32.totalorder %s59, %s62
    %p68 = scmp.eq.s32.totalorder %s11, 0
    %p69 = por %p67, %p68
    %p70 = scmp.ne.s32.totalorder %s59, %s62
    %p71 = scmp.eq.s32.totalorder %s16, 7
    %p72 = por %p70, %p71
    %p73 = scmp.ne.s32.totalorder %s62, %s63
    %p74 = scmp.eq.s32.totalorder %s16, 0
    %p75 = por %p73, %p74
    %p76 = scmp.ne.s32.totalorder %s62, %s63
    %p77 = scmp.eq.s32.totalorder %s17, 7
    %p78 = por %p76, %p77
    %p80 = scmp.ne.s32.totalorder %s63, %s79
    %p81 = scmp.eq.s32.totalorder %s17, 0
    %p82 = por %p80, %p81
    %s83 = ssub.s32 %s19, %s26
    %p84 = scmp.eq.s32.totalorder %s83, 0
    %s86 = sadd.s32 %s85, 1
    %s87 = scalar_select %p84, %s85, %s86
    %p90 = pneg %p84
    %p91 = scmp.eq.s32.totalorder %s11, 7
    %p92 = por %p90, %p91
    %p93 = scmp.ne.s32.totalorder %s85, %s88
    %p94 = scmp.eq.s32.totalorder %s11, 0
    %p95 = por %p93, %p94
    %p96 = scmp.ne.s32.totalorder %s85, %s88
    %p97 = scmp.eq.s32.totalorder %s16, 7
    %p98 = por %p96, %p97
    %p99 = scmp.ne.s32.totalorder %s88, %s89
    %p100 = scmp.eq.s32.totalorder %s16, 0
    %p101 = por %p99, %p100
    %p102 = scmp.ne.s32.totalorder %s88, %s89
    %p103 = scmp.eq.s32.totalorder %s17, 7
    %p104 = por %p102, %p103
    %p106 = scmp.ne.s32.totalorder %s89, %s105
    %p107 = scmp.eq.s32.totalorder %s17, 0
    %p108 = por %p106, %p107
    %s109 = ssub.s32 %s19, %s26
    %p110 = scmp.eq.s32.totalorder %s109, 0
    %s112 = sadd.s32 %s111, 1
    %s113 = scalar_select %p110, %s111, %s112
    %p116 = pneg %p110
    %p117 = scmp.eq.s32.totalorder %s11, 7
    %p118 = por %p116, %p117
    %p119 = scmp.ne.s32.totalorder %s111, %s114
    %p120 = scmp.eq.s32.totalorder %s11, 0
    %p121 = por %p119, %p120
    %p122 = scmp.ne.s32.totalorder %s111, %s114
    %p123 = scmp.eq.s32.totalorder %s16, 7
    %p124 = por %p122, %p123
    %p125 = scmp.ne.s32.totalorder %s114, %s115
    %p126 = scmp.eq.s32.totalorder %s16, 0
    %p127 = por %p125, %p126
    %p128 = scmp.ne.s32.totalorder %s114, %s115
    %p129 = scmp.eq.s32.totalorder %s17, 7
    %p130 = por %p128, %p129
    %p132 = scmp.ne.s32.totalorder %s115, %s131
    %p133 = scmp.eq.s32.totalorder %s17, 0
    %p134 = por %p132, %p133
    %s135 = ssub.s32 %s19, %s26
    %p136 = scmp.eq.s32.totalorder %s135, 0
    %s138 = sadd.s32 %s137, 1
    %s139 = scalar_select %p136, %s137, %s138
    %p142 = pneg %p136
    %p143 = scmp.eq.s32.totalorder %s11, 7
    %p144 = por %p142, %p143
    %p145 = scmp.ne.s32.totalorder %s137, %s140
    %p146 = scmp.eq.s32.totalorder %s11, 0
    %p147 = por %p145, %p146
    %p148 = scmp.ne.s32.totalorder %s137, %s140
    %p149 = scmp.eq.s32.totalorder %s16, 7
    %p150 = por %p148, %p149
    %p151 = scmp.ne.s32.totalorder %s140, %s141
    %p152 = scmp.eq.s32.totalorder %s16, 0
    %p153 = por %p151, %p152
    %p154 = scmp.ne.s32.totalorder %s140, %s141
    %p155 = scmp.eq.s32.totalorder %s17, 7
    %p156 = por %p154, %p155
    %p158 = scmp.ne.s32.totalorder %s141, %s157
    %p159 = scmp.eq.s32.totalorder %s17, 0
    %p160 = por %p158, %p159
    %s161 = ssub.s32 %s18, %s30
    %p162 = scmp.eq.s32.totalorder %s161, 0
    %s164 = sadd.s32 %s163, 1
    %s165 = scalar_select %p162, %s163, %s164
    %p168 = pneg %p162
    %p169 = scmp.eq.s32.totalorder %s11, 7
    %p170 = por %p168, %p169
    %p171 = scmp.ne.s32.totalorder %s163, %s166
    %p172 = scmp.eq.s32.totalorder %s11, 0
    %p173 = por %p171, %p172
    %p174 = scmp.ne.s32.totalorder %s163, %s166
    %p175 = scmp.eq.s32.totalorder %s16, 7
    %p176 = por %p174, %p175
    %p177 = scmp.ne.s32.totalorder %s166, %s167
    %p178 = scmp.eq.s32.totalorder %s16, 0
    %p179 = por %p177, %p178
    %p180 = scmp.ne.s32.totalorder %s166, %s167
    %p181 = scmp.eq.s32.totalorder %s17, 7
    %p182 = por %p180, %p181
    %p184 = scmp.ne.s32.totalorder %s167, %s183
    %p185 = scmp.eq.s32.totalorder %s17, 0
    %p186 = por %p184, %p185
    %p187 = scmp.le.s32.totalorder 1, %s11
    %p188 = scmp.lt.s32.totalorder %s11, 9
    %p189 = pnand %p187, %p188
    %p190 = pneg %p189
    // Predicated region
    $region9: #{content_extractor_forward.1} parent=5 // pred_check
      _
    $region10: #{content_extractor_forward.1} parent=5 // pred_check_branch
      %192 = sbr.rel (%p189) target = $region12
    $region11: #{content_extractor_forward.1} parent=5 // pred_region
      %s193 = ssub.s32 %s11, 1
    $region12: #{content_extractor_forward.1} parent=5 // pred_fallthru
      _
    %p194 = scmp.lt.s32.totalorder %s11, 8
    // Predicated region
    $region13: #{content_extractor_forward.1} parent=5 // pred_check
      %p195 = pneg %p194
    $region14: #{content_extractor_forward.1} parent=5 // pred_check_branch
      %197 = sbr.rel (%p195) target = $region16
    $region15: #{content_extractor_forward.1} parent=5 // pred_region
      // Predicated region
      $region17: #{content_extractor_forward.1} parent=15 // pred_check
        %p198 = pneg %p43
      $region18: #{content_extractor_forward.1} parent=15 // pred_check_branch
        %200 = sbr.rel (%p198) target = $region20
      $region19: #{content_extractor_forward.1} parent=15 // pred_region
        %p201 = scmp.lt.s32.totalorder %s18, 1
        %s202 = scalar_select %p201, %s18, 1
        %s203 = smul.addr %s202, 41
        %s204 = smul.addr %s203, 4
        %s205 = scalar_lea.vmem %s0, %s204
      $region20: #{content_extractor_forward.1} parent=15 // pred_fallthru
        _
      // Predicated region
      $region21: #{content_extractor_forward.1} parent=15 // pred_check
        %p206 = pneg %p69
      $region22: #{content_extractor_forward.1} parent=15 // pred_check_branch
        %208 = sbr.rel (%p206) target = $region24
      $region23: #{content_extractor_forward.1} parent=15 // pred_region
        %p209 = scmp.lt.s32.totalorder %s19, 3
        %s210 = scalar_select %p209, %s19, 3
        %s211 = smul.addr %s210, 36
        %s212 = smul.addr %s211, 4
        %s213 = scalar_lea.vmem %s1, %s212
      $region24: #{content_extractor_forward.1} parent=15 // pred_fallthru
        _
      // Predicated region
      $region25: #{content_extractor_forward.1} parent=15 // pred_check
        %p214 = pneg %p95
      $region26: #{content_extractor_forward.1} parent=15 // pred_check_branch
        %216 = sbr.rel (%p214) target = $region28
      $region27: #{content_extractor_forward.1} parent=15 // pred_region
        %p217 = scmp.lt.s32.totalorder %s19, 3
        %s218 = scalar_select %p217, %s19, 3
        %s219 = scalar_lea.vmem %s2, %s218
      $region28: #{content_extractor_forward.1} parent=15 // pred_fallthru
        _
      // Predicated region
      $region29: #{content_extractor_forward.1} parent=15 // pred_check
        %p220 = pneg %p121
      $region30: #{content_extractor_forward.1} parent=15 // pred_check_branch
        %222 = sbr.rel (%p220) target = $region32
      $region31: #{content_extractor_forward.1} parent=15 // pred_region
        %p223 = scmp.lt.s32.totalorder %s19, 3
        %s224 = scalar_select %p223, %s19, 3
        %s225 = smul.addr %s224, 36
        %s226 = smul.addr %s225, 4
        %s227 = scalar_lea.vmem %s3, %s226
      $region32: #{content_extractor_forward.1} parent=15 // pred_fallthru
        _
      // Predicated region
      $region33: #{content_extractor_forward.1} parent=15 // pred_check
        %p228 = pneg %p147
      $region34: #{content_extractor_forward.1} parent=15 // pred_check_branch
        %230 = sbr.rel (%p228) target = $region36
      $region35: #{content_extractor_forward.1} parent=15 // pred_region
        %p231 = scmp.lt.s32.totalorder %s19, 3
        %s232 = scalar_select %p231, %s19, 3
        %s233 = scalar_lea.vmem %s4, %s232
      $region36: #{content_extractor_forward.1} parent=15 // pred_fallthru
        _
    $region16: #{content_extractor_forward.1} parent=5 // pred_fallthru
      _
    %p234 = scmp.le.s32.totalorder 1, %s11
    %p235 = scmp.lt.s32.totalorder %s11, 9
    %p236 = pnand %p234, %p235
    %p237 = pneg %p236
    // Predicated region
    $region37: #{content_extractor_forward.1} parent=5 // pred_check
      _
    $region38: #{content_extractor_forward.1} parent=5 // pred_check_branch
      %239 = sbr.rel (%p236) target = $region40
    $region39: #{content_extractor_forward.1} parent=5 // pred_region
      %s240 = ssub.s32 %s11, 1
      %p241 = scmp.lt.s32.totalorder %s20, 1
      %s242 = scalar_select %p241, %s20, 1
      %s243 = smul.addr %s242, 41
      %s244 = smul.addr %s243, 4
      %s245 = scalar_lea.vmem %s0, %s244
      %p246 = pneg %p49
      %p247 = pneg %p46
      %p248 = scmp.lt.s32.totalorder %s21, 3
      %s249 = scalar_select %p248, %s21, 3
      %s250 = smul.addr %s249, 36
      %s251 = smul.addr %s250, 4
      %s252 = scalar_lea.vmem %s1, %s251
      %p253 = pneg %p75
      %p254 = pneg %p72
      %p255 = scmp.lt.s32.totalorder %s21, 3
      %s256 = scalar_select %p255, %s21, 3
      %s257 = scalar_lea.vmem %s2, %s256
      %p258 = pneg %p101
      %p259 = pneg %p98
      %p260 = scmp.lt.s32.totalorder %s21, 3
      %s261 = scalar_select %p260, %s21, 3
      %s262 = smul.addr %s261, 36
      %s263 = smul.addr %s262, 4
      %s264 = scalar_lea.vmem %s3, %s263
      %p265 = pneg %p127
      %p266 = pneg %p124
      %p267 = scmp.lt.s32.totalorder %s21, 3
      %s268 = scalar_select %p267, %s21, 3
      %s269 = scalar_lea.vmem %s4, %s268
      %p270 = pneg %p153
      %p271 = pneg %p150
      %p272 = pneg %p179
      %p273 = pneg %p176
      %p274 = scmp.lt.s32.totalorder %s20, 1
      %s275 = scalar_select %p274, %s20, 1
      %s276 = smul.addr %s275, 41
      %s277 = smul.addr %s276, 4
      %s278 = scalar_lea.vmem %s5, %s277
      %p279 = scmp.lt.s32.totalorder %s20, 1
      %s280 = scalar_select %p279, %s20, 1
      %s281 = smul.addr %s280, 41
      %s282 = smul.addr %s281, 4
      %s283 = scalar_lea.vmem %s0, %s282
      %p284 = scmp.lt.s32.totalorder %s21, 3
      %s285 = scalar_select %p284, %s21, 3
      %s286 = smul.addr %s285, 36
      %s287 = smul.addr %s286, 4
      %s288 = scalar_lea.vmem %s1, %s287
      %p289 = scmp.lt.s32.totalorder %s21, 3
      %s290 = scalar_select %p289, %s21, 3
      %s291 = scalar_lea.vmem %s2, %s290
      %p292 = scmp.lt.s32.totalorder %s21, 3
      %s293 = scalar_select %p292, %s21, 3
      %s294 = smul.addr %s293, 36
      %s295 = smul.addr %s294, 4
      %s296 = scalar_lea.vmem %s3, %s295
      %p297 = scmp.lt.s32.totalorder %s21, 3
      %s298 = scalar_select %p297, %s21, 3
      %s299 = scalar_lea.vmem %s4, %s298
      %p300 = scmp.lt.s32.totalorder %s20, 1
      %s301 = scalar_select %p300, %s20, 1
      %s302 = smul.addr %s301, 41
      %s303 = smul.addr %s302, 4
      %s304 = scalar_lea.vmem %s5, %s303
      %p306 = scmp.eq.s32.totalorder %s21, 0
      // Predicated region
      $region41: #{content_extractor_forward.1} parent=39 // pred_check
        %p307 = pneg %p306
      $region42: #{content_extractor_forward.1} parent=39 // pred_check_branch
        %309 = sbr.rel (%p307) target = $region44
      $region43: #{content_extractor_forward.1} parent=39 // pred_region
        %vm310 = vcmask 257024
        %311 = vst.msk [vmem:[#allocation3 + $0x4] sm:$0xf] %vm310, 0
        %312 = vst.msk [vmem:[#allocation3 + $0x8] sm:$0xf] %vm310, 0
        %vm313 = vcmask 253952
        %314 = vst.msk [vmem:[#allocation3 + $0xc] sm:$0x1] %vm313, 0
        %vm315 = vcmask 257025
        %316 = vst.msk [vmem:[#allocation3 + $0x9c] sm:$0xe] %vm315, 0
        %317 = vst.msk [vmem:[#allocation3 + $0xa0] sm:$0xf] %vm310, 0
        %vm318 = vcmask 254976
        %319 = vst.msk [vmem:[#allocation3 + $0xa4] sm:$0x3] %vm318, 0
        %v320 = vld [vmem:[%s283] sm:$0xf]
        %v321 = vld [vmem:[%s283 + $0x4] sm:$0xf]
        %v322 = vld [vmem:[%s283 + $0x8] sm:$0xf]
        %v323 = vld [vmem:[%s283 + $0xc] sm:$0xf]
        %v324 = vld [vmem:[%s283 + $0x10] sm:$0xf]
        %v325 = vld [vmem:[%s283 + $0x14] sm:$0xf]
        %v326 = vld [vmem:[%s283 + $0x18] sm:$0xf]
        %v327 = vld [vmem:[%s283 + $0x1c] sm:$0xf]
        %v328 = vld [vmem:[%s283 + $0x20] sm:$0xf]
        %v329 = vld [vmem:[%s283 + $0x24] sm:$0xf]
        %v330 = vld [vmem:[%s283 + $0x28] sm:$0xf]
        %v331 = vld [vmem:[%s283 + $0x2c] sm:$0xf]
        %v332 = vld [vmem:[%s283 + $0x30] sm:$0xf]
        %v333 = vld [vmem:[%s283 + $0x34] sm:$0xf]
        %v334 = vld [vmem:[%s283 + $0x38] sm:$0xf]
        %v335 = vld [vmem:[%s283 + $0x3c] sm:$0xf]
        %v336 = vld [vmem:[%s283 + $0x40] sm:$0xf]
        %v337 = vld [vmem:[%s283 + $0x44] sm:$0xf]
        %v338 = vld [vmem:[%s283 + $0x48] sm:$0xf]
        %v339 = vld [vmem:[%s283 + $0x4c] sm:$0xf]
        %v340 = vld [vmem:[%s283 + $0x50] sm:$0xf]
        %v341 = vld [vmem:[%s283 + $0x54] sm:$0xf]
        %v342 = vld [vmem:[%s283 + $0x58] sm:$0xf]
        %v343 = vld [vmem:[%s283 + $0x5c] sm:$0xf]
        %v344 = vld [vmem:[%s283 + $0x60] sm:$0xf]
        %v345 = vld [vmem:[%s283 + $0x64] sm:$0xf]
        %v346 = vld [vmem:[%s283 + $0x68] sm:$0xf]
        %v347 = vld [vmem:[%s283 + $0x6c] sm:$0xf]
        %v348 = vld [vmem:[%s283 + $0x70] sm:$0xf]
        %v349 = vld [vmem:[%s283 + $0x74] sm:$0xf]
        %v350 = vld [vmem:[%s283 + $0x78] sm:$0xf]
        %v351 = vld [vmem:[%s283 + $0x7c] sm:$0xf]
        %v352 = vld [vmem:[%s283 + $0x80] sm:$0xf]
        %v353 = vld [vmem:[%s283 + $0x84] sm:$0xf]
        %v354 = vld [vmem:[%s283 + $0x88] sm:$0xf]
        %v355 = vld [vmem:[%s283 + $0x8c] sm:$0xf]
        %v356 = vld [vmem:[%s283 + $0x90] sm:$0xf]
        %v357 = vld [vmem:[%s283 + $0x94] sm:$0xf]
        %v358 = vld [vmem:[%s283 + $0x98] sm:$0xf]
        %v359 = vld [vmem:[%s283 + $0x9c] sm:$0xf]
        %v360 = vld [vmem:[%s283 + $0xa0] sm:$0x3]
        %v361 = vunpack.c.l.bf16 %v320
        %v362 = vunpack.c.l.bf16 %v321
        %v363 = vunpack.c.l.bf16 %v322
        %v364 = vunpack.c.l.bf16 %v323
        %v365 = vunpack.c.l.bf16 %v324
        %v366 = vunpack.c.l.bf16 %v325
        %v367 = vunpack.c.l.bf16 %v326
        %v368 = vunpack.c.l.bf16 %v327
        %v369 = vunpack.c.l.bf16 %v328
        %v370 = vunpack.c.l.bf16 %v329
        %v371 = vunpack.c.l.bf16 %v330
        %v372 = vunpack.c.l.bf16 %v331
        %v373 = vunpack.c.l.bf16 %v332
        %v374 = vunpack.c.l.bf16 %v333
        %v375 = vunpack.c.l.bf16 %v334
        %v376 = vunpack.c.l.bf16 %v335
        %v377 = vunpack.c.l.bf16 %v336
        %v378 = vunpack.c.l.bf16 %v337
        %v379 = vunpack.c.l.bf16 %v338
        %v380 = vunpack.c.l.bf16 %v339
        %v381 = vunpack.c.l.bf16 %v340
        %v382 = vunpack.c.l.bf16 %v341
        %v383 = vunpack.c.l.bf16 %v342
        %v384 = vunpack.c.l.bf16 %v343
        %v385 = vunpack.c.l.bf16 %v344
        %v386 = vunpack.c.l.bf16 %v345
        %v387 = vunpack.c.l.bf16 %v346
        %v388 = vunpack.c.l.bf16 %v347
        %v389 = vunpack.c.l.bf16 %v348
        %v390 = vunpack.c.l.bf16 %v349
        %v391 = vunpack.c.l.bf16 %v350
        %v392 = vunpack.c.l.bf16 %v351
        %v393 = vunpack.c.l.bf16 %v352
        %v394 = vunpack.c.l.bf16 %v353
        %v395 = vunpack.c.l.bf16 %v354
        %v396 = vunpack.c.l.bf16 %v355
        %v397 = vunpack.c.l.bf16 %v356
        %v398 = vunpack.c.l.bf16 %v357
        %v399 = vunpack.c.l.bf16 %v358
        %v400 = vunpack.c.l.bf16 %v359
        %v401 = vunpack.c.l.bf16 %v360
        %vm402 = vcmask 261120
        %403 = vst.msk [vmem:[#allocation2 + $0x8] sm:$0xff] %vm402, %v361
        %404 = vst.msk [vmem:[#allocation2 + $0x10] sm:$0xff] %vm402, %v362
        %405 = vst.msk [vmem:[#allocation2 + $0x18] sm:$0xff] %vm402, %v363
        %406 = vst.msk [vmem:[#allocation2 + $0x20] sm:$0xff] %vm402, %v364
        %407 = vst.msk [vmem:[#allocation2 + $0x28] sm:$0xff] %vm402, %v365
        %408 = vst.msk [vmem:[#allocation2 + $0x30] sm:$0xff] %vm402, %v366
        %409 = vst.msk [vmem:[#allocation2 + $0x38] sm:$0xff] %vm402, %v367
        %410 = vst.msk [vmem:[#allocation2 + $0x40] sm:$0xff] %vm402, %v368
        %411 = vst.msk [vmem:[#allocation2 + $0x48] sm:$0xff] %vm402, %v369
        %412 = vst.msk [vmem:[#allocation2 + $0x50] sm:$0xff] %vm402, %v370
        %413 = vst.msk [vmem:[#allocation2 + $0x58] sm:$0xff] %vm402, %v371
        %414 = vst.msk [vmem:[#allocation2 + $0x60] sm:$0xff] %vm402, %v372
        %415 = vst.msk [vmem:[#allocation2 + $0x68] sm:$0xff] %vm402, %v373
        %416 = vst.msk [vmem:[#allocation2 + $0x70] sm:$0xff] %vm402, %v374
        %417 = vst.msk [vmem:[#allocation2 + $0x78] sm:$0xff] %vm402, %v375
        %418 = vst.msk [vmem:[#allocation2 + $0x80] sm:$0xff] %vm402, %v376
        %419 = vst.msk [vmem:[#allocation2 + $0x88] sm:$0xff] %vm402, %v377
        %420 = vst.msk [vmem:[#allocation2 + $0x90] sm:$0xff] %vm402, %v378
        %421 = vst.msk [vmem:[#allocation2 + $0x98] sm:$0xff] %vm402, %v379
        %422 = vst.msk [vmem:[#allocation2 + $0xa0] sm:$0xff] %vm402, %v380
        %423 = vst.msk [vmem:[#allocation2 + $0xa8] sm:$0xff] %vm402, %v381
        %424 = vst.msk [vmem:[#allocation2 + $0xb0] sm:$0xff] %vm402, %v382
        %425 = vst.msk [vmem:[#allocation2 + $0xb8] sm:$0xff] %vm402, %v383
        %426 = vst.msk [vmem:[#allocation2 + $0xc0] sm:$0xff] %vm402, %v384
        %427 = vst.msk [vmem:[#allocation2 + $0xc8] sm:$0xff] %vm402, %v385
        %428 = vst.msk [vmem:[#allocation2 + $0xd0] sm:$0xff] %vm402, %v386
        %429 = vst.msk [vmem:[#allocation2 + $0xd8] sm:$0xff] %vm402, %v387
        %430 = vst.msk [vmem:[#allocation2 + $0xe0] sm:$0xff] %vm402, %v388
        %431 = vst.msk [vmem:[#allocation2 + $0xe8] sm:$0xff] %vm402, %v389
        %432 = vst.msk [vmem:[#allocation2 + $0xf0] sm:$0xff] %vm402, %v390
        %433 = vst.msk [vmem:[#allocation2 + $0xf8] sm:$0xff] %vm402, %v391
        %434 = vst.msk [vmem:[#allocation2 + $0x100] sm:$0xff] %vm402, %v392
        %435 = vst.msk [vmem:[#allocation2 + $0x108] sm:$0xff] %vm402, %v393
        %436 = vst.msk [vmem:[#allocation2 + $0x110] sm:$0xff] %vm402, %v394
        %437 = vst.msk [vmem:[#allocation2 + $0x118] sm:$0xff] %vm402, %v395
        %438 = vst.msk [vmem:[#allocation2 + $0x120] sm:$0xff] %vm402, %v396
        %439 = vst.msk [vmem:[#allocation2 + $0x128] sm:$0xff] %vm402, %v397
        %440 = vst.msk [vmem:[#allocation2 + $0x130] sm:$0xff] %vm402, %v398
        %441 = vst.msk [vmem:[#allocation2 + $0x138] sm:$0xff] %vm402, %v399
        %442 = vst.msk [vmem:[#allocation2 + $0x140] sm:$0xff] %vm402, %v400
        %443 = vst.msk [vmem:[#allocation2 + $0x148] sm:$0xf] %vm310, %v401
      $region44: #{content_extractor_forward.1} parent=39 // pred_fallthru
        _
      %v444 = vlaneseq
      %v445 = vshrl.u32 %v444, 7
      %v446 = vadd.s32 %v445, 8
      %v447 = vadd.s32 %v445, 16
      %v448 = vadd.s32 %v445, 24
      %v449 = vadd.s32 %v445, 32
      %v450 = vadd.s32 %v445, 40
      %v451 = vadd.s32 %v445, 48
      %v452 = vadd.s32 %v445, 56
      %v453 = vadd.s32 %v445, 64
      %v454 = vadd.s32 %v445, 72
      %v455 = vadd.s32 %v445, 80
      %v456 = vadd.s32 %v445, 88
      %v457 = vadd.s32 %v445, 96
      %v458 = vadd.s32 %v445, 104
      %v459 = vadd.s32 %v445, 112
      %v460 = vadd.s32 %v445, 120
      %v461 = vadd.s32 %v445, 128
      %v462 = vadd.s32 %v445, 136
      %v463 = vadd.s32 %v445, 144
      %v464 = vadd.s32 %v445, 152
      %v465 = vadd.s32 %v445, 160
      %v466 = vadd.s32 %v445, 168
      %v467 = vadd.s32 %v445, 176
      %v468 = vadd.s32 %v445, 184
      %v469 = vadd.s32 %v445, 192
      %v470 = vadd.s32 %v445, 200
      %v471 = vadd.s32 %v445, 208
      %v472 = vadd.s32 %v445, 216
      %v473 = vadd.s32 %v445, 224
      %v474 = vadd.s32 %v445, 232
      %v475 = vadd.s32 %v445, 240
      %v476 = vadd.s32 %v445, 248
      %v477 = vadd.s32 %v445, 256
      %v478 = vadd.s32 %v445, 264
      %v479 = vadd.s32 %v445, 272
      %v480 = vadd.s32 %v445, 280
      %vm481 = vcmp.lt.s32.totalorder %v445, 0
      %v482 = vsub.s32 0, %v445
      %v483 = vsel %vm481, %v482, %v445
      %v484 = vmul.u32.u64.compose %v483, 3817748708
      %v485 = vextract.low.u32 %v484
      %v486 = vextract.high.u32 %v484
      %v487 = vshrl.u32 %v486, 4
      %v488 = vmul.u32 %v487, 18
      %v489 = vsub.s32 %v483, %v488
      %v490 = vsub.s32 0, %v489
      %v491 = vsel %vm481, %v490, %v489
      %vm492 = vcmp.lt.s32.totalorder %v446, 0
      %v493 = vsub.s32 0, %v446
      %v494 = vsel %vm492, %v493, %v446
      %v495 = vmul.u32.u64.compose %v494, 3817748708
      %v496 = vextract.low.u32 %v495
      %v497 = vextract.high.u32 %v495
      %v498 = vshrl.u32 %v497, 4
      %v499 = vmul.u32 %v498, 18
      %v500 = vsub.s32 %v494, %v499
      %v501 = vsub.s32 0, %v500
      %v502 = vsel %vm492, %v501, %v500
      %vm503 = vcmp.lt.s32.totalorder %v447, 0
      %v504 = vsub.s32 0, %v447
      %v505 = vsel %vm503, %v504, %v447
      %v506 = vmul.u32.u64.compose %v505, 3817748708
      %v507 = vextract.low.u32 %v506
      %v508 = vextract.high.u32 %v506
      %v509 = vshrl.u32 %v508, 4
      %v510 = vmul.u32 %v509, 18
      %v511 = vsub.s32 %v505, %v510
      %v512 = vsub.s32 0, %v511
      %v513 = vsel %vm503, %v512, %v511
      %vm514 = vcmp.lt.s32.totalorder %v448, 0
      %v515 = vsub.s32 0, %v448
      %v516 = vsel %vm514, %v515, %v448
      %v517 = vmul.u32.u64.compose %v516, 3817748708
      %v518 = vextract.low.u32 %v517
      %v519 = vextract.high.u32 %v517
      %v520 = vshrl.u32 %v519, 4
      %v521 = vmul.u32 %v520, 18
      %v522 = vsub.s32 %v516, %v521
      %v523 = vsub.s32 0, %v522
      %v524 = vsel %vm514, %v523, %v522
      %vm525 = vcmp.lt.s32.totalorder %v449, 0
      %v526 = vsub.s32 0, %v449
      %v527 = vsel %vm525, %v526, %v449
      %v528 = vmul.u32.u64.compose %v527, 3817748708
      %v529 = vextract.low.u32 %v528
      %v530 = vextract.high.u32 %v528
      %v531 = vshrl.u32 %v530, 4
      %v532 = vmul.u32 %v531, 18
      %v533 = vsub.s32 %v527, %v532
      %v534 = vsub.s32 0, %v533
      %v535 = vsel %vm525, %v534, %v533
      %vm536 = vcmp.lt.s32.totalorder %v450, 0
      %v537 = vsub.s32 0, %v450
      %v538 = vsel %vm536, %v537, %v450
      %v539 = vmul.u32.u64.compose %v538, 3817748708
      %v540 = vextract.low.u32 %v539
      %v541 = vextract.high.u32 %v539
      %v542 = vshrl.u32 %v541, 4
      %v543 = vmul.u32 %v542, 18
      %v544 = vsub.s32 %v538, %v543
      %v545 = vsub.s32 0, %v544
      %v546 = vsel %vm536, %v545, %v544
      %vm547 = vcmp.lt.s32.totalorder %v451, 0
      %v548 = vsub.s32 0, %v451
      %v549 = vsel %vm547, %v548, %v451
      %v550 = vmul.u32.u64.compose %v549, 3817748708
      %v551 = vextract.low.u32 %v550
      %v552 = vextract.high.u32 %v550
      %v553 = vshrl.u32 %v552, 4
      %v554 = vmul.u32 %v553, 18
      %v555 = vsub.s32 %v549, %v554
      %v556 = vsub.s32 0, %v555
      %v557 = vsel %vm547, %v556, %v555
      %vm558 = vcmp.lt.s32.totalorder %v452, 0
      %v559 = vsub.s32 0, %v452
      %v560 = vsel %vm558, %v559, %v452
      %v561 = vmul.u32.u64.compose %v560, 3817748708
      %v562 = vextract.low.u32 %v561
      %v563 = vextract.high.u32 %v561
      %v564 = vshrl.u32 %v563, 4
      %v565 = vmul.u32 %v564, 18
      %v566 = vsub.s32 %v560, %v565
      %v567 = vsub.s32 0, %v566
      %v568 = vsel %vm558, %v567, %v566
      %vm569 = vcmp.lt.s32.totalorder %v453, 0
      %v570 = vsub.s32 0, %v453
      %v571 = vsel %vm569, %v570, %v453
      %v572 = vmul.u32.u64.compose %v571, 3817748708
      %v573 = vextract.low.u32 %v572
      %v574 = vextract.high.u32 %v572
      %v575 = vshrl.u32 %v574, 4
      %v576 = vmul.u32 %v575, 18
      %v577 = vsub.s32 %v571, %v576
      %v578 = vsub.s32 0, %v577
      %v579 = vsel %vm569, %v578, %v577
      %vm580 = vcmp.lt.s32.totalorder %v454, 0
      %v581 = vsub.s32 0, %v454
      %v582 = vsel %vm580, %v581, %v454
      %v583 = vmul.u32.u64.compose %v582, 3817748708
      %v584 = vextract.low.u32 %v583
      %v585 = vextract.high.u32 %v583
      %v586 = vshrl.u32 %v585, 4
      %v587 = vmul.u32 %v586, 18
      %v588 = vsub.s32 %v582, %v587
      %v589 = vsub.s32 0, %v588
      %v590 = vsel %vm580, %v589, %v588
      %vm591 = vcmp.lt.s32.totalorder %v455, 0
      %v592 = vsub.s32 0, %v455
      %v593 = vsel %vm591, %v592, %v455
      %v594 = vmul.u32.u64.compose %v593, 3817748708
      %v595 = vextract.low.u32 %v594
      %v596 = vextract.high.u32 %v594
      %v597 = vshrl.u32 %v596, 4
      %v598 = vmul.u32 %v597, 18
      %v599 = vsub.s32 %v593, %v598
      %v600 = vsub.s32 0, %v599
      %v601 = vsel %vm591, %v600, %v599
      %vm602 = vcmp.lt.s32.totalorder %v456, 0
      %v603 = vsub.s32 0, %v456
      %v604 = vsel %vm602, %v603, %v456
      %v605 = vmul.u32.u64.compose %v604, 3817748708
      %v606 = vextract.low.u32 %v605
      %v607 = vextract.high.u32 %v605
      %v608 = vshrl.u32 %v607, 4
      %v609 = vmul.u32 %v608, 18
      %v610 = vsub.s32 %v604, %v609
      %v611 = vsub.s32 0, %v610
      %v612 = vsel %vm602, %v611, %v610
      %vm613 = vcmp.lt.s32.totalorder %v457, 0
      %v614 = vsub.s32 0, %v457
      %v615 = vsel %vm613, %v614, %v457
      %v616 = vmul.u32.u64.compose %v615, 3817748708
      %v617 = vextract.low.u32 %v616
      %v618 = vextract.high.u32 %v616
      %v619 = vshrl.u32 %v618, 4
      %v620 = vmul.u32 %v619, 18
      %v621 = vsub.s32 %v615, %v620
      %v622 = vsub.s32 0, %v621
      %v623 = vsel %vm613, %v622, %v621
      %vm624 = vcmp.lt.s32.totalorder %v458, 0
      %v625 = vsub.s32 0, %v458
      %v626 = vsel %vm624, %v625, %v458
      %v627 = vmul.u32.u64.compose %v626, 3817748708
      %v628 = vextract.low.u32 %v627
      %v629 = vextract.high.u32 %v627
      %v630 = vshrl.u32 %v629, 4
      %v631 = vmul.u32 %v630, 18
      %v632 = vsub.s32 %v626, %v631
      %v633 = vsub.s32 0, %v632
      %v634 = vsel %vm624, %v633, %v632
      %vm635 = vcmp.lt.s32.totalorder %v459, 0
      %v636 = vsub.s32 0, %v459
      %v637 = vsel %vm635, %v636, %v459
      %v638 = vmul.u32.u64.compose %v637, 3817748708
      %v639 = vextract.low.u32 %v638
      %v640 = vextract.high.u32 %v638
      %v641 = vshrl.u32 %v640, 4
      %v642 = vmul.u32 %v641, 18
      %v643 = vsub.s32 %v637, %v642
      %v644 = vsub.s32 0, %v643
      %v645 = vsel %vm635, %v644, %v643
      %vm646 = vcmp.lt.s32.totalorder %v460, 0
      %v647 = vsub.s32 0, %v460
      %v648 = vsel %vm646, %v647, %v460
      %v649 = vmul.u32.u64.compose %v648, 3817748708
      %v650 = vextract.low.u32 %v649
      %v651 = vextract.high.u32 %v649
      %v652 = vshrl.u32 %v651, 4
      %v653 = vmul.u32 %v652, 18
      %v654 = vsub.s32 %v648, %v653
      %v655 = vsub.s32 0, %v654
      %v656 = vsel %vm646, %v655, %v654
      %vm657 = vcmp.lt.s32.totalorder %v461, 0
      %v658 = vsub.s32 0, %v461
      %v659 = vsel %vm657, %v658, %v461
      %v660 = vmul.u32.u64.compose %v659, 3817748708
      %v661 = vextract.low.u32 %v660
      %v662 = vextract.high.u32 %v660
      %v663 = vshrl.u32 %v662, 4
      %v664 = vmul.u32 %v663, 18
      %v665 = vsub.s32 %v659, %v664
      %v666 = vsub.s32 0, %v665
      %v667 = vsel %vm657, %v666, %v665
      %vm668 = vcmp.lt.s32.totalorder %v462, 0
      %v669 = vsub.s32 0, %v462
      %v670 = vsel %vm668, %v669, %v462
      %v671 = vmul.u32.u64.compose %v670, 3817748708
      %v672 = vextract.low.u32 %v671
      %v673 = vextract.high.u32 %v671
      %v674 = vshrl.u32 %v673, 4
      %v675 = vmul.u32 %v674, 18
      %v676 = vsub.s32 %v670, %v675
      %v677 = vsub.s32 0, %v676
      %v678 = vsel %vm668, %v677, %v676
      %vm679 = vcmp.lt.s32.totalorder %v463, 0
      %v680 = vsub.s32 0, %v463
      %v681 = vsel %vm679, %v680, %v463
      %v682 = vmul.u32.u64.compose %v681, 3817748708
      %v683 = vextract.low.u32 %v682
      %v684 = vextract.high.u32 %v682
      %v685 = vshrl.u32 %v684, 4
      %v686 = vmul.u32 %v685, 18
      %v687 = vsub.s32 %v681, %v686
      %v688 = vsub.s32 0, %v687
      %v689 = vsel %vm679, %v688, %v687
      %vm690 = vcmp.lt.s32.totalorder %v464, 0
      %v691 = vsub.s32 0, %v464
      %v692 = vsel %vm690, %v691, %v464
      %v693 = vmul.u32.u64.compose %v692, 3817748708
      %v694 = vextract.low.u32 %v693
      %v695 = vextract.high.u32 %v693
      %v696 = vshrl.u32 %v695, 4
      %v697 = vmul.u32 %v696, 18
      %v698 = vsub.s32 %v692, %v697
      %v699 = vsub.s32 0, %v698
      %v700 = vsel %vm690, %v699, %v698
      %vm701 = vcmp.lt.s32.totalorder %v465, 0
      %v702 = vsub.s32 0, %v465
      %v703 = vsel %vm701, %v702, %v465
      %v704 = vmul.u32.u64.compose %v703, 3817748708
      %v705 = vextract.low.u32 %v704
      %v706 = vextract.high.u32 %v704
      %v707 = vshrl.u32 %v706, 4
      %v708 = vmul.u32 %v707, 18
      %v709 = vsub.s32 %v703, %v708
      %v710 = vsub.s32 0, %v709
      %v711 = vsel %vm701, %v710, %v709
      %vm712 = vcmp.lt.s32.totalorder %v466, 0
      %v713 = vsub.s32 0, %v466
      %v714 = vsel %vm712, %v713, %v466
      %v715 = vmul.u32.u64.compose %v714, 3817748708
      %v716 = vextract.low.u32 %v715
      %v717 = vextract.high.u32 %v715
      %v718 = vshrl.u32 %v717, 4
      %v719 = vmul.u32 %v718, 18
      %v720 = vsub.s32 %v714, %v719
      %v721 = vsub.s32 0, %v720
      %v722 = vsel %vm712, %v721, %v720
      %vm723 = vcmp.lt.s32.totalorder %v467, 0
      %v724 = vsub.s32 0, %v467
      %v725 = vsel %vm723, %v724, %v467
      %v726 = vmul.u32.u64.compose %v725, 3817748708
      %v727 = vextract.low.u32 %v726
      %v728 = vextract.high.u32 %v726
      %v729 = vshrl.u32 %v728, 4
      %v730 = vmul.u32 %v729, 18
      %v731 = vsub.s32 %v725, %v730
      %v732 = vsub.s32 0, %v731
      %v733 = vsel %vm723, %v732, %v731
      %vm734 = vcmp.lt.s32.totalorder %v468, 0
      %v735 = vsub.s32 0, %v468
      %v736 = vsel %vm734, %v735, %v468
      %v737 = vmul.u32.u64.compose %v736, 3817748708
      %v738 = vextract.low.u32 %v737
      %v739 = vextract.high.u32 %v737
      %v740 = vshrl.u32 %v739, 4
      %v741 = vmul.u32 %v740, 18
      %v742 = vsub.s32 %v736, %v741
      %v743 = vsub.s32 0, %v742
      %v744 = vsel %vm734, %v743, %v742
      %vm745 = vcmp.lt.s32.totalorder %v469, 0
      %v746 = vsub.s32 0, %v469
      %v747 = vsel %vm745, %v746, %v469
      %v748 = vmul.u32.u64.compose %v747, 3817748708
      %v749 = vextract.low.u32 %v748
      %v750 = vextract.high.u32 %v748
      %v751 = vshrl.u32 %v750, 4
      %v752 = vmul.u32 %v751, 18
      %v753 = vsub.s32 %v747, %v752
      %v754 = vsub.s32 0, %v753
      %v755 = vsel %vm745, %v754, %v753
      %vm756 = vcmp.lt.s32.totalorder %v470, 0
      %v757 = vsub.s32 0, %v470
      %v758 = vsel %vm756, %v757, %v470
      %v759 = vmul.u32.u64.compose %v758, 3817748708
      %v760 = vextract.low.u32 %v759
      %v761 = vextract.high.u32 %v759
      %v762 = vshrl.u32 %v761, 4
      %v763 = vmul.u32 %v762, 18
      %v764 = vsub.s32 %v758, %v763
      %v765 = vsub.s32 0, %v764
      %v766 = vsel %vm756, %v765, %v764
      %vm767 = vcmp.lt.s32.totalorder %v471, 0
      %v768 = vsub.s32 0, %v471
      %v769 = vsel %vm767, %v768, %v471
      %v770 = vmul.u32.u64.compose %v769, 3817748708
      %v771 = vextract.low.u32 %v770
      %v772 = vextract.high.u32 %v770
      %v773 = vshrl.u32 %v772, 4
      %v774 = vmul.u32 %v773, 18
      %v775 = vsub.s32 %v769, %v774
      %v776 = vsub.s32 0, %v775
      %v777 = vsel %vm767, %v776, %v775
      %vm778 = vcmp.lt.s32.totalorder %v472, 0
      %v779 = vsub.s32 0, %v472
      %v780 = vsel %vm778, %v779, %v472
      %v781 = vmul.u32.u64.compose %v780, 3817748708
      %v782 = vextract.low.u32 %v781
      %v783 = vextract.high.u32 %v781
      %v784 = vshrl.u32 %v783, 4
      %v785 = vmul.u32 %v784, 18
      %v786 = vsub.s32 %v780, %v785
      %v787 = vsub.s32 0, %v786
      %v788 = vsel %vm778, %v787, %v786
      %vm789 = vcmp.lt.s32.totalorder %v473, 0
      %v790 = vsub.s32 0, %v473
      %v791 = vsel %vm789, %v790, %v473
      %v792 = vmul.u32.u64.compose %v791, 3817748708
      %v793 = vextract.low.u32 %v792
      %v794 = vextract.high.u32 %v792
      %v795 = vshrl.u32 %v794, 4
      %v796 = vmul.u32 %v795, 18
      %v797 = vsub.s32 %v791, %v796
      %v798 = vsub.s32 0, %v797
      %v799 = vsel %vm789, %v798, %v797
      %vm800 = vcmp.lt.s32.totalorder %v474, 0
      %v801 = vsub.s32 0, %v474
      %v802 = vsel %vm800, %v801, %v474
      %v803 = vmul.u32.u64.compose %v802, 3817748708
      %v804 = vextract.low.u32 %v803
      %v805 = vextract.high.u32 %v803
      %v806 = vshrl.u32 %v805, 4
      %v807 = vmul.u32 %v806, 18
      %v808 = vsub.s32 %v802, %v807
      %v809 = vsub.s32 0, %v808
      %v810 = vsel %vm800, %v809, %v808
      %vm811 = vcmp.lt.s32.totalorder %v475, 0
      %v812 = vsub.s32 0, %v475
      %v813 = vsel %vm811, %v812, %v475
      %v814 = vmul.u32.u64.compose %v813, 3817748708
      %v815 = vextract.low.u32 %v814
      %v816 = vextract.high.u32 %v814
      %v817 = vshrl.u32 %v816, 4
      %v818 = vmul.u32 %v817, 18
      %v819 = vsub.s32 %v813, %v818
      %v820 = vsub.s32 0, %v819
      %v821 = vsel %vm811, %v820, %v819
      %vm822 = vcmp.lt.s32.totalorder %v476, 0
      %v823 = vsub.s32 0, %v476
      %v824 = vsel %vm822, %v823, %v476
      %v825 = vmul.u32.u64.compose %v824, 3817748708
      %v826 = vextract.low.u32 %v825
      %v827 = vextract.high.u32 %v825
      %v828 = vshrl.u32 %v827, 4
      %v829 = vmul.u32 %v828, 18
      %v830 = vsub.s32 %v824, %v829
      %v831 = vsub.s32 0, %v830
      %v832 = vsel %vm822, %v831, %v830
      %vm833 = vcmp.lt.s32.totalorder %v477, 0
      %v834 = vsub.s32 0, %v477
      %v835 = vsel %vm833, %v834, %v477
      %v836 = vmul.u32.u64.compose %v835, 3817748708
      %v837 = vextract.low.u32 %v836
      %v838 = vextract.high.u32 %v836
      %v839 = vshrl.u32 %v838, 4
      %v840 = vmul.u32 %v839, 18
      %v841 = vsub.s32 %v835, %v840
      %v842 = vsub.s32 0, %v841
      %v843 = vsel %vm833, %v842, %v841
      %vm844 = vcmp.lt.s32.totalorder %v478, 0
      %v845 = vsub.s32 0, %v478
      %v846 = vsel %vm844, %v845, %v478
      %v847 = vmul.u32.u64.compose %v846, 3817748708
      %v848 = vextract.low.u32 %v847
      %v849 = vextract.high.u32 %v847
      %v850 = vshrl.u32 %v849, 4
      %v851 = vmul.u32 %v850, 18
      %v852 = vsub.s32 %v846, %v851
      %v853 = vsub.s32 0, %v852
      %v854 = vsel %vm844, %v853, %v852
      %vm855 = vcmp.lt.s32.totalorder %v479, 0
      %v856 = vsub.s32 0, %v479
      %v857 = vsel %vm855, %v856, %v479
      %v858 = vmul.u32.u64.compose %v857, 3817748708
      %v859 = vextract.low.u32 %v858
      %v860 = vextract.high.u32 %v858
      %v861 = vshrl.u32 %v860, 4
      %v862 = vmul.u32 %v861, 18
      %v863 = vsub.s32 %v857, %v862
      %v864 = vsub.s32 0, %v863
      %v865 = vsel %vm855, %v864, %v863
      %vm866 = vcmp.lt.s32.totalorder %v480, 0
      %v867 = vsub.s32 0, %v480
      %v868 = vsel %vm866, %v867, %v480
      %v869 = vmul.u32.u64.compose %v868, 3817748708
      %v870 = vextract.low.u32 %v869
      %v871 = vextract.high.u32 %v869
      %v872 = vshrl.u32 %v871, 4
      %v873 = vmul.u32 %v872, 18
      %v874 = vsub.s32 %v868, %v873
      %v875 = vsub.s32 0, %v874
      %v876 = vsel %vm866, %v875, %v874
      %vm877 = vcmp.ne.s32.totalorder %v491, 0
      %vm878 = vcmp.ne.s32.totalorder %v502, 0
      %vm879 = vcmp.ne.s32.totalorder %v513, 0
      %vm880 = vcmp.ne.s32.totalorder %v524, 0
      %vm881 = vcmp.ne.s32.totalorder %v535, 0
      %vm882 = vcmp.ne.s32.totalorder %v546, 0
      %vm883 = vcmp.ne.s32.totalorder %v557, 0
      %vm884 = vcmp.ne.s32.totalorder %v568, 0
      %vm885 = vcmp.ne.s32.totalorder %v579, 0
      %vm886 = vcmp.ne.s32.totalorder %v590, 0
      %vm887 = vcmp.ne.s32.totalorder %v601, 0
      %vm888 = vcmp.ne.s32.totalorder %v612, 0
      %vm889 = vcmp.ne.s32.totalorder %v623, 0
      %vm890 = vcmp.ne.s32.totalorder %v634, 0
      %vm891 = vcmp.ne.s32.totalorder %v645, 0
      %vm892 = vcmp.ne.s32.totalorder %v656, 0
      %vm893 = vcmp.ne.s32.totalorder %v667, 0
      %vm894 = vcmp.ne.s32.totalorder %v678, 0
      %vm895 = vcmp.ne.s32.totalorder %v689, 0
      %vm896 = vcmp.ne.s32.totalorder %v700, 0
      %vm897 = vcmp.ne.s32.totalorder %v711, 0
      %vm898 = vcmp.ne.s32.totalorder %v722, 0
      %vm899 = vcmp.ne.s32.totalorder %v733, 0
      %vm900 = vcmp.ne.s32.totalorder %v744, 0
      %vm901 = vcmp.ne.s32.totalorder %v755, 0
      %vm902 = vcmp.ne.s32.totalorder %v766, 0
      %vm903 = vcmp.ne.s32.totalorder %v777, 0
      %vm904 = vcmp.ne.s32.totalorder %v788, 0
      %vm905 = vcmp.ne.s32.totalorder %v799, 0
      %vm906 = vcmp.ne.s32.totalorder %v810, 0
      %vm907 = vcmp.ne.s32.totalorder %v821, 0
      %vm908 = vcmp.ne.s32.totalorder %v832, 0
      %vm909 = vcmp.ne.s32.totalorder %v843, 0
      %vm910 = vcmp.ne.s32.totalorder %v854, 0
      %vm911 = vcmp.ne.s32.totalorder %v865, 0
      %vm912 = vcmp.ne.s32.totalorder %v876, 0
      %vm913 = vcmp.lt.s32.totalorder %v491, 0
      %vm914 = vcmp.lt.s32.totalorder %v502, 0
      %vm915 = vcmp.lt.s32.totalorder %v513, 0
      %vm916 = vcmp.lt.s32.totalorder %v524, 0
      %vm917 = vcmp.lt.s32.totalorder %v535, 0
      %vm918 = vcmp.lt.s32.totalorder %v546, 0
      %vm919 = vcmp.lt.s32.totalorder %v557, 0
      %vm920 = vcmp.lt.s32.totalorder %v568, 0
      %vm921 = vcmp.lt.s32.totalorder %v579, 0
      %vm922 = vcmp.lt.s32.totalorder %v590, 0
      %vm923 = vcmp.lt.s32.totalorder %v601, 0
      %vm924 = vcmp.lt.s32.totalorder %v612, 0
      %vm925 = vcmp.lt.s32.totalorder %v623, 0
      %vm926 = vcmp.lt.s32.totalorder %v634, 0
      %vm927 = vcmp.lt.s32.totalorder %v645, 0
      %vm928 = vcmp.lt.s32.totalorder %v656, 0
      %vm929 = vcmp.lt.s32.totalorder %v667, 0
      %vm930 = vcmp.lt.s32.totalorder %v678, 0
      %vm931 = vcmp.lt.s32.totalorder %v689, 0
      %vm932 = vcmp.lt.s32.totalorder %v700, 0
      %vm933 = vcmp.lt.s32.totalorder %v711, 0
      %vm934 = vcmp.lt.s32.totalorder %v722, 0
      %vm935 = vcmp.lt.s32.totalorder %v733, 0
      %vm936 = vcmp.lt.s32.totalorder %v744, 0
      %vm937 = vcmp.lt.s32.totalorder %v755, 0
      %vm938 = vcmp.lt.s32.totalorder %v766, 0
      %vm939 = vcmp.lt.s32.totalorder %v777, 0
      %vm940 = vcmp.lt.s32.totalorder %v788, 0
      %vm941 = vcmp.lt.s32.totalorder %v799, 0
      %vm942 = vcmp.lt.s32.totalorder %v810, 0
      %vm943 = vcmp.lt.s32.totalorder %v821, 0
      %vm944 = vcmp.lt.s32.totalorder %v832, 0
      %vm945 = vcmp.lt.s32.totalorder %v843, 0
      %vm946 = vcmp.lt.s32.totalorder %v854, 0
      %vm947 = vcmp.lt.s32.totalorder %v865, 0
      %vm948 = vcmp.lt.s32.totalorder %v876, 0
      %vm949 = vmand %vm913, %vm877
      %vm950 = vmand %vm914, %vm878
      %vm951 = vmand %vm915, %vm879
      %vm952 = vmand %vm916, %vm880
      %vm953 = vmand %vm917, %vm881
      %vm954 = vmand %vm918, %vm882
      %vm955 = vmand %vm919, %vm883
      %vm956 = vmand %vm920, %vm884
      %vm957 = vmand %vm921, %vm885
      %vm958 = vmand %vm922, %vm886
      %vm959 = vmand %vm923, %vm887
      %vm960 = vmand %vm924, %vm888
      %vm961 = vmand %vm925, %vm889
      %vm962 = vmand %vm926, %vm890
      %vm963 = vmand %vm927, %vm891
      %vm964 = vmand %vm928, %vm892
      %vm965 = vmand %vm929, %vm893
      %vm966 = vmand %vm930, %vm894
      %vm967 = vmand %vm931, %vm895
      %vm968 = vmand %vm932, %vm896
      %vm969 = vmand %vm933, %vm897
      %vm970 = vmand %vm934, %vm898
      %vm971 = vmand %vm935, %vm899
      %vm972 = vmand %vm936, %vm900
      %vm973 = vmand %vm937, %vm901
      %vm974 = vmand %vm938, %vm902
      %vm975 = vmand %vm939, %vm903
      %vm976 = vmand %vm940, %vm904
      %vm977 = vmand %vm941, %vm905
      %vm978 = vmand %vm942, %vm906
      %vm979 = vmand %vm943, %vm907
      %vm980 = vmand %vm944, %vm908
      %vm981 = vmand %vm945, %vm909
      %vm982 = vmand %vm946, %vm910
      %vm983 = vmand %vm947, %vm911
      %vm984 = vmand %vm948, %vm912
      %v985 = vadd.s32 %v491, 18
      %v986 = vadd.s32 %v502, 18
      %v987 = vadd.s32 %v513, 18
      %v988 = vadd.s32 %v524, 18
      %v989 = vadd.s32 %v535, 18
      %v990 = vadd.s32 %v546, 18
      %v991 = vadd.s32 %v557, 18
      %v992 = vadd.s32 %v568, 18
      %v993 = vadd.s32 %v579, 18
      %v994 = vadd.s32 %v590, 18
      %v995 = vadd.s32 %v601, 18
      %v996 = vadd.s32 %v612, 18
      %v997 = vadd.s32 %v623, 18
      %v998 = vadd.s32 %v634, 18
      %v999 = vadd.s32 %v645, 18
      %v1000 = vadd.s32 %v656, 18
      %v1001 = vadd.s32 %v667, 18
      %v1002 = vadd.s32 %v678, 18
      %v1003 = vadd.s32 %v689, 18
      %v1004 = vadd.s32 %v700, 18
      %v1005 = vadd.s32 %v711, 18
      %v1006 = vadd.s32 %v722, 18
      %v1007 = vadd.s32 %v733, 18
      %v1008 = vadd.s32 %v744, 18
      %v1009 = vadd.s32 %v755, 18
      %v1010 = vadd.s32 %v766, 18
      %v1011 = vadd.s32 %v777, 18
      %v1012 = vadd.s32 %v788, 18
      %v1013 = vadd.s32 %v799, 18
      %v1014 = vadd.s32 %v810, 18
      %v1015 = vadd.s32 %v821, 18
      %v1016 = vadd.s32 %v832, 18
      %v1017 = vadd.s32 %v843, 18
      %v1018 = vadd.s32 %v854, 18
      %v1019 = vadd.s32 %v865, 18
      %v1020 = vadd.s32 %v876, 18
      %v1021 = vsel %vm949, %v985, %v491
      %v1022 = vsel %vm950, %v986, %v502
      %v1023 = vsel %vm951, %v987, %v513
      %v1024 = vsel %vm952, %v988, %v524
      %v1025 = vsel %vm953, %v989, %v535
      %v1026 = vsel %vm954, %v990, %v546
      %v1027 = vsel %vm955, %v991, %v557
      %v1028 = vsel %vm956, %v992, %v568
      %v1029 = vsel %vm957, %v993, %v579
      %v1030 = vsel %vm958, %v994, %v590
      %v1031 = vsel %vm959, %v995, %v601
      %v1032 = vsel %vm960, %v996, %v612
      %v1033 = vsel %vm961, %v997, %v623
      %v1034 = vsel %vm962, %v998, %v634
      %v1035 = vsel %vm963, %v999, %v645
      %v1036 = vsel %vm964, %v1000, %v656
      %v1037 = vsel %vm965, %v1001, %v667
      %v1038 = vsel %vm966, %v1002, %v678
      %v1039 = vsel %vm967, %v1003, %v689
      %v1040 = vsel %vm968, %v1004, %v700
      %v1041 = vsel %vm969, %v1005, %v711
      %v1042 = vsel %vm970, %v1006, %v722
      %v1043 = vsel %vm971, %v1007, %v733
      %v1044 = vsel %vm972, %v1008, %v744
      %v1045 = vsel %vm973, %v1009, %v755
      %v1046 = vsel %vm974, %v1010, %v766
      %v1047 = vsel %vm975, %v1011, %v777
      %v1048 = vsel %vm976, %v1012, %v788
      %v1049 = vsel %vm977, %v1013, %v799
      %v1050 = vsel %vm978, %v1014, %v810
      %v1051 = vsel %vm979, %v1015, %v821
      %v1052 = vsel %vm980, %v1016, %v832
      %v1053 = vsel %vm981, %v1017, %v843
      %v1054 = vsel %vm982, %v1018, %v854
      %v1055 = vsel %vm983, %v1019, %v865
      %v1056 = vsel %vm984, %v1020, %v876
      %vm1057 = vcmp.ne.s32.totalorder %v1021, 0
      %vm1058 = vcmp.ne.s32.totalorder %v1022, 0
      %vm1059 = vcmp.ne.s32.totalorder %v1023, 0
      %vm1060 = vcmp.ne.s32.totalorder %v1024, 0
      %vm1061 = vcmp.ne.s32.totalorder %v1025, 0
      %vm1062 = vcmp.ne.s32.totalorder %v1026, 0
      %vm1063 = vcmp.ne.s32.totalorder %v1027, 0
      %vm1064 = vcmp.ne.s32.totalorder %v1028, 0
      %vm1065 = vcmp.ne.s32.totalorder %v1029, 0
      %vm1066 = vcmp.ne.s32.totalorder %v1030, 0
      %vm1067 = vcmp.ne.s32.totalorder %v1031, 0
      %vm1068 = vcmp.ne.s32.totalorder %v1032, 0
      %vm1069 = vcmp.ne.s32.totalorder %v1033, 0
      %vm1070 = vcmp.ne.s32.totalorder %v1034, 0
      %vm1071 = vcmp.ne.s32.totalorder %v1035, 0
      %vm1072 = vcmp.ne.s32.totalorder %v1036, 0
      %vm1073 = vcmp.ne.s32.totalorder %v1037, 0
      %vm1074 = vcmp.ne.s32.totalorder %v1038, 0
      %vm1075 = vcmp.ne.s32.totalorder %v1039, 0
      %vm1076 = vcmp.ne.s32.totalorder %v1040, 0
      %vm1077 = vcmp.ne.s32.totalorder %v1041, 0
      %vm1078 = vcmp.ne.s32.totalorder %v1042, 0
      %vm1079 = vcmp.ne.s32.totalorder %v1043, 0
      %vm1080 = vcmp.ne.s32.totalorder %v1044, 0
      %vm1081 = vcmp.ne.s32.totalorder %v1045, 0
      %vm1082 = vcmp.ne.s32.totalorder %v1046, 0
      %vm1083 = vcmp.ne.s32.totalorder %v1047, 0
      %vm1084 = vcmp.ne.s32.totalorder %v1048, 0
      %vm1085 = vcmp.ne.s32.totalorder %v1049, 0
      %vm1086 = vcmp.ne.s32.totalorder %v1050, 0
      %vm1087 = vcmp.ne.s32.totalorder %v1051, 0
      %vm1088 = vcmp.ne.s32.totalorder %v1052, 0
      %vm1089 = vcmp.ne.s32.totalorder %v1053, 0
      %vm1090 = vcmp.ne.s32.totalorder %v1054, 0
      %vm1091 = vcmp.ne.s32.totalorder %v1055, 0
      %vm1092 = vcmp.ne.s32.totalorder %v1056, 0
      %vm1093 = vcmp.ne.s32.totalorder %v1021, 17
      %vm1094 = vcmp.ne.s32.totalorder %v1022, 17
      %vm1095 = vcmp.ne.s32.totalorder %v1023, 17
      %vm1096 = vcmp.ne.s32.totalorder %v1024, 17
      %vm1097 = vcmp.ne.s32.totalorder %v1025, 17
      %vm1098 = vcmp.ne.s32.totalorder %v1026, 17
      %vm1099 = vcmp.ne.s32.totalorder %v1027, 17
      %vm1100 = vcmp.ne.s32.totalorder %v1028, 17
      %vm1101 = vcmp.ne.s32.totalorder %v1029, 17
      %vm1102 = vcmp.ne.s32.totalorder %v1030, 17
      %vm1103 = vcmp.ne.s32.totalorder %v1031, 17
      %vm1104 = vcmp.ne.s32.totalorder %v1032, 17
      %vm1105 = vcmp.ne.s32.totalorder %v1033, 17
      %vm1106 = vcmp.ne.s32.totalorder %v1034, 17
      %vm1107 = vcmp.ne.s32.totalorder %v1035, 17
      %vm1108 = vcmp.ne.s32.totalorder %v1036, 17
      %vm1109 = vcmp.ne.s32.totalorder %v1037, 17
      %vm1110 = vcmp.ne.s32.totalorder %v1038, 17
      %vm1111 = vcmp.ne.s32.totalorder %v1039, 17
      %vm1112 = vcmp.ne.s32.totalorder %v1040, 17
      %vm1113 = vcmp.ne.s32.totalorder %v1041, 17
      %vm1114 = vcmp.ne.s32.totalorder %v1042, 17
      %vm1115 = vcmp.ne.s32.totalorder %v1043, 17
      %vm1116 = vcmp.ne.s32.totalorder %v1044, 17
      %vm1117 = vcmp.ne.s32.totalorder %v1045, 17
      %vm1118 = vcmp.ne.s32.totalorder %v1046, 17
      %vm1119 = vcmp.ne.s32.totalorder %v1047, 17
      %vm1120 = vcmp.ne.s32.totalorder %v1048, 17
      %vm1121 = vcmp.ne.s32.totalorder %v1049, 17
      %vm1122 = vcmp.ne.s32.totalorder %v1050, 17
      %vm1123 = vcmp.ne.s32.totalorder %v1051, 17
      %vm1124 = vcmp.ne.s32.totalorder %v1052, 17
      %vm1125 = vcmp.ne.s32.totalorder %v1053, 17
      %vm1126 = vcmp.ne.s32.totalorder %v1054, 17
      %vm1127 = vcmp.ne.s32.totalorder %v1055, 17
      %vm1128 = vcmp.ne.s32.totalorder %v1056, 17
      %vm1129 = vmand %vm1057, %vm1093
      %vm1130 = vmand %vm1058, %vm1094
      %vm1131 = vmand %vm1059, %vm1095
      %vm1132 = vmand %vm1060, %vm1096
      %vm1133 = vmand %vm1061, %vm1097
      %vm1134 = vmand %vm1062, %vm1098
      %vm1135 = vmand %vm1063, %vm1099
      %vm1136 = vmand %vm1064, %vm1100
      %vm1137 = vmand %vm1065, %vm1101
      %vm1138 = vmand %vm1066, %vm1102
      %vm1139 = vmand %vm1067, %vm1103
      %vm1140 = vmand %vm1068, %vm1104
      %vm1141 = vmand %vm1069, %vm1105
      %vm1142 = vmand %vm1070, %vm1106
      %vm1143 = vmand %vm1071, %vm1107
      %vm1144 = vmand %vm1072, %vm1108
      %vm1145 = vmand %vm1073, %vm1109
      %vm1146 = vmand %vm1074, %vm1110
      %vm1147 = vmand %vm1075, %vm1111
      %vm1148 = vmand %vm1076, %vm1112
      %vm1149 = vmand %vm1077, %vm1113
      %vm1150 = vmand %vm1078, %vm1114
      %vm1151 = vmand %vm1079, %vm1115
      %vm1152 = vmand %vm1080, %vm1116
      %vm1153 = vmand %vm1081, %vm1117
      %vm1154 = vmand %vm1082, %vm1118
      %vm1155 = vmand %vm1083, %vm1119
      %vm1156 = vmand %vm1084, %vm1120
      %vm1157 = vmand %vm1085, %vm1121
      %vm1158 = vmand %vm1086, %vm1122
      %vm1159 = vmand %vm1087, %vm1123
      %vm1160 = vmand %vm1088, %vm1124
      %vm1161 = vmand %vm1089, %vm1125
      %vm1162 = vmand %vm1090, %vm1126
      %vm1163 = vmand %vm1091, %vm1127
      %vm1164 = vmand %vm1092, %vm1128
      %v1165 = vld [vmem:[%s288] sm:$0xf]
      %v1166 = vld [vmem:[%s288 + $0x4] sm:$0xf]
      %v1167 = vld [vmem:[%s288 + $0x8] sm:$0xf]
      %v1168 = vld [vmem:[%s288 + $0xc] sm:$0xf]
      %v1169 = vld [vmem:[%s288 + $0x10] sm:$0xf]
      %v1170 = vld [vmem:[%s288 + $0x14] sm:$0xf]
      %v1171 = vld [vmem:[%s288 + $0x18] sm:$0xf]
      %v1172 = vld [vmem:[%s288 + $0x1c] sm:$0xf]
      %v1173 = vld [vmem:[%s288 + $0x20] sm:$0xf]
      %v1174 = vld [vmem:[%s288 + $0x24] sm:$0xf]
      %v1175 = vld [vmem:[%s288 + $0x28] sm:$0xf]
      %v1176 = vld [vmem:[%s288 + $0x2c] sm:$0xf]
      %v1177 = vld [vmem:[%s288 + $0x30] sm:$0xf]
      %v1178 = vld [vmem:[%s288 + $0x34] sm:$0xf]
      %v1179 = vld [vmem:[%s288 + $0x38] sm:$0xf]
      %v1180 = vld [vmem:[%s288 + $0x3c] sm:$0xf]
      %v1181 = vld [vmem:[%s288 + $0x40] sm:$0xf]
      %v1182 = vld [vmem:[%s288 + $0x44] sm:$0xf]
      %v1183 = vld [vmem:[%s288 + $0x48] sm:$0xf]
      %v1184 = vld [vmem:[%s288 + $0x4c] sm:$0xf]
      %v1185 = vld [vmem:[%s288 + $0x50] sm:$0xf]
      %v1186 = vld [vmem:[%s288 + $0x54] sm:$0xf]
      %v1187 = vld [vmem:[%s288 + $0x58] sm:$0xf]
      %v1188 = vld [vmem:[%s288 + $0x5c] sm:$0xf]
      %v1189 = vld [vmem:[%s288 + $0x60] sm:$0xf]
      %v1190 = vld [vmem:[%s288 + $0x64] sm:$0xf]
      %v1191 = vld [vmem:[%s288 + $0x68] sm:$0xf]
      %v1192 = vld [vmem:[%s288 + $0x6c] sm:$0xf]
      %v1193 = vld [vmem:[%s288 + $0x70] sm:$0xf]
      %v1194 = vld [vmem:[%s288 + $0x74] sm:$0xf]
      %v1195 = vld [vmem:[%s288 + $0x78] sm:$0xf]
      %v1196 = vld [vmem:[%s288 + $0x7c] sm:$0xf]
      %v1197 = vld [vmem:[%s288 + $0x80] sm:$0xf]
      %v1198 = vld [vmem:[%s288 + $0x84] sm:$0xf]
      %v1199 = vld [vmem:[%s288 + $0x88] sm:$0xf]
      %v1200 = vld [vmem:[%s288 + $0x8c] sm:$0xf]
      %v1201 = vld [vmem:[%s296] sm:$0xf]
      %v1202 = vld [vmem:[%s296 + $0x4] sm:$0xf]
      %v1203 = vld [vmem:[%s296 + $0x8] sm:$0xf]
      %v1204 = vld [vmem:[%s296 + $0xc] sm:$0xf]
      %v1205 = vld [vmem:[%s296 + $0x10] sm:$0xf]
      %v1206 = vld [vmem:[%s296 + $0x14] sm:$0xf]
      %v1207 = vld [vmem:[%s296 + $0x18] sm:$0xf]
      %v1208 = vld [vmem:[%s296 + $0x1c] sm:$0xf]
      %v1209 = vld [vmem:[%s296 + $0x20] sm:$0xf]
      %v1210 = vld [vmem:[%s296 + $0x24] sm:$0xf]
      %v1211 = vld [vmem:[%s296 + $0x28] sm:$0xf]
      %v1212 = vld [vmem:[%s296 + $0x2c] sm:$0xf]
      %v1213 = vld [vmem:[%s296 + $0x30] sm:$0xf]
      %v1214 = vld [vmem:[%s296 + $0x34] sm:$0xf]
      %v1215 = vld [vmem:[%s296 + $0x38] sm:$0xf]
      %v1216 = vld [vmem:[%s296 + $0x3c] sm:$0xf]
      %v1217 = vld [vmem:[%s296 + $0x40] sm:$0xf]
      %v1218 = vld [vmem:[%s296 + $0x44] sm:$0xf]
      %v1219 = vld [vmem:[%s296 + $0x48] sm:$0xf]
      %v1220 = vld [vmem:[%s296 + $0x4c] sm:$0xf]
      %v1221 = vld [vmem:[%s296 + $0x50] sm:$0xf]
      %v1222 = vld [vmem:[%s296 + $0x54] sm:$0xf]
      %v1223 = vld [vmem:[%s296 + $0x58] sm:$0xf]
      %v1224 = vld [vmem:[%s296 + $0x5c] sm:$0xf]
      %v1225 = vld [vmem:[%s296 + $0x60] sm:$0xf]
      %v1226 = vld [vmem:[%s296 + $0x64] sm:$0xf]
      %v1227 = vld [vmem:[%s296 + $0x68] sm:$0xf]
      %v1228 = vld [vmem:[%s296 + $0x6c] sm:$0xf]
      %v1229 = vld [vmem:[%s296 + $0x70] sm:$0xf]
      %v1230 = vld [vmem:[%s296 + $0x74] sm:$0xf]
      %v1231 = vld [vmem:[%s296 + $0x78] sm:$0xf]
      %v1232 = vld [vmem:[%s296 + $0x7c] sm:$0xf]
      %v1233 = vld [vmem:[%s296 + $0x80] sm:$0xf]
      %v1234 = vld [vmem:[%s296 + $0x84] sm:$0xf]
      %v1235 = vld [vmem:[%s296 + $0x88] sm:$0xf]
      %v1236 = vld [vmem:[%s296 + $0x8c] sm:$0xf]
      %v1237 = vld [vmem:[%s291] sm:$0x1]
      %v1238 = vld [vmem:[%s299] sm:$0x1]
      %v1239 = vld [vmem:[#allocation2 + $0x7] sm:$0xff]
      %v1240 = vld [vmem:[#allocation2 + $0xf] sm:$0xff]
      %v1241 = vld [vmem:[#allocation2 + $0x17] sm:$0xff]
      %v1242 = vld [vmem:[#allocation2 + $0x1f] sm:$0xff]
      %v1243 = vld [vmem:[#allocation2 + $0x27] sm:$0xff]
      %v1244 = vld [vmem:[#allocation2 + $0x2f] sm:$0xff]
      %v1245 = vld [vmem:[#allocation2 + $0x37] sm:$0xff]
      %v1246 = vld [vmem:[#allocation2 + $0x3f] sm:$0xff]
      %v1247 = vld [vmem:[#allocation2 + $0x47] sm:$0xff]
      %v1248 = vld [vmem:[#allocation2 + $0x4f] sm:$0xff]
      %v1249 = vld [vmem:[#allocation2 + $0x57] sm:$0xff]
      %v1250 = vld [vmem:[#allocation2 + $0x5f] sm:$0xff]
      %v1251 = vld [vmem:[#allocation2 + $0x67] sm:$0xff]
      %v1252 = vld [vmem:[#allocation2 + $0x6f] sm:$0xff]
      %v1253 = vld [vmem:[#allocation2 + $0x77] sm:$0xff]
      %v1254 = vld [vmem:[#allocation2 + $0x7f] sm:$0xff]
      %v1255 = vld [vmem:[#allocation2 + $0x87] sm:$0xff]
      %v1256 = vld [vmem:[#allocation2 + $0x8f] sm:$0xff]
      %v1257 = vld [vmem:[#allocation2 + $0x97] sm:$0xff]
      %v1258 = vld [vmem:[#allocation2 + $0x9f] sm:$0xff]
      %v1259 = vld [vmem:[#allocation2 + $0xa7] sm:$0xff]
      %v1260 = vld [vmem:[#allocation2 + $0xaf] sm:$0xff]
      %v1261 = vld [vmem:[#allocation2 + $0xb7] sm:$0xff]
      %v1262 = vld [vmem:[#allocation2 + $0xbf] sm:$0xff]
      %v1263 = vld [vmem:[#allocation2 + $0xc7] sm:$0xff]
      %v1264 = vld [vmem:[#allocation2 + $0xcf] sm:$0xff]
      %v1265 = vld [vmem:[#allocation2 + $0xd7] sm:$0xff]
      %v1266 = vld [vmem:[#allocation2 + $0xdf] sm:$0xff]
      %v1267 = vld [vmem:[#allocation2 + $0xe7] sm:$0xff]
      %v1268 = vld [vmem:[#allocation2 + $0xef] sm:$0xff]
      %v1269 = vld [vmem:[#allocation2 + $0xf7] sm:$0xff]
      %v1270 = vld [vmem:[#allocation2 + $0xff] sm:$0xff]
      %v1271 = vld [vmem:[#allocation2 + $0x107] sm:$0xff]
      %v1272 = vld [vmem:[#allocation2 + $0x10f] sm:$0xff]
      %v1273 = vld [vmem:[#allocation2 + $0x117] sm:$0xff]
      %v1274 = vld [vmem:[#allocation2 + $0x11f] sm:$0xff]
      %v1275 = vpack.c.bf16 %v1240, %v1239
      %v1276 = vpack.c.bf16 %v1242, %v1241
      %v1277 = vpack.c.bf16 %v1244, %v1243
      %v1278 = vpack.c.bf16 %v1246, %v1245
      %v1279 = vpack.c.bf16 %v1248, %v1247
      %v1280 = vpack.c.bf16 %v1250, %v1249
      %v1281 = vpack.c.bf16 %v1252, %v1251
      %v1282 = vpack.c.bf16 %v1254, %v1253
      %v1283 = vpack.c.bf16 %v1256, %v1255
      %v1284 = vpack.c.bf16 %v1258, %v1257
      %v1285 = vpack.c.bf16 %v1260, %v1259
      %v1286 = vpack.c.bf16 %v1262, %v1261
      %v1287 = vpack.c.bf16 %v1264, %v1263
      %v1288 = vpack.c.bf16 %v1266, %v1265
      %v1289 = vpack.c.bf16 %v1268, %v1267
      %v1290 = vpack.c.bf16 %v1270, %v1269
      %v1291 = vpack.c.bf16 %v1272, %v1271
      %v1292 = vpack.c.bf16 %v1274, %v1273
      %v1293 = vld [vmem:[#allocation2 + $0x8] sm:$0xff]
      %v1294 = vld [vmem:[#allocation2 + $0x10] sm:$0xff]
      %v1295 = vld [vmem:[#allocation2 + $0x18] sm:$0xff]
      %v1296 = vld [vmem:[#allocation2 + $0x20] sm:$0xff]
      %v1297 = vld [vmem:[#allocation2 + $0x28] sm:$0xff]
      %v1298 = vld [vmem:[#allocation2 + $0x30] sm:$0xff]
      %v1299 = vld [vmem:[#allocation2 + $0x38] sm:$0xff]
      %v1300 = vld [vmem:[#allocation2 + $0x40] sm:$0xff]
      %v1301 = vld [vmem:[#allocation2 + $0x48] sm:$0xff]
      %v1302 = vld [vmem:[#allocation2 + $0x50] sm:$0xff]
      %v1303 = vld [vmem:[#allocation2 + $0x58] sm:$0xff]
      %v1304 = vld [vmem:[#allocation2 + $0x60] sm:$0xff]
      %v1305 = vld [vmem:[#allocation2 + $0x68] sm:$0xff]
      %v1306 = vld [vmem:[#allocation2 + $0x70] sm:$0xff]
      %v1307 = vld [vmem:[#allocation2 + $0x78] sm:$0xff]
      %v1308 = vld [vmem:[#allocation2 + $0x80] sm:$0xff]
      %v1309 = vld [vmem:[#allocation2 + $0x88] sm:$0xff]
      %v1310 = vld [vmem:[#allocation2 + $0x90] sm:$0xff]
      %v1311 = vld [vmem:[#allocation2 + $0x98] sm:$0xff]
      %v1312 = vld [vmem:[#allocation2 + $0xa0] sm:$0xff]
      %v1313 = vld [vmem:[#allocation2 + $0xa8] sm:$0xff]
      %v1314 = vld [vmem:[#allocation2 + $0xb0] sm:$0xff]
      %v1315 = vld [vmem:[#allocation2 + $0xb8] sm:$0xff]
      %v1316 = vld [vmem:[#allocation2 + $0xc0] sm:$0xff]
      %v1317 = vld [vmem:[#allocation2 + $0xc8] sm:$0xff]
      %v1318 = vld [vmem:[#allocation2 + $0xd0] sm:$0xff]
      %v1319 = vld [vmem:[#allocation2 + $0xd8] sm:$0xff]
      %v1320 = vld [vmem:[#allocation2 + $0xe0] sm:$0xff]
      %v1321 = vld [vmem:[#allocation2 + $0xe8] sm:$0xff]
      %v1322 = vld [vmem:[#allocation2 + $0xf0] sm:$0xff]
      %v1323 = vld [vmem:[#allocation2 + $0xf8] sm:$0xff]
      %v1324 = vld [vmem:[#allocation2 + $0x100] sm:$0xff]
      %v1325 = vld [vmem:[#allocation2 + $0x108] sm:$0xff]
      %v1326 = vld [vmem:[#allocation2 + $0x110] sm:$0xff]
      %v1327 = vld [vmem:[#allocation2 + $0x118] sm:$0xff]
      %v1328 = vld [vmem:[#allocation2 + $0x120] sm:$0xff]
      %v1329 = vpack.c.bf16 %v1294, %v1293
      %v1330 = vpack.c.bf16 %v1296, %v1295
      %v1331 = vpack.c.bf16 %v1298, %v1297
      %v1332 = vpack.c.bf16 %v1300, %v1299
      %v1333 = vpack.c.bf16 %v1302, %v1301
      %v1334 = vpack.c.bf16 %v1304, %v1303
      %v1335 = vpack.c.bf16 %v1306, %v1305
      %v1336 = vpack.c.bf16 %v1308, %v1307
      %v1337 = vpack.c.bf16 %v1310, %v1309
      %v1338 = vpack.c.bf16 %v1312, %v1311
      %v1339 = vpack.c.bf16 %v1314, %v1313
      %v1340 = vpack.c.bf16 %v1316, %v1315
      %v1341 = vpack.c.bf16 %v1318, %v1317
      %v1342 = vpack.c.bf16 %v1320, %v1319
      %v1343 = vpack.c.bf16 %v1322, %v1321
      %v1344 = vpack.c.bf16 %v1324, %v1323
      %v1345 = vpack.c.bf16 %v1326, %v1325
      %v1346 = vpack.c.bf16 %v1328, %v1327
      %v1347 = vld [vmem:[#allocation2 + $0x9] sm:$0xff]
      %v1348 = vld [vmem:[#allocation2 + $0x11] sm:$0xff]
      %v1349 = vld [vmem:[#allocation2 + $0x19] sm:$0xff]
      %v1350 = vld [vmem:[#allocation2 + $0x21] sm:$0xff]
      %v1351 = vld [vmem:[#allocation2 + $0x29] sm:$0xff]
      %v1352 = vld [vmem:[#allocation2 + $0x31] sm:$0xff]
      %v1353 = vld [vmem:[#allocation2 + $0x39] sm:$0xff]
      %v1354 = vld [vmem:[#allocation2 + $0x41] sm:$0xff]
      %v1355 = vld [vmem:[#allocation2 + $0x49] sm:$0xff]
      %v1356 = vld [vmem:[#allocation2 + $0x51] sm:$0xff]
      %v1357 = vld [vmem:[#allocation2 + $0x59] sm:$0xff]
      %v1358 = vld [vmem:[#allocation2 + $0x61] sm:$0xff]
      %v1359 = vld [vmem:[#allocation2 + $0x69] sm:$0xff]
      %v1360 = vld [vmem:[#allocation2 + $0x71] sm:$0xff]
      %v1361 = vld [vmem:[#allocation2 + $0x79] sm:$0xff]
      %v1362 = vld [vmem:[#allocation2 + $0x81] sm:$0xff]
      %v1363 = vld [vmem:[#allocation2 + $0x89] sm:$0xff]
      %v1364 = vld [vmem:[#allocation2 + $0x91] sm:$0xff]
      %v1365 = vld [vmem:[#allocation2 + $0x99] sm:$0xff]
      %v1366 = vld [vmem:[#allocation2 + $0xa1] sm:$0xff]
      %v1367 = vld [vmem:[#allocation2 + $0xa9] sm:$0xff]
      %v1368 = vld [vmem:[#allocation2 + $0xb1] sm:$0xff]
      %v1369 = vld [vmem:[#allocation2 + $0xb9] sm:$0xff]
      %v1370 = vld [vmem:[#allocation2 + $0xc1] sm:$0xff]
      %v1371 = vld [vmem:[#allocation2 + $0xc9] sm:$0xff]
      %v1372 = vld [vmem:[#allocation2 + $0xd1] sm:$0xff]
      %v1373 = vld [vmem:[#allocation2 + $0xd9] sm:$0xff]
      %v1374 = vld [vmem:[#allocation2 + $0xe1] sm:$0xff]
      %v1375 = vld [vmem:[#allocation2 + $0xe9] sm:$0xff]
      %v1376 = vld [vmem:[#allocation2 + $0xf1] sm:$0xff]
      %v1377 = vld [vmem:[#allocation2 + $0xf9] sm:$0xff]
      %v1378 = vld [vmem:[#allocation2 + $0x101] sm:$0xff]
      %v1379 = vld [vmem:[#allocation2 + $0x109] sm:$0xff]
      %v1380 = vld [vmem:[#allocation2 + $0x111] sm:$0xff]
      %v1381 = vld [vmem:[#allocation2 + $0x119] sm:$0xff]
      %v1382 = vld [vmem:[#allocation2 + $0x121] sm:$0xff]
      %v1383 = vpack.c.bf16 %v1348, %v1347
      %v1384 = vpack.c.bf16 %v1350, %v1349
      %v1385 = vpack.c.bf16 %v1352, %v1351
      %v1386 = vpack.c.bf16 %v1354, %v1353
      %v1387 = vpack.c.bf16 %v1356, %v1355
      %v1388 = vpack.c.bf16 %v1358, %v1357
      %v1389 = vpack.c.bf16 %v1360, %v1359
      %v1390 = vpack.c.bf16 %v1362, %v1361
      %v1391 = vpack.c.bf16 %v1364, %v1363
      %v1392 = vpack.c.bf16 %v1366, %v1365
      %v1393 = vpack.c.bf16 %v1368, %v1367
      %v1394 = vpack.c.bf16 %v1370, %v1369
      %v1395 = vpack.c.bf16 %v1372, %v1371
      %v1396 = vpack.c.bf16 %v1374, %v1373
      %v1397 = vpack.c.bf16 %v1376, %v1375
      %v1398 = vpack.c.bf16 %v1378, %v1377
      %v1399 = vpack.c.bf16 %v1380, %v1379
      %v1400 = vpack.c.bf16 %v1382, %v1381
      %v1401 = vld [vmem:[#allocation2 + $0x129] sm:$0xff]
      %v1402 = vld [vmem:[#allocation2 + $0x131] sm:$0xff]
      %v1403 = vpack.c.bf16 %v1402, %v1401
      %v1404 = vld [vmem:[#allocation2 + $0x1a] sm:$0xff]
      %v1405 = vld [vmem:[#allocation2 + $0x22] sm:$0xff]
      %v1406 = vld [vmem:[#allocation2 + $0x2a] sm:$0xff]
      %v1407 = vld [vmem:[#allocation2 + $0x32] sm:$0xff]
      %v1408 = vld [vmem:[#allocation2 + $0x3a] sm:$0xff]
      %v1409 = vld [vmem:[#allocation2 + $0x42] sm:$0xff]
      %v1410 = vld [vmem:[#allocation2 + $0x4a] sm:$0xff]
      %v1411 = vld [vmem:[#allocation2 + $0x52] sm:$0xff]
      %v1412 = vld [vmem:[#allocation2 + $0x5a] sm:$0xff]
      %v1413 = vld [vmem:[#allocation2 + $0x62] sm:$0xff]
      %v1414 = vld [vmem:[#allocation2 + $0x6a] sm:$0xff]
      %v1415 = vld [vmem:[#allocation2 + $0x72] sm:$0xff]
      %v1416 = vld [vmem:[#allocation2 + $0x7a] sm:$0xff]
      %v1417 = vld [vmem:[#allocation2 + $0x82] sm:$0xff]
      %v1418 = vld [vmem:[#allocation2 + $0x8a] sm:$0xff]
      %v1419 = vld [vmem:[#allocation2 + $0x92] sm:$0xff]
      %v1420 = vld [vmem:[#allocation2 + $0x9a] sm:$0xff]
      %v1421 = vld [vmem:[#allocation2 + $0xa2] sm:$0xff]
      %v1422 = vld [vmem:[#allocation2 + $0xaa] sm:$0xff]
      %v1423 = vld [vmem:[#allocation2 + $0xb2] sm:$0xff]
      %v1424 = vld [vmem:[#allocation2 + $0xba] sm:$0xff]
      %v1425 = vld [vmem:[#allocation2 + $0xc2] sm:$0xff]
      %v1426 = vld [vmem:[#allocation2 + $0xca] sm:$0xff]
      %v1427 = vld [vmem:[#allocation2 + $0xd2] sm:$0xff]
      %v1428 = vld [vmem:[#allocation2 + $0xda] sm:$0xff]
      %v1429 = vld [vmem:[#allocation2 + $0xe2] sm:$0xff]
      %v1430 = vld [vmem:[#allocation2 + $0xea] sm:$0xff]
      %v1431 = vld [vmem:[#allocation2 + $0xf2] sm:$0xff]
      %v1432 = vld [vmem:[#allocation2 + $0xfa] sm:$0xff]
      %v1433 = vld [vmem:[#allocation2 + $0x102] sm:$0xff]
      %v1434 = vld [vmem:[#allocation2 + $0x10a] sm:$0xff]
      %v1435 = vld [vmem:[#allocation2 + $0x112] sm:$0xff]
      %v1436 = vld [vmem:[#allocation2 + $0x11a] sm:$0xff]
      %v1437 = vld [vmem:[#allocation2 + $0x122] sm:$0xff]
      %v1438 = vld [vmem:[#allocation2 + $0x12a] sm:$0xff]
      %v1439 = vld [vmem:[#allocation2 + $0x132] sm:$0xff]
      %v1440 = vpack.c.bf16 %v1405, %v1404
      %v1441 = vpack.c.bf16 %v1407, %v1406
      %v1442 = vpack.c.bf16 %v1409, %v1408
      %v1443 = vpack.c.bf16 %v1411, %v1410
      %v1444 = vpack.c.bf16 %v1413, %v1412
      %v1445 = vpack.c.bf16 %v1415, %v1414
      %v1446 = vpack.c.bf16 %v1417, %v1416
      %v1447 = vpack.c.bf16 %v1419, %v1418
      %v1448 = vpack.c.bf16 %v1421, %v1420
      %v1449 = vpack.c.bf16 %v1423, %v1422
      %v1450 = vpack.c.bf16 %v1425, %v1424
      %v1451 = vpack.c.bf16 %v1427, %v1426
      %v1452 = vpack.c.bf16 %v1429, %v1428
      %v1453 = vpack.c.bf16 %v1431, %v1430
      %v1454 = vpack.c.bf16 %v1433, %v1432
      %v1455 = vpack.c.bf16 %v1435, %v1434
      %v1456 = vpack.c.bf16 %v1437, %v1436
      %v1457 = vpack.c.bf16 %v1439, %v1438
      %v1458 = vld [vmem:[#allocation2 + $0x1b] sm:$0xff]
      %v1459 = vld [vmem:[#allocation2 + $0x23] sm:$0xff]
      %v1460 = vld [vmem:[#allocation2 + $0x2b] sm:$0xff]
      %v1461 = vld [vmem:[#allocation2 + $0x33] sm:$0xff]
      %v1462 = vld [vmem:[#allocation2 + $0x3b] sm:$0xff]
      %v1463 = vld [vmem:[#allocation2 + $0x43] sm:$0xff]
      %v1464 = vld [vmem:[#allocation2 + $0x4b] sm:$0xff]
      %v1465 = vld [vmem:[#allocation2 + $0x53] sm:$0xff]
      %v1466 = vld [vmem:[#allocation2 + $0x5b] sm:$0xff]
      %v1467 = vld [vmem:[#allocation2 + $0x63] sm:$0xff]
      %v1468 = vld [vmem:[#allocation2 + $0x6b] sm:$0xff]
      %v1469 = vld [vmem:[#allocation2 + $0x73] sm:$0xff]
      %v1470 = vld [vmem:[#allocation2 + $0x7b] sm:$0xff]
      %v1471 = vld [vmem:[#allocation2 + $0x83] sm:$0xff]
      %v1472 = vld [vmem:[#allocation2 + $0x8b] sm:$0xff]
      %v1473 = vld [vmem:[#allocation2 + $0x93] sm:$0xff]
      %v1474 = vld [vmem:[#allocation2 + $0x9b] sm:$0xff]
      %v1475 = vld [vmem:[#allocation2 + $0xa3] sm:$0xff]
      %v1476 = vld [vmem:[#allocation2 + $0xab] sm:$0xff]
      %v1477 = vld [vmem:[#allocation2 + $0xb3] sm:$0xff]
      %v1478 = vld [vmem:[#allocation2 + $0xbb] sm:$0xff]
      %v1479 = vld [vmem:[#allocation2 + $0xc3] sm:$0xff]
      %v1480 = vld [vmem:[#allocation2 + $0xcb] sm:$0xff]
      %v1481 = vld [vmem:[#allocation2 + $0xd3] sm:$0xff]
      %v1482 = vld [vmem:[#allocation2 + $0xdb] sm:$0xff]
      %v1483 = vld [vmem:[#allocation2 + $0xe3] sm:$0xff]
      %v1484 = vld [vmem:[#allocation2 + $0xeb] sm:$0xff]
      %v1485 = vld [vmem:[#allocation2 + $0xf3] sm:$0xff]
      %v1486 = vld [vmem:[#allocation2 + $0xfb] sm:$0xff]
      %v1487 = vld [vmem:[#allocation2 + $0x103] sm:$0xff]
      %v1488 = vld [vmem:[#allocation2 + $0x10b] sm:$0xff]
      %v1489 = vld [vmem:[#allocation2 + $0x113] sm:$0xff]
      %v1490 = vld [vmem:[#allocation2 + $0x11b] sm:$0xff]
      %v1491 = vld [vmem:[#allocation2 + $0x123] sm:$0xff]
      %v1492 = vld [vmem:[#allocation2 + $0x12b] sm:$0xff]
      %v1493 = vld [vmem:[#allocation2 + $0x133] sm:$0xff]
      %v1494 = vpack.c.bf16 %v1459, %v1458
      %v1495 = vpack.c.bf16 %v1461, %v1460
      %v1496 = vpack.c.bf16 %v1463, %v1462
      %v1497 = vpack.c.bf16 %v1465, %v1464
      %v1498 = vpack.c.bf16 %v1467, %v1466
      %v1499 = vpack.c.bf16 %v1469, %v1468
      %v1500 = vpack.c.bf16 %v1471, %v1470
      %v1501 = vpack.c.bf16 %v1473, %v1472
      %v1502 = vpack.c.bf16 %v1475, %v1474
      %v1503 = vpack.c.bf16 %v1477, %v1476
      %v1504 = vpack.c.bf16 %v1479, %v1478
      %v1505 = vpack.c.bf16 %v1481, %v1480
      %v1506 = vpack.c.bf16 %v1483, %v1482
      %v1507 = vpack.c.bf16 %v1485, %v1484
      %v1508 = vpack.c.bf16 %v1487, %v1486
      %v1509 = vpack.c.bf16 %v1489, %v1488
      %v1510 = vpack.c.bf16 %v1491, %v1490
      %v1511 = vpack.c.bf16 %v1493, %v1492
      %v1512 = vld [vmem:[#allocation2 + $0x13b] sm:$0xff]
      %v1513 = vld [vmem:[#allocation2 + $0x143] sm:$0xff]
      %v1514 = vpack.c.bf16 %v1513, %v1512
      %v1515 = vld [vmem:[#allocation2 + $0x2c] sm:$0xff]
      %v1516 = vld [vmem:[#allocation2 + $0x34] sm:$0xff]
      %v1517 = vld [vmem:[#allocation2 + $0x3c] sm:$0xff]
      %v1518 = vld [vmem:[#allocation2 + $0x44] sm:$0xff]
      %v1519 = vld [vmem:[#allocation2 + $0x4c] sm:$0xff]
      %v1520 = vld [vmem:[#allocation2 + $0x54] sm:$0xff]
      %v1521 = vld [vmem:[#allocation2 + $0x5c] sm:$0xff]
      %v1522 = vld [vmem:[#allocation2 + $0x64] sm:$0xff]
      %v1523 = vld [vmem:[#allocation2 + $0x6c] sm:$0xff]
      %v1524 = vld [vmem:[#allocation2 + $0x74] sm:$0xff]
      %v1525 = vld [vmem:[#allocation2 + $0x7c] sm:$0xff]
      %v1526 = vld [vmem:[#allocation2 + $0x84] sm:$0xff]
      %v1527 = vld [vmem:[#allocation2 + $0x8c] sm:$0xff]
      %v1528 = vld [vmem:[#allocation2 + $0x94] sm:$0xff]
      %v1529 = vld [vmem:[#allocation2 + $0x9c] sm:$0xff]
      %v1530 = vld [vmem:[#allocation2 + $0xa4] sm:$0xff]
      %v1531 = vld [vmem:[#allocation2 + $0xac] sm:$0xff]
      %v1532 = vld [vmem:[#allocation2 + $0xb4] sm:$0xff]
      %v1533 = vld [vmem:[#allocation2 + $0xbc] sm:$0xff]
      %v1534 = vld [vmem:[#allocation2 + $0xc4] sm:$0xff]
      %v1535 = vld [vmem:[#allocation2 + $0xcc] sm:$0xff]
      %v1536 = vld [vmem:[#allocation2 + $0xd4] sm:$0xff]
      %v1537 = vld [vmem:[#allocation2 + $0xdc] sm:$0xff]
      %v1538 = vld [vmem:[#allocation2 + $0xe4] sm:$0xff]
      %v1539 = vld [vmem:[#allocation2 + $0xec] sm:$0xff]
      %v1540 = vld [vmem:[#allocation2 + $0xf4] sm:$0xff]
      %v1541 = vld [vmem:[#allocation2 + $0xfc] sm:$0xff]
      %v1542 = vld [vmem:[#allocation2 + $0x104] sm:$0xff]
      %v1543 = vld [vmem:[#allocation2 + $0x10c] sm:$0xff]
      %v1544 = vld [vmem:[#allocation2 + $0x114] sm:$0xff]
      %v1545 = vld [vmem:[#allocation2 + $0x11c] sm:$0xff]
      %v1546 = vld [vmem:[#allocation2 + $0x124] sm:$0xff]
      %v1547 = vld [vmem:[#allocation2 + $0x12c] sm:$0xff]
      %v1548 = vld [vmem:[#allocation2 + $0x134] sm:$0xff]
      %v1549 = vld [vmem:[#allocation2 + $0x13c] sm:$0xff]
      %v1550 = vld [vmem:[#allocation2 + $0x144] sm:$0xff]
      %v1551 = vpack.c.bf16 %v1516, %v1515
      %v1552 = vpack.c.bf16 %v1518, %v1517
      %v1553 = vpack.c.bf16 %v1520, %v1519
      %v1554 = vpack.c.bf16 %v1522, %v1521
      %v1555 = vpack.c.bf16 %v1524, %v1523
      %v1556 = vpack.c.bf16 %v1526, %v1525
      %v1557 = vpack.c.bf16 %v1528, %v1527
      %v1558 = vpack.c.bf16 %v1530, %v1529
      %v1559 = vpack.c.bf16 %v1532, %v1531
      %v1560 = vpack.c.bf16 %v1534, %v1533
      %v1561 = vpack.c.bf16 %v1536, %v1535
      %v1562 = vpack.c.bf16 %v1538, %v1537
      %v1563 = vpack.c.bf16 %v1540, %v1539
      %v1564 = vpack.c.bf16 %v1542, %v1541
      %v1565 = vpack.c.bf16 %v1544, %v1543
      %v1566 = vpack.c.bf16 %v1546, %v1545
      %v1567 = vpack.c.bf16 %v1548, %v1547
      %v1568 = vpack.c.bf16 %v1550, %v1549
      %v1569 = vld [vmem:[#allocation2 + $0x2d] sm:$0xff]
      %v1570 = vld [vmem:[#allocation2 + $0x35] sm:$0xff]
      %v1571 = vld [vmem:[#allocation2 + $0x3d] sm:$0xff]
      %v1572 = vld [vmem:[#allocation2 + $0x45] sm:$0xff]
      %v1573 = vld [vmem:[#allocation2 + $0x4d] sm:$0xff]
      %v1574 = vld [vmem:[#allocation2 + $0x55] sm:$0xff]
      %v1575 = vld [vmem:[#allocation2 + $0x5d] sm:$0xff]
      %v1576 = vld [vmem:[#allocation2 + $0x65] sm:$0xff]
      %v1577 = vld [vmem:[#allocation2 + $0x6d] sm:$0xff]
      %v1578 = vld [vmem:[#allocation2 + $0x75] sm:$0xff]
      %v1579 = vld [vmem:[#allocation2 + $0x7d] sm:$0xff]
      %v1580 = vld [vmem:[#allocation2 + $0x85] sm:$0xff]
      %v1581 = vld [vmem:[#allocation2 + $0x8d] sm:$0xff]
      %v1582 = vld [vmem:[#allocation2 + $0x95] sm:$0xff]
      %v1583 = vld [vmem:[#allocation2 + $0x9d] sm:$0xff]
      %v1584 = vld [vmem:[#allocation2 + $0xa5] sm:$0xff]
      %v1585 = vld [vmem:[#allocation2 + $0xad] sm:$0xff]
      %v1586 = vld [vmem:[#allocation2 + $0xb5] sm:$0xff]
      %v1587 = vld [vmem:[#allocation2 + $0xbd] sm:$0xff]
      %v1588 = vld [vmem:[#allocation2 + $0xc5] sm:$0xff]
      %v1589 = vld [vmem:[#allocation2 + $0xcd] sm:$0xff]
      %v1590 = vld [vmem:[#allocation2 + $0xd5] sm:$0xff]
      %v1591 = vld [vmem:[#allocation2 + $0xdd] sm:$0xff]
      %v1592 = vld [vmem:[#allocation2 + $0xe5] sm:$0xff]
      %v1593 = vld [vmem:[#allocation2 + $0xed] sm:$0xff]
      %v1594 = vld [vmem:[#allocation2 + $0xf5] sm:$0xff]
      %v1595 = vld [vmem:[#allocation2 + $0xfd] sm:$0xff]
      %v1596 = vld [vmem:[#allocation2 + $0x105] sm:$0xff]
      %v1597 = vld [vmem:[#allocation2 + $0x10d] sm:$0xff]
      %v1598 = vld [vmem:[#allocation2 + $0x115] sm:$0xff]
      %v1599 = vld [vmem:[#allocation2 + $0x11d] sm:$0xff]
      %v1600 = vld [vmem:[#allocation2 + $0x125] sm:$0xff]
      %v1601 = vld [vmem:[#allocation2 + $0x12d] sm:$0xff]
      %v1602 = vld [vmem:[#allocation2 + $0x135] sm:$0xff]
      %v1603 = vld [vmem:[#allocation2 + $0x13d] sm:$0xff]
      %v1604 = vld [vmem:[#allocation2 + $0x145] sm:$0xff]
      %v1605 = vpack.c.bf16 %v1570, %v1569
      %v1606 = vpack.c.bf16 %v1572, %v1571
      %v1607 = vpack.c.bf16 %v1574, %v1573
      %v1608 = vpack.c.bf16 %v1576, %v1575
      %v1609 = vpack.c.bf16 %v1578, %v1577
      %v1610 = vpack.c.bf16 %v1580, %v1579
      %v1611 = vpack.c.bf16 %v1582, %v1581
      %v1612 = vpack.c.bf16 %v1584, %v1583
      %v1613 = vpack.c.bf16 %v1586, %v1585
      %v1614 = vpack.c.bf16 %v1588, %v1587
      %v1615 = vpack.c.bf16 %v1590, %v1589
      %v1616 = vpack.c.bf16 %v1592, %v1591
      %v1617 = vpack.c.bf16 %v1594, %v1593
      %v1618 = vpack.c.bf16 %v1596, %v1595
      %v1619 = vpack.c.bf16 %v1598, %v1597
      %v1620 = vpack.c.bf16 %v1600, %v1599
      %v1621 = vpack.c.bf16 %v1602, %v1601
      %v1622 = vpack.c.bf16 %v1604, %v1603
      %1641 = vrot.lane.b32.xlu0 %v1329, 32
      %v1642 = vpop.permute.xlu0 %1641
      %1643 = vrot.lane.b32.xlu0 %v1330, 32
      %v1644 = vpop.permute.xlu0 %1643
      %1645 = vrot.lane.b32.xlu0 %v1331, 32
      %v1646 = vpop.permute.xlu0 %1645
      %1647 = vrot.lane.b32.xlu0 %v1332, 32
      %v1648 = vpop.permute.xlu0 %1647
      %1649 = vrot.lane.b32.xlu0 %v1333, 32
      %v1650 = vpop.permute.xlu0 %1649
      %1651 = vrot.lane.b32.xlu0 %v1334, 32
      %v1652 = vpop.permute.xlu0 %1651
      %1653 = vrot.lane.b32.xlu0 %v1335, 32
      %v1654 = vpop.permute.xlu0 %1653
      %1655 = vrot.lane.b32.xlu0 %v1336, 32
      %v1656 = vpop.permute.xlu0 %1655
      %1657 = vrot.lane.b32.xlu0 %v1337, 32
      %v1658 = vpop.permute.xlu0 %1657
      %1659 = vrot.lane.b32.xlu0 %v1338, 32
      %v1660 = vpop.permute.xlu0 %1659
      %1661 = vrot.lane.b32.xlu0 %v1339, 32
      %v1662 = vpop.permute.xlu0 %1661
      %1663 = vrot.lane.b32.xlu0 %v1340, 32
      %v1664 = vpop.permute.xlu0 %1663
      %1665 = vrot.lane.b32.xlu0 %v1341, 32
      %v1666 = vpop.permute.xlu0 %1665
      %1667 = vrot.lane.b32.xlu0 %v1342, 32
      %v1668 = vpop.permute.xlu0 %1667
      %1669 = vrot.lane.b32.xlu0 %v1343, 32
      %v1670 = vpop.permute.xlu0 %1669
      %1671 = vrot.lane.b32.xlu0 %v1344, 32
      %v1672 = vpop.permute.xlu0 %1671
      %1673 = vrot.lane.b32.xlu0 %v1345, 32
      %v1674 = vpop.permute.xlu0 %1673
      %1675 = vrot.lane.b32.xlu0 %v1346, 32
      %v1676 = vpop.permute.xlu0 %1675
      %1695 = vrot.lane.b32.xlu0 %v1383, 64
      %v1696 = vpop.permute.xlu0 %1695
      %1697 = vrot.lane.b32.xlu0 %v1384, 64
      %v1698 = vpop.permute.xlu0 %1697
      %1699 = vrot.lane.b32.xlu0 %v1385, 64
      %v1700 = vpop.permute.xlu0 %1699
      %1701 = vrot.lane.b32.xlu0 %v1386, 64
      %v1702 = vpop.permute.xlu0 %1701
      %1703 = vrot.lane.b32.xlu0 %v1387, 64
      %v1704 = vpop.permute.xlu0 %1703
      %1705 = vrot.lane.b32.xlu0 %v1388, 64
      %v1706 = vpop.permute.xlu0 %1705
      %1707 = vrot.lane.b32.xlu0 %v1389, 64
      %v1708 = vpop.permute.xlu0 %1707
      %1709 = vrot.lane.b32.xlu0 %v1390, 64
      %v1710 = vpop.permute.xlu0 %1709
      %1711 = vrot.lane.b32.xlu0 %v1391, 64
      %v1712 = vpop.permute.xlu0 %1711
      %1713 = vrot.lane.b32.xlu0 %v1392, 64
      %v1714 = vpop.permute.xlu0 %1713
      %1715 = vrot.lane.b32.xlu0 %v1393, 64
      %v1716 = vpop.permute.xlu0 %1715
      %1717 = vrot.lane.b32.xlu0 %v1394, 64
      %v1718 = vpop.permute.xlu0 %1717
      %1719 = vrot.lane.b32.xlu0 %v1395, 64
      %v1720 = vpop.permute.xlu0 %1719
      %1721 = vrot.lane.b32.xlu0 %v1396, 64
      %v1722 = vpop.permute.xlu0 %1721
      %1723 = vrot.lane.b32.xlu0 %v1397, 64
      %v1724 = vpop.permute.xlu0 %1723
      %1725 = vrot.lane.b32.xlu0 %v1398, 64
      %v1726 = vpop.permute.xlu0 %1725
      %1727 = vrot.lane.b32.xlu0 %v1399, 64
      %v1728 = vpop.permute.xlu0 %1727
      %1729 = vrot.lane.b32.xlu0 %v1400, 64
      %v1730 = vpop.permute.xlu0 %1729
      %1732 = vrot.lane.b32.xlu0 %v1384, 96
      %v1733 = vpop.permute.xlu0 %1732
      %1734 = vrot.lane.b32.xlu0 %v1385, 96
      %v1735 = vpop.permute.xlu0 %1734
      %1736 = vrot.lane.b32.xlu0 %v1386, 96
      %v1737 = vpop.permute.xlu0 %1736
      %1738 = vrot.lane.b32.xlu0 %v1387, 96
      %v1739 = vpop.permute.xlu0 %1738
      %1740 = vrot.lane.b32.xlu0 %v1388, 96
      %v1741 = vpop.permute.xlu0 %1740
      %1742 = vrot.lane.b32.xlu0 %v1389, 96
      %v1743 = vpop.permute.xlu0 %1742
      %1744 = vrot.lane.b32.xlu0 %v1390, 96
      %v1745 = vpop.permute.xlu0 %1744
      %1746 = vrot.lane.b32.xlu0 %v1391, 96
      %v1747 = vpop.permute.xlu0 %1746
      %1748 = vrot.lane.b32.xlu0 %v1392, 96
      %v1749 = vpop.permute.xlu0 %1748
      %1750 = vrot.lane.b32.xlu0 %v1393, 96
      %v1751 = vpop.permute.xlu0 %1750
      %1752 = vrot.lane.b32.xlu0 %v1394, 96
      %v1753 = vpop.permute.xlu0 %1752
      %1754 = vrot.lane.b32.xlu0 %v1395, 96
      %v1755 = vpop.permute.xlu0 %1754
      %1756 = vrot.lane.b32.xlu0 %v1396, 96
      %v1757 = vpop.permute.xlu0 %1756
      %1758 = vrot.lane.b32.xlu0 %v1397, 96
      %v1759 = vpop.permute.xlu0 %1758
      %1760 = vrot.lane.b32.xlu0 %v1398, 96
      %v1761 = vpop.permute.xlu0 %1760
      %1762 = vrot.lane.b32.xlu0 %v1399, 96
      %v1763 = vpop.permute.xlu0 %1762
      %1764 = vrot.lane.b32.xlu0 %v1400, 96
      %v1765 = vpop.permute.xlu0 %1764
      %1766 = vrot.lane.b32.xlu0 %v1403, 96
      %v1767 = vpop.permute.xlu0 %1766
      %1786 = vrot.lane.b32.xlu0 %v1494, 32
      %v1787 = vpop.permute.xlu0 %1786
      %1788 = vrot.lane.b32.xlu0 %v1495, 32
      %v1789 = vpop.permute.xlu0 %1788
      %1790 = vrot.lane.b32.xlu0 %v1496, 32
      %v1791 = vpop.permute.xlu0 %1790
      %1792 = vrot.lane.b32.xlu0 %v1497, 32
      %v1793 = vpop.permute.xlu0 %1792
      %1794 = vrot.lane.b32.xlu0 %v1498, 32
      %v1795 = vpop.permute.xlu0 %1794
      %1796 = vrot.lane.b32.xlu0 %v1499, 32
      %v1797 = vpop.permute.xlu0 %1796
      %1798 = vrot.lane.b32.xlu0 %v1500, 32
      %v1799 = vpop.permute.xlu0 %1798
      %1800 = vrot.lane.b32.xlu0 %v1501, 32
      %v1801 = vpop.permute.xlu0 %1800
      %1802 = vrot.lane.b32.xlu0 %v1502, 32
      %v1803 = vpop.permute.xlu0 %1802
      %1804 = vrot.lane.b32.xlu0 %v1503, 32
      %v1805 = vpop.permute.xlu0 %1804
      %1806 = vrot.lane.b32.xlu0 %v1504, 32
      %v1807 = vpop.permute.xlu0 %1806
      %1808 = vrot.lane.b32.xlu0 %v1505, 32
      %v1809 = vpop.permute.xlu0 %1808
      %1810 = vrot.lane.b32.xlu0 %v1506, 32
      %v1811 = vpop.permute.xlu0 %1810
      %1812 = vrot.lane.b32.xlu0 %v1507, 32
      %v1813 = vpop.permute.xlu0 %1812
      %1814 = vrot.lane.b32.xlu0 %v1508, 32
      %v1815 = vpop.permute.xlu0 %1814
      %1816 = vrot.lane.b32.xlu0 %v1509, 32
      %v1817 = vpop.permute.xlu0 %1816
      %1818 = vrot.lane.b32.xlu0 %v1510, 32
      %v1819 = vpop.permute.xlu0 %1818
      %1820 = vrot.lane.b32.xlu0 %v1511, 32
      %v1821 = vpop.permute.xlu0 %1820
      %1823 = vrot.lane.b32.xlu0 %v1495, 64
      %v1824 = vpop.permute.xlu0 %1823
      %1825 = vrot.lane.b32.xlu0 %v1496, 64
      %v1826 = vpop.permute.xlu0 %1825
      %1827 = vrot.lane.b32.xlu0 %v1497, 64
      %v1828 = vpop.permute.xlu0 %1827
      %1829 = vrot.lane.b32.xlu0 %v1498, 64
      %v1830 = vpop.permute.xlu0 %1829
      %1831 = vrot.lane.b32.xlu0 %v1499, 64
      %v1832 = vpop.permute.xlu0 %1831
      %1833 = vrot.lane.b32.xlu0 %v1500, 64
      %v1834 = vpop.permute.xlu0 %1833
      %1835 = vrot.lane.b32.xlu0 %v1501, 64
      %v1836 = vpop.permute.xlu0 %1835
      %1837 = vrot.lane.b32.xlu0 %v1502, 64
      %v1838 = vpop.permute.xlu0 %1837
      %1839 = vrot.lane.b32.xlu0 %v1503, 64
      %v1840 = vpop.permute.xlu0 %1839
      %1841 = vrot.lane.b32.xlu0 %v1504, 64
      %v1842 = vpop.permute.xlu0 %1841
      %1843 = vrot.lane.b32.xlu0 %v1505, 64
      %v1844 = vpop.permute.xlu0 %1843
      %1845 = vrot.lane.b32.xlu0 %v1506, 64
      %v1846 = vpop.permute.xlu0 %1845
      %1847 = vrot.lane.b32.xlu0 %v1507, 64
      %v1848 = vpop.permute.xlu0 %1847
      %1849 = vrot.lane.b32.xlu0 %v1508, 64
      %v1850 = vpop.permute.xlu0 %1849
      %1851 = vrot.lane.b32.xlu0 %v1509, 64
      %v1852 = vpop.permute.xlu0 %1851
      %1853 = vrot.lane.b32.xlu0 %v1510, 64
      %v1854 = vpop.permute.xlu0 %1853
      %1855 = vrot.lane.b32.xlu0 %v1511, 64
      %v1856 = vpop.permute.xlu0 %1855
      %1857 = vrot.lane.b32.xlu0 %v1514, 64
      %v1858 = vpop.permute.xlu0 %1857
      %1877 = vrot.lane.b32.xlu0 %v1551, 96
      %v1878 = vpop.permute.xlu0 %1877
      %1879 = vrot.lane.b32.xlu0 %v1552, 96
      %v1880 = vpop.permute.xlu0 %1879
      %1881 = vrot.lane.b32.xlu0 %v1553, 96
      %v1882 = vpop.permute.xlu0 %1881
      %1883 = vrot.lane.b32.xlu0 %v1554, 96
      %v1884 = vpop.permute.xlu0 %1883
      %1885 = vrot.lane.b32.xlu0 %v1555, 96
      %v1886 = vpop.permute.xlu0 %1885
      %1887 = vrot.lane.b32.xlu0 %v1556, 96
      %v1888 = vpop.permute.xlu0 %1887
      %1889 = vrot.lane.b32.xlu0 %v1557, 96
      %v1890 = vpop.permute.xlu0 %1889
      %1891 = vrot.lane.b32.xlu0 %v1558, 96
      %v1892 = vpop.permute.xlu0 %1891
      %1893 = vrot.lane.b32.xlu0 %v1559, 96
      %v1894 = vpop.permute.xlu0 %1893
      %1895 = vrot.lane.b32.xlu0 %v1560, 96
      %v1896 = vpop.permute.xlu0 %1895
      %1897 = vrot.lane.b32.xlu0 %v1561, 96
      %v1898 = vpop.permute.xlu0 %1897
      %1899 = vrot.lane.b32.xlu0 %v1562, 96
      %v1900 = vpop.permute.xlu0 %1899
      %1901 = vrot.lane.b32.xlu0 %v1563, 96
      %v1902 = vpop.permute.xlu0 %1901
      %1903 = vrot.lane.b32.xlu0 %v1564, 96
      %v1904 = vpop.permute.xlu0 %1903
      %1905 = vrot.lane.b32.xlu0 %v1565, 96
      %v1906 = vpop.permute.xlu0 %1905
      %1907 = vrot.lane.b32.xlu0 %v1566, 96
      %v1908 = vpop.permute.xlu0 %1907
      %1909 = vrot.lane.b32.xlu0 %v1567, 96
      %v1910 = vpop.permute.xlu0 %1909
      %1911 = vrot.lane.b32.xlu0 %v1568, 96
      %v1912 = vpop.permute.xlu0 %1911
      %vm1913 = vcmask 261120
      %v1916 = vsel %vm1913, %v1275, %v1642
      %v1919 = vsel %vm1913, %v1276, %v1644
      %v1922 = vsel %vm1913, %v1277, %v1646
      %v1925 = vsel %vm1913, %v1278, %v1648
      %v1928 = vsel %vm1913, %v1279, %v1650
      %v1931 = vsel %vm1913, %v1280, %v1652
      %v1934 = vsel %vm1913, %v1281, %v1654
      %v1937 = vsel %vm1913, %v1282, %v1656
      %v1940 = vsel %vm1913, %v1283, %v1658
      %v1943 = vsel %vm1913, %v1284, %v1660
      %v1946 = vsel %vm1913, %v1285, %v1662
      %v1949 = vsel %vm1913, %v1286, %v1664
      %v1952 = vsel %vm1913, %v1287, %v1666
      %v1955 = vsel %vm1913, %v1288, %v1668
      %v1958 = vsel %vm1913, %v1289, %v1670
      %v1961 = vsel %vm1913, %v1290, %v1672
      %v1964 = vsel %vm1913, %v1291, %v1674
      %v1967 = vsel %vm1913, %v1292, %v1676
      %vm1968 = vcmask 523264
      %v1970 = vsel %vm1968, %v1916, %v1696
      %v1972 = vsel %vm1968, %v1919, %v1698
      %v1974 = vsel %vm1968, %v1922, %v1700
      %v1976 = vsel %vm1968, %v1925, %v1702
      %v1978 = vsel %vm1968, %v1928, %v1704
      %v1980 = vsel %vm1968, %v1931, %v1706
      %v1982 = vsel %vm1968, %v1934, %v1708
      %v1984 = vsel %vm1968, %v1937, %v1710
      %v1986 = vsel %vm1968, %v1940, %v1712
      %v1988 = vsel %vm1968, %v1943, %v1714
      %v1990 = vsel %vm1968, %v1946, %v1716
      %v1992 = vsel %vm1968, %v1949, %v1718
      %v1994 = vsel %vm1968, %v1952, %v1720
      %v1996 = vsel %vm1968, %v1955, %v1722
      %v1998 = vsel %vm1968, %v1958, %v1724
      %v2000 = vsel %vm1968, %v1961, %v1726
      %v2002 = vsel %vm1968, %v1964, %v1728
      %v2004 = vsel %vm1968, %v1967, %v1730
      %vm2005 = vcmask 785408
      %v2007 = vsel %vm2005, %v1970, %v1733
      %v2010 = vsel %vm2005, %v1972, %v1735
      %v2013 = vsel %vm2005, %v1974, %v1737
      %v2016 = vsel %vm2005, %v1976, %v1739
      %v2019 = vsel %vm2005, %v1978, %v1741
      %v2022 = vsel %vm2005, %v1980, %v1743
      %v2025 = vsel %vm2005, %v1982, %v1745
      %v2028 = vsel %vm2005, %v1984, %v1747
      %v2031 = vsel %vm2005, %v1986, %v1749
      %v2034 = vsel %vm2005, %v1988, %v1751
      %v2037 = vsel %vm2005, %v1990, %v1753
      %v2040 = vsel %vm2005, %v1992, %v1755
      %v2043 = vsel %vm2005, %v1994, %v1757
      %v2046 = vsel %vm2005, %v1996, %v1759
      %v2049 = vsel %vm2005, %v1998, %v1761
      %v2052 = vsel %vm2005, %v2000, %v1763
      %v2055 = vsel %vm2005, %v2002, %v1765
      %v2058 = vsel %vm2005, %v2004, %v1767
      %v2062 = vsel %vm1913, %v1440, %v1787
      %v2065 = vsel %vm1913, %v1441, %v1789
      %v2068 = vsel %vm1913, %v1442, %v1791
      %v2071 = vsel %vm1913, %v1443, %v1793
      %v2074 = vsel %vm1913, %v1444, %v1795
      %v2077 = vsel %vm1913, %v1445, %v1797
      %v2080 = vsel %vm1913, %v1446, %v1799
      %v2083 = vsel %vm1913, %v1447, %v1801
      %v2086 = vsel %vm1913, %v1448, %v1803
      %v2089 = vsel %vm1913, %v1449, %v1805
      %v2092 = vsel %vm1913, %v1450, %v1807
      %v2095 = vsel %vm1913, %v1451, %v1809
      %v2098 = vsel %vm1913, %v1452, %v1811
      %v2101 = vsel %vm1913, %v1453, %v1813
      %v2104 = vsel %vm1913, %v1454, %v1815
      %v2107 = vsel %vm1913, %v1455, %v1817
      %v2110 = vsel %vm1913, %v1456, %v1819
      %v2113 = vsel %vm1913, %v1457, %v1821
      %v2115 = vsel %vm1968, %v2062, %v1824
      %v2117 = vsel %vm1968, %v2065, %v1826
      %v2119 = vsel %vm1968, %v2068, %v1828
      %v2121 = vsel %vm1968, %v2071, %v1830
      %v2123 = vsel %vm1968, %v2074, %v1832
      %v2125 = vsel %vm1968, %v2077, %v1834
      %v2127 = vsel %vm1968, %v2080, %v1836
      %v2129 = vsel %vm1968, %v2083, %v1838
      %v2131 = vsel %vm1968, %v2086, %v1840
      %v2133 = vsel %vm1968, %v2089, %v1842
      %v2135 = vsel %vm1968, %v2092, %v1844
      %v2137 = vsel %vm1968, %v2095, %v1846
      %v2139 = vsel %vm1968, %v2098, %v1848
      %v2141 = vsel %vm1968, %v2101, %v1850
      %v2143 = vsel %vm1968, %v2104, %v1852
      %v2145 = vsel %vm1968, %v2107, %v1854
      %v2147 = vsel %vm1968, %v2110, %v1856
      %v2149 = vsel %vm1968, %v2113, %v1858
      %v2151 = vsel %vm2005, %v2115, %v1878
      %v2154 = vsel %vm2005, %v2117, %v1880
      %v2157 = vsel %vm2005, %v2119, %v1882
      %v2160 = vsel %vm2005, %v2121, %v1884
      %v2163 = vsel %vm2005, %v2123, %v1886
      %v2166 = vsel %vm2005, %v2125, %v1888
      %v2169 = vsel %vm2005, %v2127, %v1890
      %v2172 = vsel %vm2005, %v2129, %v1892
      %v2175 = vsel %vm2005, %v2131, %v1894
      %v2178 = vsel %vm2005, %v2133, %v1896
      %v2181 = vsel %vm2005, %v2135, %v1898
      %v2184 = vsel %vm2005, %v2137, %v1900
      %v2187 = vsel %vm2005, %v2139, %v1902
      %v2190 = vsel %vm2005, %v2141, %v1904
      %v2193 = vsel %vm2005, %v2143, %v1906
      %v2196 = vsel %vm2005, %v2145, %v1908
      %v2199 = vsel %vm2005, %v2147, %v1910
      %v2202 = vsel %vm2005, %v2149, %v1912
      %v2205 = vlaneseq
      %v2206 = vshrl.u32 %v2205, 7
      %v2207 = vsub.s32 0, %v2206
      %v2208 = vrot.slane %v1237, %v2207
      %v2246 = vunpack.c.l.b16 %v1165
      %v2247 = vunpack.c.l.b16 %v1166
      %v2248 = vunpack.c.l.b16 %v1167
      %v2249 = vunpack.c.l.b16 %v1168
      %v2250 = vunpack.c.l.b16 %v1169
      %v2251 = vunpack.c.l.b16 %v1170
      %v2252 = vunpack.c.l.b16 %v1171
      %v2253 = vunpack.c.l.b16 %v1172
      %v2254 = vunpack.c.l.b16 %v1173
      %v2255 = vunpack.c.l.b16 %v1174
      %v2256 = vunpack.c.l.b16 %v1175
      %v2257 = vunpack.c.l.b16 %v1176
      %v2258 = vunpack.c.l.b16 %v1177
      %v2259 = vunpack.c.l.b16 %v1178
      %v2260 = vunpack.c.l.b16 %v1179
      %v2261 = vunpack.c.l.b16 %v1180
      %v2262 = vunpack.c.l.b16 %v1181
      %v2263 = vunpack.c.l.b16 %v1182
      %v2264 = vunpack.c.l.b16 %v1183
      %v2265 = vunpack.c.l.b16 %v1184
      %v2266 = vunpack.c.l.b16 %v1185
      %v2267 = vunpack.c.l.b16 %v1186
      %v2268 = vunpack.c.l.b16 %v1187
      %v2269 = vunpack.c.l.b16 %v1188
      %v2270 = vunpack.c.l.b16 %v1189
      %v2271 = vunpack.c.l.b16 %v1190
      %v2272 = vunpack.c.l.b16 %v1191
      %v2273 = vunpack.c.l.b16 %v1192
      %v2274 = vunpack.c.l.b16 %v1193
      %v2275 = vunpack.c.l.b16 %v1194
      %v2276 = vunpack.c.l.b16 %v1195
      %v2277 = vunpack.c.l.b16 %v1196
      %v2278 = vunpack.c.l.b16 %v1197
      %v2279 = vunpack.c.l.b16 %v1198
      %v2280 = vunpack.c.l.b16 %v1199
      %v2281 = vunpack.c.l.b16 %v1200
      %v2282 = vpack.c.b16 %v2247, %v2246
      %v2283 = vpack.c.b16 %v2249, %v2248
      %v2284 = vpack.c.b16 %v2251, %v2250
      %v2285 = vpack.c.b16 %v2253, %v2252
      %v2286 = vpack.c.b16 %v2255, %v2254
      %v2287 = vpack.c.b16 %v2257, %v2256
      %v2288 = vpack.c.b16 %v2259, %v2258
      %v2289 = vpack.c.b16 %v2261, %v2260
      %v2290 = vpack.c.b16 %v2263, %v2262
      %v2291 = vpack.c.b16 %v2265, %v2264
      %v2292 = vpack.c.b16 %v2267, %v2266
      %v2293 = vpack.c.b16 %v2269, %v2268
      %v2294 = vpack.c.b16 %v2271, %v2270
      %v2295 = vpack.c.b16 %v2273, %v2272
      %v2296 = vpack.c.b16 %v2275, %v2274
      %v2297 = vpack.c.b16 %v2277, %v2276
      %v2298 = vpack.c.b16 %v2279, %v2278
      %v2299 = vpack.c.b16 %v2281, %v2280
      %v2319 = vsel %vm1913, %v1605, 0
      %v2322 = vsel %vm1913, %v1606, 0
      %v2325 = vsel %vm1913, %v1607, 0
      %v2328 = vsel %vm1913, %v1608, 0
      %v2331 = vsel %vm1913, %v1609, 0
      %v2334 = vsel %vm1913, %v1610, 0
      %v2337 = vsel %vm1913, %v1611, 0
      %v2340 = vsel %vm1913, %v1612, 0
      %v2343 = vsel %vm1913, %v1613, 0
      %v2346 = vsel %vm1913, %v1614, 0
      %v2349 = vsel %vm1913, %v1615, 0
      %v2352 = vsel %vm1913, %v1616, 0
      %v2355 = vsel %vm1913, %v1617, 0
      %v2358 = vsel %vm1913, %v1618, 0
      %v2361 = vsel %vm1913, %v1619, 0
      %v2364 = vsel %vm1913, %v1620, 0
      %v2367 = vsel %vm1913, %v1621, 0
      %v2370 = vsel %vm1913, %v1622, 0
      %2372 = vmatprep.subr.bf16.mxu0 0
      %2373 = vmatpush1.bf16.msra.mxu0 %v2289
      %2374 = vmatprep.subr.bf16.mxu0 0
      %2375 = vmatpush1.bf16.msra.mxu0 %v2288
      %2376 = vmatprep.subr.bf16.mxu0 0
      %2377 = vmatpush1.bf16.msra.mxu0 %v2287
      %2378 = vmatprep.subr.bf16.mxu0 0
      %2379 = vmatpush1.bf16.msra.mxu0 %v2286
      %2380 = vmatprep.subr.bf16.mxu0 0
      %2381 = vmatpush1.bf16.msra.mxu0 %v2285
      %2382 = vmatprep.subr.bf16.mxu0 0
      %2383 = vmatpush1.bf16.msra.mxu0 %v2284
      %2384 = vmatprep.subr.bf16.mxu0 0
      %2385 = vmatpush1.bf16.msra.mxu0 %v2283
      %2386 = vmatprep.subr.bf16.mxu0 0
      %2387 = vmatpush1.bf16.msra.mxu0 %v2282
      %2388 = vmatprep.subr.bf16.mxu0 0
      %2389 = vmatpush2.bf16.msra.mxu0 %v2297
      %2390 = vmatprep.subr.bf16.mxu0 0
      %2391 = vmatpush2.bf16.msra.mxu0 %v2296
      %2392 = vmatprep.subr.bf16.mxu0 0
      %2393 = vmatpush2.bf16.msra.mxu0 %v2295
      %2394 = vmatprep.subr.bf16.mxu0 0
      %2395 = vmatpush2.bf16.msra.mxu0 %v2294
      %2396 = vmatprep.subr.bf16.mxu0 0
      %2397 = vmatpush2.bf16.msra.mxu0 %v2293
      %2398 = vmatprep.subr.bf16.mxu0 0
      %2399 = vmatpush2.bf16.msra.mxu0 %v2292
      %2400 = vmatprep.subr.bf16.mxu0 0
      %2401 = vmatpush2.bf16.msra.mxu0 %v2291
      %2402 = vmatprep.subr.bf16.mxu0 0
      %2403 = vmatpush2.bf16.msra.mxu0 %v2290
      %2404 = vmatprep.mubr.bf16.mxu0 %v2151
      %2405 = vmatmul.mubr.bf16.gmra.mxu0 %v2007
      %v2406 = vpop.f32.mrf.mxu0
      %v2407 = vadd.f32 %v2208, %v2406
      %v2408 = vpop.f32.mrf.mxu0
      %v2409 = vpop.f32.mrf.mxu0
      %v2410 = vadd.f32 %v2208, %v2409
      %v2411 = vpop.f32.mrf.mxu0
      %2412 = vmatprep.mubr.bf16.mxu0 %v2154
      %2413 = vmatmul.mubr.bf16.gmra.mxu0 %v2010
      %v2414 = vpop.f32.mrf.mxu0
      %v2415 = vadd.f32 %v2208, %v2414
      %v2416 = vpop.f32.mrf.mxu0
      %v2417 = vpop.f32.mrf.mxu0
      %v2418 = vadd.f32 %v2208, %v2417
      %v2419 = vpop.f32.mrf.mxu0
      %2420 = vmatprep.mubr.bf16.mxu0 %v2157
      %2421 = vmatmul.mubr.bf16.gmra.mxu0 %v2013
      %v2422 = vpop.f32.mrf.mxu0
      %v2423 = vadd.f32 %v2208, %v2422
      %v2424 = vpop.f32.mrf.mxu0
      %v2425 = vpop.f32.mrf.mxu0
      %v2426 = vadd.f32 %v2208, %v2425
      %v2427 = vpop.f32.mrf.mxu0
      %2428 = vmatprep.mubr.bf16.mxu0 %v2160
      %2429 = vmatmul.mubr.bf16.gmra.mxu0 %v2016
      %v2430 = vpop.f32.mrf.mxu0
      %v2431 = vadd.f32 %v2208, %v2430
      %v2432 = vpop.f32.mrf.mxu0
      %v2433 = vpop.f32.mrf.mxu0
      %v2434 = vadd.f32 %v2208, %v2433
      %v2435 = vpop.f32.mrf.mxu0
      %2436 = vmatprep.mubr.bf16.mxu0 %v2163
      %2437 = vmatmul.mubr.bf16.gmra.mxu0 %v2019
      %v2438 = vpop.f32.mrf.mxu0
      %v2439 = vadd.f32 %v2208, %v2438
      %v2440 = vpop.f32.mrf.mxu0
      %v2441 = vpop.f32.mrf.mxu0
      %v2442 = vadd.f32 %v2208, %v2441
      %v2443 = vpop.f32.mrf.mxu0
      %2444 = vmatprep.mubr.bf16.mxu0 %v2166
      %2445 = vmatmul.mubr.bf16.gmra.mxu0 %v2022
      %v2446 = vpop.f32.mrf.mxu0
      %v2447 = vadd.f32 %v2208, %v2446
      %v2448 = vpop.f32.mrf.mxu0
      %v2449 = vpop.f32.mrf.mxu0
      %v2450 = vadd.f32 %v2208, %v2449
      %v2451 = vpop.f32.mrf.mxu0
      %2452 = vmatprep.mubr.bf16.mxu0 %v2169
      %2453 = vmatmul.mubr.bf16.gmra.mxu0 %v2025
      %v2454 = vpop.f32.mrf.mxu0
      %v2455 = vadd.f32 %v2208, %v2454
      %v2456 = vpop.f32.mrf.mxu0
      %v2457 = vpop.f32.mrf.mxu0
      %v2458 = vadd.f32 %v2208, %v2457
      %v2459 = vpop.f32.mrf.mxu0
      %2460 = vmatprep.mubr.bf16.mxu0 %v2172
      %2461 = vmatmul.mubr.bf16.gmra.mxu0 %v2028
      %v2462 = vpop.f32.mrf.mxu0
      %v2463 = vadd.f32 %v2208, %v2462
      %v2464 = vpop.f32.mrf.mxu0
      %v2465 = vpop.f32.mrf.mxu0
      %v2466 = vadd.f32 %v2208, %v2465
      %v2467 = vpop.f32.mrf.mxu0
      %2468 = vmatprep.mubr.bf16.mxu0 %v2175
      %2469 = vmatmul.mubr.bf16.gmra.mxu0 %v2031
      %v2470 = vpop.f32.mrf.mxu0
      %v2471 = vadd.f32 %v2208, %v2470
      %v2472 = vpop.f32.mrf.mxu0
      %v2473 = vpop.f32.mrf.mxu0
      %v2474 = vadd.f32 %v2208, %v2473
      %v2475 = vpop.f32.mrf.mxu0
      %2476 = vmatprep.mubr.bf16.mxu0 %v2178
      %2477 = vmatmul.mubr.bf16.gmra.mxu0 %v2034
      %v2478 = vpop.f32.mrf.mxu0
      %v2479 = vadd.f32 %v2208, %v2478
      %v2480 = vpop.f32.mrf.mxu0
      %v2481 = vpop.f32.mrf.mxu0
      %v2482 = vadd.f32 %v2208, %v2481
      %v2483 = vpop.f32.mrf.mxu0
      %2484 = vmatprep.mubr.bf16.mxu0 %v2181
      %2485 = vmatmul.mubr.bf16.gmra.mxu0 %v2037
      %v2486 = vpop.f32.mrf.mxu0
      %v2487 = vadd.f32 %v2208, %v2486
      %v2488 = vpop.f32.mrf.mxu0
      %v2489 = vpop.f32.mrf.mxu0
      %v2490 = vadd.f32 %v2208, %v2489
      %v2491 = vpop.f32.mrf.mxu0
      %2492 = vmatprep.mubr.bf16.mxu0 %v2184
      %2493 = vmatmul.mubr.bf16.gmra.mxu0 %v2040
      %v2494 = vpop.f32.mrf.mxu0
      %v2495 = vadd.f32 %v2208, %v2494
      %v2496 = vpop.f32.mrf.mxu0
      %v2497 = vpop.f32.mrf.mxu0
      %v2498 = vadd.f32 %v2208, %v2497
      %v2499 = vpop.f32.mrf.mxu0
      %2500 = vmatprep.mubr.bf16.mxu0 %v2187
      %2501 = vmatmul.mubr.bf16.gmra.mxu0 %v2043
      %v2502 = vpop.f32.mrf.mxu0
      %v2503 = vadd.f32 %v2208, %v2502
      %v2504 = vpop.f32.mrf.mxu0
      %v2505 = vpop.f32.mrf.mxu0
      %v2506 = vadd.f32 %v2208, %v2505
      %v2507 = vpop.f32.mrf.mxu0
      %2508 = vmatprep.mubr.bf16.mxu0 %v2190
      %2509 = vmatmul.mubr.bf16.gmra.mxu0 %v2046
      %v2510 = vpop.f32.mrf.mxu0
      %v2511 = vadd.f32 %v2208, %v2510
      %v2512 = vpop.f32.mrf.mxu0
      %v2513 = vpop.f32.mrf.mxu0
      %v2514 = vadd.f32 %v2208, %v2513
      %v2515 = vpop.f32.mrf.mxu0
      %2516 = vmatprep.mubr.bf16.mxu0 %v2193
      %2517 = vmatmul.mubr.bf16.gmra.mxu0 %v2049
      %v2518 = vpop.f32.mrf.mxu0
      %v2519 = vadd.f32 %v2208, %v2518
      %v2520 = vpop.f32.mrf.mxu0
      %v2521 = vpop.f32.mrf.mxu0
      %v2522 = vadd.f32 %v2208, %v2521
      %v2523 = vpop.f32.mrf.mxu0
      %2524 = vmatprep.mubr.bf16.mxu0 %v2196
      %2525 = vmatmul.mubr.bf16.gmra.mxu0 %v2052
      %v2526 = vpop.f32.mrf.mxu0
      %v2527 = vadd.f32 %v2208, %v2526
      %v2528 = vpop.f32.mrf.mxu0
      %v2529 = vpop.f32.mrf.mxu0
      %v2530 = vadd.f32 %v2208, %v2529
      %v2531 = vpop.f32.mrf.mxu0
      %2532 = vmatprep.mubr.bf16.mxu0 %v2199
      %2533 = vmatmul.mubr.bf16.gmra.mxu0 %v2055
      %v2534 = vpop.f32.mrf.mxu0
      %v2535 = vadd.f32 %v2208, %v2534
      %v2536 = vpop.f32.mrf.mxu0
      %v2537 = vpop.f32.mrf.mxu0
      %v2538 = vadd.f32 %v2208, %v2537
      %v2539 = vpop.f32.mrf.mxu0
      %2540 = vmatprep.mubr.bf16.mxu0 %v2202
      %2541 = vmatmul.mubr.bf16.gmra.mxu0 %v2058
      %v2542 = vpop.f32.mrf.mxu0
      %v2543 = vadd.f32 %v2208, %v2542
      %v2544 = vpop.f32.mrf.mxu0
      %v2545 = vpop.f32.mrf.mxu0
      %v2546 = vadd.f32 %v2208, %v2545
      %v2547 = vpop.f32.mrf.mxu0
      %2548 = vdwg.mxu0
      %2549 = vmatprep.subr.bf16.mxu0 0
      %2550 = vmatpush1.bf16.msra.mxu0 0
      %2551 = vmatprep.subr.bf16.mxu0 0
      %2552 = vmatpush1.bf16.msra.mxu0 0
      %2553 = vmatprep.subr.bf16.mxu0 0
      %2554 = vmatpush1.bf16.msra.mxu0 0
      %2555 = vmatprep.subr.bf16.mxu0 0
      %2556 = vmatpush1.bf16.msra.mxu0 0
      %2557 = vmatprep.subr.bf16.mxu0 0
      %2558 = vmatpush1.bf16.msra.mxu0 0
      %2559 = vmatprep.subr.bf16.mxu0 0
      %2560 = vmatpush1.bf16.msra.mxu0 0
      %2561 = vmatprep.subr.bf16.mxu0 0
      %2562 = vmatpush1.bf16.msra.mxu0 %v2299
      %2563 = vmatprep.subr.bf16.mxu0 0
      %2564 = vmatpush1.bf16.msra.mxu0 %v2298
      %2565 = vmatprep.subr.bf16.mxu0 0
      %2566 = vmatpush2.bf16.msra.mxu0 0
      %2567 = vmatprep.subr.bf16.mxu0 0
      %2568 = vmatpush2.bf16.msra.mxu0 0
      %2569 = vmatprep.subr.bf16.mxu0 0
      %2570 = vmatpush2.bf16.msra.mxu0 0
      %2571 = vmatprep.subr.bf16.mxu0 0
      %2572 = vmatpush2.bf16.msra.mxu0 0
      %2573 = vmatprep.subr.bf16.mxu0 0
      %2574 = vmatpush2.bf16.msra.mxu0 0
      %2575 = vmatprep.subr.bf16.mxu0 0
      %2576 = vmatpush2.bf16.msra.mxu0 0
      %2577 = vmatprep.subr.bf16.mxu0 0
      %2578 = vmatpush2.bf16.msra.mxu0 0
      %2579 = vmatprep.subr.bf16.mxu0 0
      %2580 = vmatpush2.bf16.msra.mxu0 0
      %2581 = vmatprep.mubr.bf16.mxu0 0
      %2582 = vmatmul.mubr.bf16.gmra.mxu0 %v2319
      %v2583 = vpop.f32.mrf.mxu0
      %v2584 = vadd.f32 %v2407, %v2583
      %v2585 = vpop.f32.mrf.mxu0
      %v2586 = vpop.f32.mrf.mxu0
      %v2587 = vadd.f32 %v2410, %v2586
      %v2588 = vpop.f32.mrf.mxu0
      %2589 = vmatprep.mubr.bf16.mxu0 0
      %2590 = vmatmul.mubr.bf16.gmra.mxu0 %v2322
      %v2591 = vpop.f32.mrf.mxu0
      %v2592 = vadd.f32 %v2415, %v2591
      %v2593 = vpop.f32.mrf.mxu0
      %v2594 = vpop.f32.mrf.mxu0
      %v2595 = vadd.f32 %v2418, %v2594
      %v2596 = vpop.f32.mrf.mxu0
      %2597 = vmatprep.mubr.bf16.mxu0 0
      %2598 = vmatmul.mubr.bf16.gmra.mxu0 %v2325
      %v2599 = vpop.f32.mrf.mxu0
      %v2600 = vadd.f32 %v2423, %v2599
      %v2601 = vpop.f32.mrf.mxu0
      %v2602 = vpop.f32.mrf.mxu0
      %v2603 = vadd.f32 %v2426, %v2602
      %v2604 = vpop.f32.mrf.mxu0
      %2605 = vmatprep.mubr.bf16.mxu0 0
      %2606 = vmatmul.mubr.bf16.gmra.mxu0 %v2328
      %v2607 = vpop.f32.mrf.mxu0
      %v2608 = vadd.f32 %v2431, %v2607
      %v2609 = vpop.f32.mrf.mxu0
      %v2610 = vpop.f32.mrf.mxu0
      %v2611 = vadd.f32 %v2434, %v2610
      %v2612 = vpop.f32.mrf.mxu0
      %2613 = vmatprep.mubr.bf16.mxu0 0
      %2614 = vmatmul.mubr.bf16.gmra.mxu0 %v2331
      %v2615 = vpop.f32.mrf.mxu0
      %v2616 = vadd.f32 %v2439, %v2615
      %v2617 = vpop.f32.mrf.mxu0
      %v2618 = vpop.f32.mrf.mxu0
      %v2619 = vadd.f32 %v2442, %v2618
      %v2620 = vpop.f32.mrf.mxu0
      %2621 = vmatprep.mubr.bf16.mxu0 0
      %2622 = vmatmul.mubr.bf16.gmra.mxu0 %v2334
      %v2623 = vpop.f32.mrf.mxu0
      %v2624 = vadd.f32 %v2447, %v2623
      %v2625 = vpop.f32.mrf.mxu0
      %v2626 = vpop.f32.mrf.mxu0
      %v2627 = vadd.f32 %v2450, %v2626
      %v2628 = vpop.f32.mrf.mxu0
      %2629 = vmatprep.mubr.bf16.mxu0 0
      %2630 = vmatmul.mubr.bf16.gmra.mxu0 %v2337
      %v2631 = vpop.f32.mrf.mxu0
      %v2632 = vadd.f32 %v2455, %v2631
      %v2633 = vpop.f32.mrf.mxu0
      %v2634 = vpop.f32.mrf.mxu0
      %v2635 = vadd.f32 %v2458, %v2634
      %v2636 = vpop.f32.mrf.mxu0
      %2637 = vmatprep.mubr.bf16.mxu0 0
      %2638 = vmatmul.mubr.bf16.gmra.mxu0 %v2340
      %v2639 = vpop.f32.mrf.mxu0
      %v2640 = vadd.f32 %v2463, %v2639
      %v2641 = vpop.f32.mrf.mxu0
      %v2642 = vpop.f32.mrf.mxu0
      %v2643 = vadd.f32 %v2466, %v2642
      %v2644 = vpop.f32.mrf.mxu0
      %2645 = vmatprep.mubr.bf16.mxu0 0
      %2646 = vmatmul.mubr.bf16.gmra.mxu0 %v2343
      %v2647 = vpop.f32.mrf.mxu0
      %v2648 = vadd.f32 %v2471, %v2647
      %v2649 = vpop.f32.mrf.mxu0
      %v2650 = vpop.f32.mrf.mxu0
      %v2651 = vadd.f32 %v2474, %v2650
      %v2652 = vpop.f32.mrf.mxu0
      %2653 = vmatprep.mubr.bf16.mxu0 0
      %2654 = vmatmul.mubr.bf16.gmra.mxu0 %v2346
      %v2655 = vpop.f32.mrf.mxu0
      %v2656 = vadd.f32 %v2479, %v2655
      %v2657 = vpop.f32.mrf.mxu0
      %v2658 = vpop.f32.mrf.mxu0
      %v2659 = vadd.f32 %v2482, %v2658
      %v2660 = vpop.f32.mrf.mxu0
      %2661 = vmatprep.mubr.bf16.mxu0 0
      %2662 = vmatmul.mubr.bf16.gmra.mxu0 %v2349
      %v2663 = vpop.f32.mrf.mxu0
      %v2664 = vadd.f32 %v2487, %v2663
      %v2665 = vpop.f32.mrf.mxu0
      %v2666 = vpop.f32.mrf.mxu0
      %v2667 = vadd.f32 %v2490, %v2666
      %v2668 = vpop.f32.mrf.mxu0
      %2669 = vmatprep.mubr.bf16.mxu0 0
      %2670 = vmatmul.mubr.bf16.gmra.mxu0 %v2352
      %v2671 = vpop.f32.mrf.mxu0
      %v2672 = vadd.f32 %v2495, %v2671
      %v2673 = vpop.f32.mrf.mxu0
      %v2674 = vpop.f32.mrf.mxu0
      %v2675 = vadd.f32 %v2498, %v2674
      %v2676 = vpop.f32.mrf.mxu0
      %2677 = vmatprep.mubr.bf16.mxu0 0
      %2678 = vmatmul.mubr.bf16.gmra.mxu0 %v2355
      %v2679 = vpop.f32.mrf.mxu0
      %v2680 = vadd.f32 %v2503, %v2679
      %v2681 = vpop.f32.mrf.mxu0
      %v2682 = vpop.f32.mrf.mxu0
      %v2683 = vadd.f32 %v2506, %v2682
      %v2684 = vpop.f32.mrf.mxu0
      %2685 = vmatprep.mubr.bf16.mxu0 0
      %2686 = vmatmul.mubr.bf16.gmra.mxu0 %v2358
      %v2687 = vpop.f32.mrf.mxu0
      %v2688 = vadd.f32 %v2511, %v2687
      %v2689 = vpop.f32.mrf.mxu0
      %v2690 = vpop.f32.mrf.mxu0
      %v2691 = vadd.f32 %v2514, %v2690
      %v2692 = vpop.f32.mrf.mxu0
      %2693 = vmatprep.mubr.bf16.mxu0 0
      %2694 = vmatmul.mubr.bf16.gmra.mxu0 %v2361
      %v2695 = vpop.f32.mrf.mxu0
      %v2696 = vadd.f32 %v2519, %v2695
      %v2697 = vpop.f32.mrf.mxu0
      %v2698 = vpop.f32.mrf.mxu0
      %v2699 = vadd.f32 %v2522, %v2698
      %v2700 = vpop.f32.mrf.mxu0
      %2701 = vmatprep.mubr.bf16.mxu0 0
      %2702 = vmatmul.mubr.bf16.gmra.mxu0 %v2364
      %v2703 = vpop.f32.mrf.mxu0
      %v2704 = vadd.f32 %v2527, %v2703
      %v2705 = vpop.f32.mrf.mxu0
      %v2706 = vpop.f32.mrf.mxu0
      %v2707 = vadd.f32 %v2530, %v2706
      %v2708 = vpop.f32.mrf.mxu0
      %2709 = vmatprep.mubr.bf16.mxu0 0
      %2710 = vmatmul.mubr.bf16.gmra.mxu0 %v2367
      %v2711 = vpop.f32.mrf.mxu0
      %v2712 = vadd.f32 %v2535, %v2711
      %v2713 = vpop.f32.mrf.mxu0
      %v2714 = vpop.f32.mrf.mxu0
      %v2715 = vadd.f32 %v2538, %v2714
      %v2716 = vpop.f32.mrf.mxu0
      %2717 = vmatprep.mubr.bf16.mxu0 0
      %2718 = vmatmul.mubr.bf16.gmra.mxu0 %v2370
      %v2719 = vpop.f32.mrf.mxu0
      %v2720 = vadd.f32 %v2543, %v2719
      %v2721 = vpop.f32.mrf.mxu0
      %v2722 = vpop.f32.mrf.mxu0
      %v2723 = vadd.f32 %v2546, %v2722
      %v2724 = vpop.f32.mrf.mxu0
      %2725 = vdwg.mxu0
      %v2726 = vmax.f32 %v2584, 0.0
      %v2727 = vmax.f32 %v2587, 0.0
      %v2728 = vmax.f32 %v2592, 0.0
      %v2729 = vmax.f32 %v2595, 0.0
      %v2730 = vmax.f32 %v2600, 0.0
      %v2731 = vmax.f32 %v2603, 0.0
      %v2732 = vmax.f32 %v2608, 0.0
      %v2733 = vmax.f32 %v2611, 0.0
      %v2734 = vmax.f32 %v2616, 0.0
      %v2735 = vmax.f32 %v2619, 0.0
      %v2736 = vmax.f32 %v2624, 0.0
      %v2737 = vmax.f32 %v2627, 0.0
      %v2738 = vmax.f32 %v2632, 0.0
      %v2739 = vmax.f32 %v2635, 0.0
      %v2740 = vmax.f32 %v2640, 0.0
      %v2741 = vmax.f32 %v2643, 0.0
      %v2742 = vmax.f32 %v2648, 0.0
      %v2743 = vmax.f32 %v2651, 0.0
      %v2744 = vmax.f32 %v2656, 0.0
      %v2745 = vmax.f32 %v2659, 0.0
      %v2746 = vmax.f32 %v2664, 0.0
      %v2747 = vmax.f32 %v2667, 0.0
      %v2748 = vmax.f32 %v2672, 0.0
      %v2749 = vmax.f32 %v2675, 0.0
      %v2750 = vmax.f32 %v2680, 0.0
      %v2751 = vmax.f32 %v2683, 0.0
      %v2752 = vmax.f32 %v2688, 0.0
      %v2753 = vmax.f32 %v2691, 0.0
      %v2754 = vmax.f32 %v2696, 0.0
      %v2755 = vmax.f32 %v2699, 0.0
      %v2756 = vmax.f32 %v2704, 0.0
      %v2757 = vmax.f32 %v2707, 0.0
      %v2758 = vmax.f32 %v2712, 0.0
      %v2759 = vmax.f32 %v2715, 0.0
      %v2760 = vmax.f32 %v2720, 0.0
      %v2761 = vmax.f32 %v2723, 0.0
      %v2762 = vsel %vm1129, 1, 0
      %v2763 = vsel %vm1130, 1, 0
      %v2764 = vsel %vm1131, 1, 0
      %v2765 = vsel %vm1132, 1, 0
      %v2766 = vsel %vm1133, 1, 0
      %v2767 = vsel %vm1134, 1, 0
      %v2768 = vsel %vm1135, 1, 0
      %v2769 = vsel %vm1136, 1, 0
      %v2770 = vsel %vm1137, 1, 0
      %v2771 = vsel %vm1138, 1, 0
      %v2772 = vsel %vm1139, 1, 0
      %v2773 = vsel %vm1140, 1, 0
      %v2774 = vsel %vm1141, 1, 0
      %v2775 = vsel %vm1142, 1, 0
      %v2776 = vsel %vm1143, 1, 0
      %v2777 = vsel %vm1144, 1, 0
      %v2778 = vsel %vm1145, 1, 0
      %v2779 = vsel %vm1146, 1, 0
      %v2780 = vsel %vm1147, 1, 0
      %v2781 = vsel %vm1148, 1, 0
      %v2782 = vsel %vm1149, 1, 0
      %v2783 = vsel %vm1150, 1, 0
      %v2784 = vsel %vm1151, 1, 0
      %v2785 = vsel %vm1152, 1, 0
      %v2786 = vsel %vm1153, 1, 0
      %v2787 = vsel %vm1154, 1, 0
      %v2788 = vsel %vm1155, 1, 0
      %v2789 = vsel %vm1156, 1, 0
      %v2790 = vsel %vm1157, 1, 0
      %v2791 = vsel %vm1158, 1, 0
      %v2792 = vsel %vm1159, 1, 0
      %v2793 = vsel %vm1160, 1, 0
      %v2794 = vsel %vm1161, 1, 0
      %v2795 = vsel %vm1162, 1, 0
      %v2796 = vsel %vm1163, 1, 0
      %v2797 = vsel %vm1164, 1, 0
      %vm2798 = vcmp.eq.s32.totalorder %v2762, 1
      %vm2799 = vcmp.eq.s32.totalorder %v2763, 1
      %vm2800 = vcmp.eq.s32.totalorder %v2764, 1
      %vm2801 = vcmp.eq.s32.totalorder %v2765, 1
      %vm2802 = vcmp.eq.s32.totalorder %v2766, 1
      %vm2803 = vcmp.eq.s32.totalorder %v2767, 1
      %vm2804 = vcmp.eq.s32.totalorder %v2768, 1
      %vm2805 = vcmp.eq.s32.totalorder %v2769, 1
      %vm2806 = vcmp.eq.s32.totalorder %v2770, 1
      %vm2807 = vcmp.eq.s32.totalorder %v2771, 1
      %vm2808 = vcmp.eq.s32.totalorder %v2772, 1
      %vm2809 = vcmp.eq.s32.totalorder %v2773, 1
      %vm2810 = vcmp.eq.s32.totalorder %v2774, 1
      %vm2811 = vcmp.eq.s32.totalorder %v2775, 1
      %vm2812 = vcmp.eq.s32.totalorder %v2776, 1
      %vm2813 = vcmp.eq.s32.totalorder %v2777, 1
      %vm2814 = vcmp.eq.s32.totalorder %v2778, 1
      %vm2815 = vcmp.eq.s32.totalorder %v2779, 1
      %vm2816 = vcmp.eq.s32.totalorder %v2780, 1
      %vm2817 = vcmp.eq.s32.totalorder %v2781, 1
      %vm2818 = vcmp.eq.s32.totalorder %v2782, 1
      %vm2819 = vcmp.eq.s32.totalorder %v2783, 1
      %vm2820 = vcmp.eq.s32.totalorder %v2784, 1
      %vm2821 = vcmp.eq.s32.totalorder %v2785, 1
      %vm2822 = vcmp.eq.s32.totalorder %v2786, 1
      %vm2823 = vcmp.eq.s32.totalorder %v2787, 1
      %vm2824 = vcmp.eq.s32.totalorder %v2788, 1
      %vm2825 = vcmp.eq.s32.totalorder %v2789, 1
      %vm2826 = vcmp.eq.s32.totalorder %v2790, 1
      %vm2827 = vcmp.eq.s32.totalorder %v2791, 1
      %vm2828 = vcmp.eq.s32.totalorder %v2792, 1
      %vm2829 = vcmp.eq.s32.totalorder %v2793, 1
      %vm2830 = vcmp.eq.s32.totalorder %v2794, 1
      %vm2831 = vcmp.eq.s32.totalorder %v2795, 1
      %vm2832 = vcmp.eq.s32.totalorder %v2796, 1
      %vm2833 = vcmp.eq.s32.totalorder %v2797, 1
      %v2834 = vsel %vm2798, %v2726, 0.0
      %v2835 = vsel %vm2799, %v2727, 0.0
      %v2836 = vsel %vm2800, %v2728, 0.0
      %v2837 = vsel %vm2801, %v2729, 0.0
      %v2838 = vsel %vm2802, %v2730, 0.0
      %v2839 = vsel %vm2803, %v2731, 0.0
      %v2840 = vsel %vm2804, %v2732, 0.0
      %v2841 = vsel %vm2805, %v2733, 0.0
      %v2842 = vsel %vm2806, %v2734, 0.0
      %v2843 = vsel %vm2807, %v2735, 0.0
      %v2844 = vsel %vm2808, %v2736, 0.0
      %v2845 = vsel %vm2809, %v2737, 0.0
      %v2846 = vsel %vm2810, %v2738, 0.0
      %v2847 = vsel %vm2811, %v2739, 0.0
      %v2848 = vsel %vm2812, %v2740, 0.0
      %v2849 = vsel %vm2813, %v2741, 0.0
      %v2850 = vsel %vm2814, %v2742, 0.0
      %v2851 = vsel %vm2815, %v2743, 0.0
      %v2852 = vsel %vm2816, %v2744, 0.0
      %v2853 = vsel %vm2817, %v2745, 0.0
      %v2854 = vsel %vm2818, %v2746, 0.0
      %v2855 = vsel %vm2819, %v2747, 0.0
      %v2856 = vsel %vm2820, %v2748, 0.0
      %v2857 = vsel %vm2821, %v2749, 0.0
      %v2858 = vsel %vm2822, %v2750, 0.0
      %v2859 = vsel %vm2823, %v2751, 0.0
      %v2860 = vsel %vm2824, %v2752, 0.0
      %v2861 = vsel %vm2825, %v2753, 0.0
      %v2862 = vsel %vm2826, %v2754, 0.0
      %v2863 = vsel %vm2827, %v2755, 0.0
      %v2864 = vsel %vm2828, %v2756, 0.0
      %v2865 = vsel %vm2829, %v2757, 0.0
      %v2866 = vsel %vm2830, %v2758, 0.0
      %v2867 = vsel %vm2831, %v2759, 0.0
      %v2868 = vsel %vm2832, %v2760, 0.0
      %v2869 = vsel %vm2833, %v2761, 0.0
      %v2870 = vpack.c.bf16 %v2835, %v2834
      %v2871 = vpack.c.bf16 %v2837, %v2836
      %v2872 = vpack.c.bf16 %v2839, %v2838
      %v2873 = vpack.c.bf16 %v2841, %v2840
      %v2874 = vpack.c.bf16 %v2843, %v2842
      %v2875 = vpack.c.bf16 %v2845, %v2844
      %v2876 = vpack.c.bf16 %v2847, %v2846
      %v2877 = vpack.c.bf16 %v2849, %v2848
      %v2878 = vpack.c.bf16 %v2851, %v2850
      %v2879 = vpack.c.bf16 %v2853, %v2852
      %v2880 = vpack.c.bf16 %v2855, %v2854
      %v2881 = vpack.c.bf16 %v2857, %v2856
      %v2882 = vpack.c.bf16 %v2859, %v2858
      %v2883 = vpack.c.bf16 %v2861, %v2860
      %v2884 = vpack.c.bf16 %v2863, %v2862
      %v2885 = vpack.c.bf16 %v2865, %v2864
      %v2886 = vpack.c.bf16 %v2867, %v2866
      %v2887 = vpack.c.bf16 %v2869, %v2868
      %v2906 = vunpack.c.l.b16 %v2870
      %v2907 = vunpack.c.h.b16 %v2870
      %v2908 = vunpack.c.l.b16 %v2871
      %v2909 = vunpack.c.h.b16 %v2871
      %v2910 = vunpack.c.l.b16 %v2872
      %v2911 = vunpack.c.h.b16 %v2872
      %v2912 = vunpack.c.l.b16 %v2873
      %v2913 = vunpack.c.h.b16 %v2873
      %v2914 = vunpack.c.l.b16 %v2874
      %v2915 = vunpack.c.h.b16 %v2874
      %v2916 = vunpack.c.l.b16 %v2875
      %v2917 = vunpack.c.h.b16 %v2875
      %v2918 = vunpack.c.l.b16 %v2876
      %v2919 = vunpack.c.h.b16 %v2876
      %v2920 = vunpack.c.l.b16 %v2877
      %v2921 = vunpack.c.h.b16 %v2877
      %v2922 = vunpack.c.l.b16 %v2878
      %v2923 = vunpack.c.h.b16 %v2878
      %v2924 = vunpack.c.l.b16 %v2879
      %v2925 = vunpack.c.h.b16 %v2879
      %v2926 = vunpack.c.l.b16 %v2880
      %v2927 = vunpack.c.h.b16 %v2880
      %v2928 = vunpack.c.l.b16 %v2881
      %v2929 = vunpack.c.h.b16 %v2881
      %v2930 = vunpack.c.l.b16 %v2882
      %v2931 = vunpack.c.h.b16 %v2882
      %v2932 = vunpack.c.l.b16 %v2883
      %v2933 = vunpack.c.h.b16 %v2883
      %v2934 = vunpack.c.l.b16 %v2884
      %v2935 = vunpack.c.h.b16 %v2884
      %v2936 = vunpack.c.l.b16 %v2885
      %v2937 = vunpack.c.h.b16 %v2885
      %v2938 = vunpack.c.l.b16 %v2886
      %v2939 = vunpack.c.h.b16 %v2886
      %v2940 = vunpack.c.l.b16 %v2887
      %v2941 = vunpack.c.h.b16 %v2887
      %v2942 = vpack.c.b16 %v2906, %v2906
      %v2943 = vpack.c.b16 %v2907, %v2907
      %v2944 = vpack.c.b16 %v2908, %v2908
      %v2945 = vpack.c.b16 %v2909, %v2909
      %v2946 = vpack.c.b16 %v2910, %v2910
      %v2947 = vpack.c.b16 %v2911, %v2911
      %v2948 = vpack.c.b16 %v2912, %v2912
      %v2949 = vpack.c.b16 %v2913, %v2913
      %v2950 = vpack.c.b16 %v2914, %v2914
      %v2951 = vpack.c.b16 %v2915, %v2915
      %v2952 = vpack.c.b16 %v2916, %v2916
      %v2953 = vpack.c.b16 %v2917, %v2917
      %v2954 = vpack.c.b16 %v2918, %v2918
      %v2955 = vpack.c.b16 %v2919, %v2919
      %v2956 = vpack.c.b16 %v2920, %v2920
      %v2957 = vpack.c.b16 %v2921, %v2921
      %v2958 = vpack.c.b16 %v2922, %v2922
      %v2959 = vpack.c.b16 %v2923, %v2923
      %v2960 = vpack.c.b16 %v2924, %v2924
      %v2961 = vpack.c.b16 %v2925, %v2925
      %v2962 = vpack.c.b16 %v2926, %v2926
      %v2963 = vpack.c.b16 %v2927, %v2927
      %v2964 = vpack.c.b16 %v2928, %v2928
      %v2965 = vpack.c.b16 %v2929, %v2929
      %v2966 = vpack.c.b16 %v2930, %v2930
      %v2967 = vpack.c.b16 %v2931, %v2931
      %v2968 = vpack.c.b16 %v2932, %v2932
      %v2969 = vpack.c.b16 %v2933, %v2933
      %v2970 = vpack.c.b16 %v2934, %v2934
      %v2971 = vpack.c.b16 %v2935, %v2935
      %v2972 = vpack.c.b16 %v2936, %v2936
      %v2973 = vpack.c.b16 %v2937, %v2937
      %v2974 = vpack.c.b16 %v2938, %v2938
      %v2975 = vpack.c.b16 %v2939, %v2939
      %v2976 = vpack.c.b16 %v2940, %v2940
      %v2977 = vpack.c.b16 %v2941, %v2941
      %vm2978 = vcmask 1040384
      %vm2979 = vcmask 1044484
      %vm2980 = vmor %vm2978, %vm2979
      %v2981 = vrot.slane %v2942, 7
      %v2982 = vrot.slane %v2981, 4
      %v2983 = vrot.slane %v2943, 7
      %v2984 = vsel %vm2980, %v2982, %v2983
      %v2985 = vrot.slane %v2983, 4
      %v2986 = vrot.slane %v2944, 7
      %v2987 = vsel %vm2980, %v2985, %v2986
      %v2988 = vrot.slane %v2986, 4
      %v2989 = vrot.slane %v2945, 7
      %v2990 = vsel %vm2980, %v2988, %v2989
      %v2991 = vrot.slane %v2989, 4
      %v2992 = vrot.slane %v2946, 7
      %v2993 = vsel %vm2980, %v2991, %v2992
      %v2994 = vrot.slane %v2992, 4
      %v2995 = vrot.slane %v2947, 7
      %v2996 = vsel %vm2980, %v2994, %v2995
      %v2997 = vrot.slane %v2995, 4
      %v2998 = vrot.slane %v2948, 7
      %v2999 = vsel %vm2980, %v2997, %v2998
      %v3000 = vrot.slane %v2998, 4
      %v3001 = vrot.slane %v2949, 7
      %v3002 = vsel %vm2980, %v3000, %v3001
      %v3003 = vrot.slane %v3001, 4
      %v3004 = vrot.slane %v2950, 7
      %v3005 = vsel %vm2980, %v3003, %v3004
      %v3006 = vrot.slane %v3004, 4
      %v3007 = vrot.slane %v2951, 7
      %v3008 = vsel %vm2980, %v3006, %v3007
      %v3009 = vrot.slane %v3007, 4
      %v3010 = vrot.slane %v2952, 7
      %v3011 = vsel %vm2980, %v3009, %v3010
      %v3012 = vrot.slane %v3010, 4
      %v3013 = vrot.slane %v2953, 7
      %v3014 = vsel %vm2980, %v3012, %v3013
      %v3015 = vrot.slane %v3013, 4
      %v3016 = vrot.slane %v2954, 7
      %v3017 = vsel %vm2980, %v3015, %v3016
      %v3018 = vrot.slane %v3016, 4
      %v3019 = vrot.slane %v2955, 7
      %v3020 = vsel %vm2980, %v3018, %v3019
      %v3021 = vrot.slane %v3019, 4
      %v3022 = vrot.slane %v2956, 7
      %v3023 = vsel %vm2980, %v3021, %v3022
      %v3024 = vrot.slane %v3022, 4
      %v3025 = vrot.slane %v2957, 7
      %v3026 = vsel %vm2980, %v3024, %v3025
      %v3027 = vrot.slane %v3025, 4
      %v3028 = vrot.slane %v2958, 7
      %v3029 = vsel %vm2980, %v3027, %v3028
      %v3030 = vrot.slane %v3028, 4
      %v3031 = vrot.slane %v2959, 7
      %v3032 = vsel %vm2980, %v3030, %v3031
      %v3033 = vrot.slane %v3031, 4
      %v3034 = vrot.slane %v2960, 7
      %v3035 = vsel %vm2980, %v3033, %v3034
      %v3036 = vrot.slane %v3034, 4
      %v3037 = vrot.slane %v2961, 7
      %v3038 = vsel %vm2980, %v3036, %v3037
      %v3039 = vrot.slane %v3037, 4
      %v3040 = vrot.slane %v2962, 7
      %v3041 = vsel %vm2980, %v3039, %v3040
      %v3042 = vrot.slane %v3040, 4
      %v3043 = vrot.slane %v2963, 7
      %v3044 = vsel %vm2980, %v3042, %v3043
      %v3045 = vrot.slane %v3043, 4
      %v3046 = vrot.slane %v2964, 7
      %v3047 = vsel %vm2980, %v3045, %v3046
      %v3048 = vrot.slane %v3046, 4
      %v3049 = vrot.slane %v2965, 7
      %v3050 = vsel %vm2980, %v3048, %v3049
      %v3051 = vrot.slane %v3049, 4
      %v3052 = vrot.slane %v2966, 7
      %v3053 = vsel %vm2980, %v3051, %v3052
      %v3054 = vrot.slane %v3052, 4
      %v3055 = vrot.slane %v2967, 7
      %v3056 = vsel %vm2980, %v3054, %v3055
      %v3057 = vrot.slane %v3055, 4
      %v3058 = vrot.slane %v2968, 7
      %v3059 = vsel %vm2980, %v3057, %v3058
      %v3060 = vrot.slane %v3058, 4
      %v3061 = vrot.slane %v2969, 7
      %v3062 = vsel %vm2980, %v3060, %v3061
      %v3063 = vrot.slane %v3061, 4
      %v3064 = vrot.slane %v2970, 7
      %v3065 = vsel %vm2980, %v3063, %v3064
      %v3066 = vrot.slane %v3064, 4
      %v3067 = vrot.slane %v2971, 7
      %v3068 = vsel %vm2980, %v3066, %v3067
      %v3069 = vrot.slane %v3067, 4
      %v3070 = vrot.slane %v2972, 7
      %v3071 = vsel %vm2980, %v3069, %v3070
      %v3072 = vrot.slane %v3070, 4
      %v3073 = vrot.slane %v2973, 7
      %v3074 = vsel %vm2980, %v3072, %v3073
      %v3075 = vrot.slane %v3073, 4
      %v3076 = vrot.slane %v2974, 7
      %v3077 = vsel %vm2980, %v3075, %v3076
      %v3078 = vrot.slane %v3076, 4
      %v3079 = vrot.slane %v2975, 7
      %v3080 = vsel %vm2980, %v3078, %v3079
      %v3081 = vrot.slane %v3079, 4
      %v3082 = vrot.slane %v2976, 7
      %v3083 = vsel %vm2980, %v3081, %v3082
      %v3084 = vrot.slane %v3082, 4
      %v3085 = vrot.slane %v2977, 7
      %v3086 = vsel %vm2980, %v3084, %v3085
      %v3087 = vrot.slane %v3085, 4
      %vm3125 = vcmask 257025
      %3126 = vst.msk [vmem:[#allocation3 + $0xc] sm:$0xe] %vm3125, %v2981
      %vm3127 = vcmask 257024
      %3128 = vst.msk [vmem:[#allocation3 + $0x10] sm:$0xf] %vm3127, %v2984
      %3129 = vst.msk [vmem:[#allocation3 + $0x14] sm:$0xf] %vm3127, %v2987
      %3130 = vst.msk [vmem:[#allocation3 + $0x18] sm:$0xf] %vm3127, %v2990
      %3131 = vst.msk [vmem:[#allocation3 + $0x1c] sm:$0xf] %vm3127, %v2993
      %3132 = vst.msk [vmem:[#allocation3 + $0x20] sm:$0xf] %vm3127, %v2996
      %3133 = vst.msk [vmem:[#allocation3 + $0x24] sm:$0xf] %vm3127, %v2999
      %3134 = vst.msk [vmem:[#allocation3 + $0x28] sm:$0xf] %vm3127, %v3002
      %3135 = vst.msk [vmem:[#allocation3 + $0x2c] sm:$0xf] %vm3127, %v3005
      %3136 = vst.msk [vmem:[#allocation3 + $0x30] sm:$0xf] %vm3127, %v3008
      %3137 = vst.msk [vmem:[#allocation3 + $0x34] sm:$0xf] %vm3127, %v3011
      %3138 = vst.msk [vmem:[#allocation3 + $0x38] sm:$0xf] %vm3127, %v3014
      %3139 = vst.msk [vmem:[#allocation3 + $0x3c] sm:$0xf] %vm3127, %v3017
      %3140 = vst.msk [vmem:[#allocation3 + $0x40] sm:$0xf] %vm3127, %v3020
      %3141 = vst.msk [vmem:[#allocation3 + $0x44] sm:$0xf] %vm3127, %v3023
      %3142 = vst.msk [vmem:[#allocation3 + $0x48] sm:$0xf] %vm3127, %v3026
      %3143 = vst.msk [vmem:[#allocation3 + $0x4c] sm:$0xf] %vm3127, %v3029
      %3144 = vst.msk [vmem:[#allocation3 + $0x50] sm:$0xf] %vm3127, %v3032
      %3145 = vst.msk [vmem:[#allocation3 + $0x54] sm:$0xf] %vm3127, %v3035
      %3146 = vst.msk [vmem:[#allocation3 + $0x58] sm:$0xf] %vm3127, %v3038
      %3147 = vst.msk [vmem:[#allocation3 + $0x5c] sm:$0xf] %vm3127, %v3041
      %3148 = vst.msk [vmem:[#allocation3 + $0x60] sm:$0xf] %vm3127, %v3044
      %3149 = vst.msk [vmem:[#allocation3 + $0x64] sm:$0xf] %vm3127, %v3047
      %3150 = vst.msk [vmem:[#allocation3 + $0x68] sm:$0xf] %vm3127, %v3050
      %3151 = vst.msk [vmem:[#allocation3 + $0x6c] sm:$0xf] %vm3127, %v3053
      %3152 = vst.msk [vmem:[#allocation3 + $0x70] sm:$0xf] %vm3127, %v3056
      %3153 = vst.msk [vmem:[#allocation3 + $0x74] sm:$0xf] %vm3127, %v3059
      %3154 = vst.msk [vmem:[#allocation3 + $0x78] sm:$0xf] %vm3127, %v3062
      %3155 = vst.msk [vmem:[#allocation3 + $0x7c] sm:$0xf] %vm3127, %v3065
      %3156 = vst.msk [vmem:[#allocation3 + $0x80] sm:$0xf] %vm3127, %v3068
      %3157 = vst.msk [vmem:[#allocation3 + $0x84] sm:$0xf] %vm3127, %v3071
      %3158 = vst.msk [vmem:[#allocation3 + $0x88] sm:$0xf] %vm3127, %v3074
      %3159 = vst.msk [vmem:[#allocation3 + $0x8c] sm:$0xf] %vm3127, %v3077
      %3160 = vst.msk [vmem:[#allocation3 + $0x90] sm:$0xf] %vm3127, %v3080
      %3161 = vst.msk [vmem:[#allocation3 + $0x94] sm:$0xf] %vm3127, %v3083
      %3162 = vst.msk [vmem:[#allocation3 + $0x98] sm:$0xf] %vm3127, %v3086
      %vm3163 = vcmask 253952
      %3164 = vst.msk [vmem:[#allocation3 + $0x9c] sm:$0x1] %vm3163, %v3087
      %v3165 = vld [vmem:[#allocation3] sm:$0x8]
      %v3166 = vld [vmem:[#allocation3 + $0x4] sm:$0xf]
      %v3167 = vld [vmem:[#allocation3 + $0x8] sm:$0xf]
      %v3168 = vld [vmem:[#allocation3 + $0xc] sm:$0xf]
      %v3169 = vld [vmem:[#allocation3 + $0x10] sm:$0xf]
      %v3170 = vld [vmem:[#allocation3 + $0x14] sm:$0xf]
      %v3171 = vld [vmem:[#allocation3 + $0x18] sm:$0xf]
      %v3172 = vld [vmem:[#allocation3 + $0x1c] sm:$0xf]
      %v3173 = vld [vmem:[#allocation3 + $0x20] sm:$0xf]
      %v3174 = vld [vmem:[#allocation3 + $0x24] sm:$0xf]
      %v3175 = vld [vmem:[#allocation3 + $0x28] sm:$0xf]
      %v3176 = vld [vmem:[#allocation3 + $0x2c] sm:$0xf]
      %v3177 = vld [vmem:[#allocation3 + $0x30] sm:$0xf]
      %v3178 = vld [vmem:[#allocation3 + $0x34] sm:$0xf]
      %v3179 = vld [vmem:[#allocation3 + $0x38] sm:$0xf]
      %v3180 = vld [vmem:[#allocation3 + $0x3c] sm:$0xf]
      %v3181 = vld [vmem:[#allocation3 + $0x40] sm:$0xf]
      %v3182 = vld [vmem:[#allocation3 + $0x44] sm:$0xf]
      %v3183 = vld [vmem:[#allocation3 + $0x48] sm:$0xf]
      %v3184 = vld [vmem:[#allocation3 + $0x4c] sm:$0xf]
      %v3185 = vld [vmem:[#allocation3 + $0x50] sm:$0xf]
      %v3186 = vld [vmem:[#allocation3 + $0x54] sm:$0xf]
      %v3187 = vld [vmem:[#allocation3 + $0x58] sm:$0xf]
      %v3188 = vld [vmem:[#allocation3 + $0x5c] sm:$0xf]
      %v3189 = vld [vmem:[#allocation3 + $0x60] sm:$0xf]
      %v3190 = vld [vmem:[#allocation3 + $0x64] sm:$0xf]
      %v3191 = vld [vmem:[#allocation3 + $0x68] sm:$0xf]
      %v3192 = vld [vmem:[#allocation3 + $0x6c] sm:$0xf]
      %v3193 = vld [vmem:[#allocation3 + $0x70] sm:$0xf]
      %v3194 = vld [vmem:[#allocation3 + $0x74] sm:$0xf]
      %v3195 = vld [vmem:[#allocation3 + $0x78] sm:$0xf]
      %v3196 = vld [vmem:[#allocation3 + $0x7c] sm:$0xf]
      %v3197 = vld [vmem:[#allocation3 + $0x80] sm:$0xf]
      %v3198 = vld [vmem:[#allocation3 + $0x84] sm:$0xf]
      %v3199 = vld [vmem:[#allocation3 + $0x88] sm:$0xf]
      %v3200 = vld [vmem:[#allocation3 + $0x8c] sm:$0xf]
      %v3201 = vld [vmem:[#allocation3 + $0x90] sm:$0xf]
      %v3202 = vld [vmem:[#allocation3 + $0x94] sm:$0x1]
      %v3203 = vld [vmem:[#allocation3 + $0x94] sm:$0xf]
      %v3204 = vld [vmem:[#allocation3 + $0x98] sm:$0xf]
      %v3205 = vld [vmem:[#allocation3 + $0x9c] sm:$0x1]
      %v3206 = vld [vmem:[#allocation3 + $0xc] sm:$0xe]
      %v3207 = vld [vmem:[#allocation3 + $0x9c] sm:$0x3]
      %v3208 = vld [vmem:[#allocation3 + $0x14] sm:$0xe]
      %v3209 = vld [vmem:[#allocation3 + $0x9c] sm:$0xf]
      %v3210 = vld [vmem:[#allocation3 + $0xa0] sm:$0xf]
      %v3211 = vld [vmem:[#allocation3 + $0xa4] sm:$0x3]
      %v3212 = vld [vmem:[#allocation3 + $0x14] sm:$0xc]
      %v3213 = vld [vmem:[#allocation3 + $0xa4] sm:$0x7]
      %v3251 = vunpack.c.l.b16 %v3165
      %v3252 = vunpack.c.l.b16 %v3166
      %v3253 = vunpack.c.l.b16 %v3167
      %v3254 = vunpack.c.l.b16 %v3168
      %v3255 = vunpack.c.l.b16 %v3169
      %v3256 = vunpack.c.l.b16 %v3170
      %v3257 = vunpack.c.l.b16 %v3171
      %v3258 = vunpack.c.l.b16 %v3172
      %v3259 = vunpack.c.l.b16 %v3173
      %v3260 = vunpack.c.l.b16 %v3174
      %v3261 = vunpack.c.l.b16 %v3175
      %v3262 = vunpack.c.l.b16 %v3176
      %v3263 = vunpack.c.l.b16 %v3177
      %v3264 = vunpack.c.l.b16 %v3178
      %v3265 = vunpack.c.l.b16 %v3179
      %v3266 = vunpack.c.l.b16 %v3180
      %v3267 = vunpack.c.l.b16 %v3181
      %v3268 = vunpack.c.l.b16 %v3182
      %v3269 = vunpack.c.l.b16 %v3183
      %v3270 = vunpack.c.l.b16 %v3184
      %v3271 = vunpack.c.l.b16 %v3185
      %v3272 = vunpack.c.l.b16 %v3186
      %v3273 = vunpack.c.l.b16 %v3187
      %v3274 = vunpack.c.l.b16 %v3188
      %v3275 = vunpack.c.l.b16 %v3189
      %v3276 = vunpack.c.l.b16 %v3190
      %v3277 = vunpack.c.l.b16 %v3191
      %v3278 = vunpack.c.l.b16 %v3192
      %v3279 = vunpack.c.l.b16 %v3193
      %v3280 = vunpack.c.l.b16 %v3194
      %v3281 = vunpack.c.l.b16 %v3195
      %v3282 = vunpack.c.l.b16 %v3196
      %v3283 = vunpack.c.l.b16 %v3197
      %v3284 = vunpack.c.l.b16 %v3198
      %v3285 = vunpack.c.l.b16 %v3199
      %v3286 = vunpack.c.l.b16 %v3200
      %v3287 = vunpack.c.l.b16 %v3201
      %v3288 = vpack.c.b16 %v3252, %v3251
      %v3289 = vpack.c.b16 %v3254, %v3253
      %v3290 = vpack.c.b16 %v3256, %v3255
      %v3291 = vpack.c.b16 %v3258, %v3257
      %v3292 = vpack.c.b16 %v3260, %v3259
      %v3293 = vpack.c.b16 %v3262, %v3261
      %v3294 = vpack.c.b16 %v3264, %v3263
      %v3295 = vpack.c.b16 %v3266, %v3265
      %v3296 = vpack.c.b16 %v3268, %v3267
      %v3297 = vpack.c.b16 %v3270, %v3269
      %v3298 = vpack.c.b16 %v3272, %v3271
      %v3299 = vpack.c.b16 %v3274, %v3273
      %v3300 = vpack.c.b16 %v3276, %v3275
      %v3301 = vpack.c.b16 %v3278, %v3277
      %v3302 = vpack.c.b16 %v3280, %v3279
      %v3303 = vpack.c.b16 %v3282, %v3281
      %v3304 = vpack.c.b16 %v3284, %v3283
      %v3305 = vpack.c.b16 %v3286, %v3285
      %v3306 = vpack.c.b16 %v3287, %v3287
      %v3307 = vpack.c.b16 %v3253, %v3252
      %v3308 = vpack.c.b16 %v3255, %v3254
      %v3309 = vpack.c.b16 %v3257, %v3256
      %v3310 = vpack.c.b16 %v3259, %v3258
      %v3311 = vpack.c.b16 %v3261, %v3260
      %v3312 = vpack.c.b16 %v3263, %v3262
      %v3313 = vpack.c.b16 %v3265, %v3264
      %v3314 = vpack.c.b16 %v3267, %v3266
      %v3315 = vpack.c.b16 %v3269, %v3268
      %v3316 = vpack.c.b16 %v3271, %v3270
      %v3317 = vpack.c.b16 %v3273, %v3272
      %v3318 = vpack.c.b16 %v3275, %v3274
      %v3319 = vpack.c.b16 %v3277, %v3276
      %v3320 = vpack.c.b16 %v3279, %v3278
      %v3321 = vpack.c.b16 %v3281, %v3280
      %v3322 = vpack.c.b16 %v3283, %v3282
      %v3323 = vpack.c.b16 %v3285, %v3284
      %v3324 = vpack.c.b16 %v3287, %v3286
      %vm3325 = vsmask.f32 3328
      %v3327 = vshrl.u32 %v3307, 16
      %v3329 = vrot.slane %v3327, 4
      %v3330 = vshll.u32 %v3307, 16
      %v3332 = vrot.slane %v3330, 5
      %v3333 = vor.u32 %v3329, %v3332
      %v3335 = vshrl.u32 %v3308, 16
      %v3337 = vrot.slane %v3335, 4
      %v3338 = vshll.u32 %v3308, 16
      %v3340 = vrot.slane %v3338, 5
      %v3341 = vor.u32 %v3337, %v3340
      %v3342 = vsel %vm3325, %v3333, %v3341
      %v3344 = vshrl.u32 %v3309, 16
      %v3346 = vrot.slane %v3344, 4
      %v3347 = vshll.u32 %v3309, 16
      %v3349 = vrot.slane %v3347, 5
      %v3350 = vor.u32 %v3346, %v3349
      %v3351 = vsel %vm3325, %v3341, %v3350
      %v3353 = vshrl.u32 %v3310, 16
      %v3355 = vrot.slane %v3353, 4
      %v3356 = vshll.u32 %v3310, 16
      %v3358 = vrot.slane %v3356, 5
      %v3359 = vor.u32 %v3355, %v3358
      %v3360 = vsel %vm3325, %v3350, %v3359
      %v3362 = vshrl.u32 %v3311, 16
      %v3364 = vrot.slane %v3362, 4
      %v3365 = vshll.u32 %v3311, 16
      %v3367 = vrot.slane %v3365, 5
      %v3368 = vor.u32 %v3364, %v3367
      %v3369 = vsel %vm3325, %v3359, %v3368
      %v3371 = vshrl.u32 %v3312, 16
      %v3373 = vrot.slane %v3371, 4
      %v3374 = vshll.u32 %v3312, 16
      %v3376 = vrot.slane %v3374, 5
      %v3377 = vor.u32 %v3373, %v3376
      %v3378 = vsel %vm3325, %v3368, %v3377
      %v3380 = vshrl.u32 %v3313, 16
      %v3382 = vrot.slane %v3380, 4
      %v3383 = vshll.u32 %v3313, 16
      %v3385 = vrot.slane %v3383, 5
      %v3386 = vor.u32 %v3382, %v3385
      %v3387 = vsel %vm3325, %v3377, %v3386
      %v3389 = vshrl.u32 %v3314, 16
      %v3391 = vrot.slane %v3389, 4
      %v3392 = vshll.u32 %v3314, 16
      %v3394 = vrot.slane %v3392, 5
      %v3395 = vor.u32 %v3391, %v3394
      %v3396 = vsel %vm3325, %v3386, %v3395
      %v3398 = vshrl.u32 %v3315, 16
      %v3400 = vrot.slane %v3398, 4
      %v3401 = vshll.u32 %v3315, 16
      %v3403 = vrot.slane %v3401, 5
      %v3404 = vor.u32 %v3400, %v3403
      %v3405 = vsel %vm3325, %v3395, %v3404
      %v3407 = vshrl.u32 %v3316, 16
      %v3409 = vrot.slane %v3407, 4
      %v3410 = vshll.u32 %v3316, 16
      %v3412 = vrot.slane %v3410, 5
      %v3413 = vor.u32 %v3409, %v3412
      %v3414 = vsel %vm3325, %v3404, %v3413
      %v3416 = vshrl.u32 %v3317, 16
      %v3418 = vrot.slane %v3416, 4
      %v3419 = vshll.u32 %v3317, 16
      %v3421 = vrot.slane %v3419, 5
      %v3422 = vor.u32 %v3418, %v3421
      %v3423 = vsel %vm3325, %v3413, %v3422
      %v3425 = vshrl.u32 %v3318, 16
      %v3427 = vrot.slane %v3425, 4
      %v3428 = vshll.u32 %v3318, 16
      %v3430 = vrot.slane %v3428, 5
      %v3431 = vor.u32 %v3427, %v3430
      %v3432 = vsel %vm3325, %v3422, %v3431
      %v3434 = vshrl.u32 %v3319, 16
      %v3436 = vrot.slane %v3434, 4
      %v3437 = vshll.u32 %v3319, 16
      %v3439 = vrot.slane %v3437, 5
      %v3440 = vor.u32 %v3436, %v3439
      %v3441 = vsel %vm3325, %v3431, %v3440
      %v3443 = vshrl.u32 %v3320, 16
      %v3445 = vrot.slane %v3443, 4
      %v3446 = vshll.u32 %v3320, 16
      %v3448 = vrot.slane %v3446, 5
      %v3449 = vor.u32 %v3445, %v3448
      %v3450 = vsel %vm3325, %v3440, %v3449
      %v3452 = vshrl.u32 %v3321, 16
      %v3454 = vrot.slane %v3452, 4
      %v3455 = vshll.u32 %v3321, 16
      %v3457 = vrot.slane %v3455, 5
      %v3458 = vor.u32 %v3454, %v3457
      %v3459 = vsel %vm3325, %v3449, %v3458
      %v3461 = vshrl.u32 %v3322, 16
      %v3463 = vrot.slane %v3461, 4
      %v3464 = vshll.u32 %v3322, 16
      %v3466 = vrot.slane %v3464, 5
      %v3467 = vor.u32 %v3463, %v3466
      %v3468 = vsel %vm3325, %v3458, %v3467
      %v3470 = vshrl.u32 %v3323, 16
      %v3472 = vrot.slane %v3470, 4
      %v3473 = vshll.u32 %v3323, 16
      %v3475 = vrot.slane %v3473, 5
      %v3476 = vor.u32 %v3472, %v3475
      %v3477 = vsel %vm3325, %v3467, %v3476
      %v3479 = vshrl.u32 %v3324, 16
      %v3481 = vrot.slane %v3479, 4
      %v3482 = vshll.u32 %v3324, 16
      %v3484 = vrot.slane %v3482, 5
      %v3485 = vor.u32 %v3481, %v3484
      %v3486 = vsel %vm3325, %v3476, %v3485
      %3487 = vrot.lane.b32.xlu0 %v3333, 32
      %v3488 = vpop.permute.xlu0 %3487
      %3489 = vrot.lane.b32.xlu0 %v3342, 32
      %v3490 = vpop.permute.xlu0 %3489
      %3491 = vrot.lane.b32.xlu0 %v3351, 32
      %v3492 = vpop.permute.xlu0 %3491
      %3493 = vrot.lane.b32.xlu0 %v3360, 32
      %v3494 = vpop.permute.xlu0 %3493
      %3495 = vrot.lane.b32.xlu0 %v3369, 32
      %v3496 = vpop.permute.xlu0 %3495
      %3497 = vrot.lane.b32.xlu0 %v3378, 32
      %v3498 = vpop.permute.xlu0 %3497
      %3499 = vrot.lane.b32.xlu0 %v3387, 32
      %v3500 = vpop.permute.xlu0 %3499
      %3501 = vrot.lane.b32.xlu0 %v3396, 32
      %v3502 = vpop.permute.xlu0 %3501
      %3503 = vrot.lane.b32.xlu0 %v3405, 32
      %v3504 = vpop.permute.xlu0 %3503
      %3505 = vrot.lane.b32.xlu0 %v3414, 32
      %v3506 = vpop.permute.xlu0 %3505
      %3507 = vrot.lane.b32.xlu0 %v3423, 32
      %v3508 = vpop.permute.xlu0 %3507
      %3509 = vrot.lane.b32.xlu0 %v3432, 32
      %v3510 = vpop.permute.xlu0 %3509
      %3511 = vrot.lane.b32.xlu0 %v3441, 32
      %v3512 = vpop.permute.xlu0 %3511
      %3513 = vrot.lane.b32.xlu0 %v3450, 32
      %v3514 = vpop.permute.xlu0 %3513
      %3515 = vrot.lane.b32.xlu0 %v3459, 32
      %v3516 = vpop.permute.xlu0 %3515
      %3517 = vrot.lane.b32.xlu0 %v3468, 32
      %v3518 = vpop.permute.xlu0 %3517
      %3519 = vrot.lane.b32.xlu0 %v3477, 32
      %v3520 = vpop.permute.xlu0 %3519
      %3521 = vrot.lane.b32.xlu0 %v3486, 32
      %v3522 = vpop.permute.xlu0 %3521
      %3523 = vrot.lane.b32.xlu0 %v3485, 32
      %v3524 = vpop.permute.xlu0 %3523
      %v3526 = vunpack.c.l.b16 %v3202
      %v3527 = vpack.c.b16 %v3526, %v3526
      %vm3528 = vcmask 1042432
      %v3529 = vrot.slane %v3307, 5
      %v3530 = vrot.slane %v3308, 5
      %v3531 = vsel %vm3528, %v3529, %v3530
      %v3532 = vrot.slane %v3309, 5
      %v3533 = vsel %vm3528, %v3530, %v3532
      %v3534 = vrot.slane %v3310, 5
      %v3535 = vsel %vm3528, %v3532, %v3534
      %v3536 = vrot.slane %v3311, 5
      %v3537 = vsel %vm3528, %v3534, %v3536
      %v3538 = vrot.slane %v3312, 5
      %v3539 = vsel %vm3528, %v3536, %v3538
      %v3540 = vrot.slane %v3313, 5
      %v3541 = vsel %vm3528, %v3538, %v3540
      %v3542 = vrot.slane %v3314, 5
      %v3543 = vsel %vm3528, %v3540, %v3542
      %v3544 = vrot.slane %v3315, 5
      %v3545 = vsel %vm3528, %v3542, %v3544
      %v3546 = vrot.slane %v3316, 5
      %v3547 = vsel %vm3528, %v3544, %v3546
      %v3548 = vrot.slane %v3317, 5
      %v3549 = vsel %vm3528, %v3546, %v3548
      %v3550 = vrot.slane %v3318, 5
      %v3551 = vsel %vm3528, %v3548, %v3550
      %v3552 = vrot.slane %v3319, 5
      %v3553 = vsel %vm3528, %v3550, %v3552
      %v3554 = vrot.slane %v3320, 5
      %v3555 = vsel %vm3528, %v3552, %v3554
      %v3556 = vrot.slane %v3321, 5
      %v3557 = vsel %vm3528, %v3554, %v3556
      %v3558 = vrot.slane %v3322, 5
      %v3559 = vsel %vm3528, %v3556, %v3558
      %v3560 = vrot.slane %v3323, 5
      %v3561 = vsel %vm3528, %v3558, %v3560
      %v3562 = vrot.slane %v3324, 5
      %v3563 = vsel %vm3528, %v3560, %v3562
      %v3564 = vrot.slane %v3527, 5
      %v3565 = vsel %vm3528, %v3562, %v3564
      %3566 = vrot.lane.b32.xlu0 %v3529, 64
      %v3567 = vpop.permute.xlu0 %3566
      %3568 = vrot.lane.b32.xlu0 %v3531, 64
      %v3569 = vpop.permute.xlu0 %3568
      %3570 = vrot.lane.b32.xlu0 %v3533, 64
      %v3571 = vpop.permute.xlu0 %3570
      %3572 = vrot.lane.b32.xlu0 %v3535, 64
      %v3573 = vpop.permute.xlu0 %3572
      %3574 = vrot.lane.b32.xlu0 %v3537, 64
      %v3575 = vpop.permute.xlu0 %3574
      %3576 = vrot.lane.b32.xlu0 %v3539, 64
      %v3577 = vpop.permute.xlu0 %3576
      %3578 = vrot.lane.b32.xlu0 %v3541, 64
      %v3579 = vpop.permute.xlu0 %3578
      %3580 = vrot.lane.b32.xlu0 %v3543, 64
      %v3581 = vpop.permute.xlu0 %3580
      %3582 = vrot.lane.b32.xlu0 %v3545, 64
      %v3583 = vpop.permute.xlu0 %3582
      %3584 = vrot.lane.b32.xlu0 %v3547, 64
      %v3585 = vpop.permute.xlu0 %3584
      %3586 = vrot.lane.b32.xlu0 %v3549, 64
      %v3587 = vpop.permute.xlu0 %3586
      %3588 = vrot.lane.b32.xlu0 %v3551, 64
      %v3589 = vpop.permute.xlu0 %3588
      %3590 = vrot.lane.b32.xlu0 %v3553, 64
      %v3591 = vpop.permute.xlu0 %3590
      %3592 = vrot.lane.b32.xlu0 %v3555, 64
      %v3593 = vpop.permute.xlu0 %3592
      %3594 = vrot.lane.b32.xlu0 %v3557, 64
      %v3595 = vpop.permute.xlu0 %3594
      %3596 = vrot.lane.b32.xlu0 %v3559, 64
      %v3597 = vpop.permute.xlu0 %3596
      %3598 = vrot.lane.b32.xlu0 %v3561, 64
      %v3599 = vpop.permute.xlu0 %3598
      %3600 = vrot.lane.b32.xlu0 %v3563, 64
      %v3601 = vpop.permute.xlu0 %3600
      %3602 = vrot.lane.b32.xlu0 %v3565, 64
      %v3603 = vpop.permute.xlu0 %3602
      %v3607 = vunpack.c.l.b16 %v3203
      %v3608 = vunpack.c.l.b16 %v3204
      %v3609 = vunpack.c.l.b16 %v3205
      %v3610 = vpack.c.b16 %v3608, %v3607
      %v3611 = vpack.c.b16 %v3609, %v3609
      %v3612 = vrot.slane %v3610, 5
      %v3613 = vsel %vm3528, %v3562, %v3612
      %v3614 = vrot.slane %v3611, 5
      %v3615 = vsel %vm3528, %v3612, %v3614
      %3616 = vrot.lane.b32.xlu0 %v3530, 96
      %v3617 = vpop.permute.xlu0 %3616
      %3618 = vrot.lane.b32.xlu0 %v3533, 96
      %v3619 = vpop.permute.xlu0 %3618
      %3620 = vrot.lane.b32.xlu0 %v3535, 96
      %v3621 = vpop.permute.xlu0 %3620
      %3622 = vrot.lane.b32.xlu0 %v3537, 96
      %v3623 = vpop.permute.xlu0 %3622
      %3624 = vrot.lane.b32.xlu0 %v3539, 96
      %v3625 = vpop.permute.xlu0 %3624
      %3626 = vrot.lane.b32.xlu0 %v3541, 96
      %v3627 = vpop.permute.xlu0 %3626
      %3628 = vrot.lane.b32.xlu0 %v3543, 96
      %v3629 = vpop.permute.xlu0 %3628
      %3630 = vrot.lane.b32.xlu0 %v3545, 96
      %v3631 = vpop.permute.xlu0 %3630
      %3632 = vrot.lane.b32.xlu0 %v3547, 96
      %v3633 = vpop.permute.xlu0 %3632
      %3634 = vrot.lane.b32.xlu0 %v3549, 96
      %v3635 = vpop.permute.xlu0 %3634
      %3636 = vrot.lane.b32.xlu0 %v3551, 96
      %v3637 = vpop.permute.xlu0 %3636
      %3638 = vrot.lane.b32.xlu0 %v3553, 96
      %v3639 = vpop.permute.xlu0 %3638
      %3640 = vrot.lane.b32.xlu0 %v3555, 96
      %v3641 = vpop.permute.xlu0 %3640
      %3642 = vrot.lane.b32.xlu0 %v3557, 96
      %v3643 = vpop.permute.xlu0 %3642
      %3644 = vrot.lane.b32.xlu0 %v3559, 96
      %v3645 = vpop.permute.xlu0 %3644
      %3646 = vrot.lane.b32.xlu0 %v3561, 96
      %v3647 = vpop.permute.xlu0 %3646
      %3648 = vrot.lane.b32.xlu0 %v3563, 96
      %v3649 = vpop.permute.xlu0 %3648
      %3650 = vrot.lane.b32.xlu0 %v3613, 96
      %v3651 = vpop.permute.xlu0 %3650
      %3652 = vrot.lane.b32.xlu0 %v3615, 96
      %v3653 = vpop.permute.xlu0 %3652
      %v3655 = vunpack.c.l.b16 %v3206
      %v3656 = vpack.c.b16 %v3255, %v3655
      %vm3657 = vsmask.f32 2304
      %v3659 = vshrl.u32 %v3656, 16
      %v3661 = vrot.slane %v3659, 5
      %v3662 = vshll.u32 %v3656, 16
      %v3664 = vrot.slane %v3662, 6
      %v3665 = vor.u32 %v3661, %v3664
      %v3666 = vrot.slane %v3344, 5
      %v3667 = vrot.slane %v3347, 6
      %v3668 = vor.u32 %v3666, %v3667
      %v3669 = vsel %vm3657, %v3665, %v3668
      %v3670 = vrot.slane %v3353, 5
      %v3671 = vrot.slane %v3356, 6
      %v3672 = vor.u32 %v3670, %v3671
      %v3673 = vsel %vm3657, %v3668, %v3672
      %v3674 = vrot.slane %v3362, 5
      %v3675 = vrot.slane %v3365, 6
      %v3676 = vor.u32 %v3674, %v3675
      %v3677 = vsel %vm3657, %v3672, %v3676
      %v3678 = vrot.slane %v3371, 5
      %v3679 = vrot.slane %v3374, 6
      %v3680 = vor.u32 %v3678, %v3679
      %v3681 = vsel %vm3657, %v3676, %v3680
      %v3682 = vrot.slane %v3380, 5
      %v3683 = vrot.slane %v3383, 6
      %v3684 = vor.u32 %v3682, %v3683
      %v3685 = vsel %vm3657, %v3680, %v3684
      %v3686 = vrot.slane %v3389, 5
      %v3687 = vrot.slane %v3392, 6
      %v3688 = vor.u32 %v3686, %v3687
      %v3689 = vsel %vm3657, %v3684, %v3688
      %v3690 = vrot.slane %v3398, 5
      %v3691 = vrot.slane %v3401, 6
      %v3692 = vor.u32 %v3690, %v3691
      %v3693 = vsel %vm3657, %v3688, %v3692
      %v3694 = vrot.slane %v3407, 5
      %v3695 = vrot.slane %v3410, 6
      %v3696 = vor.u32 %v3694, %v3695
      %v3697 = vsel %vm3657, %v3692, %v3696
      %v3698 = vrot.slane %v3416, 5
      %v3699 = vrot.slane %v3419, 6
      %v3700 = vor.u32 %v3698, %v3699
      %v3701 = vsel %vm3657, %v3696, %v3700
      %v3702 = vrot.slane %v3425, 5
      %v3703 = vrot.slane %v3428, 6
      %v3704 = vor.u32 %v3702, %v3703
      %v3705 = vsel %vm3657, %v3700, %v3704
      %v3706 = vrot.slane %v3434, 5
      %v3707 = vrot.slane %v3437, 6
      %v3708 = vor.u32 %v3706, %v3707
      %v3709 = vsel %vm3657, %v3704, %v3708
      %v3710 = vrot.slane %v3443, 5
      %v3711 = vrot.slane %v3446, 6
      %v3712 = vor.u32 %v3710, %v3711
      %v3713 = vsel %vm3657, %v3708, %v3712
      %v3714 = vrot.slane %v3452, 5
      %v3715 = vrot.slane %v3455, 6
      %v3716 = vor.u32 %v3714, %v3715
      %v3717 = vsel %vm3657, %v3712, %v3716
      %v3718 = vrot.slane %v3461, 5
      %v3719 = vrot.slane %v3464, 6
      %v3720 = vor.u32 %v3718, %v3719
      %v3721 = vsel %vm3657, %v3716, %v3720
      %v3722 = vrot.slane %v3470, 5
      %v3723 = vrot.slane %v3473, 6
      %v3724 = vor.u32 %v3722, %v3723
      %v3725 = vsel %vm3657, %v3720, %v3724
      %v3726 = vrot.slane %v3479, 5
      %v3727 = vrot.slane %v3482, 6
      %v3728 = vor.u32 %v3726, %v3727
      %v3729 = vsel %vm3657, %v3724, %v3728
      %v3731 = vshrl.u32 %v3610, 16
      %v3733 = vrot.slane %v3731, 5
      %v3734 = vshll.u32 %v3610, 16
      %v3736 = vrot.slane %v3734, 6
      %v3737 = vor.u32 %v3733, %v3736
      %v3738 = vsel %vm3657, %v3728, %v3737
      %v3740 = vshrl.u32 %v3611, 16
      %v3742 = vrot.slane %v3740, 5
      %v3743 = vshll.u32 %v3611, 16
      %v3745 = vrot.slane %v3743, 6
      %v3746 = vor.u32 %v3742, %v3745
      %v3747 = vsel %vm3657, %v3737, %v3746
      %v3749 = vunpack.c.l.b16 %v3207
      %v3750 = vpack.c.b16 %v3749, %v3749
      %vm3751 = vcmask 1041408
      %v3752 = vrot.slane %v3656, 6
      %v3753 = vrot.slane %v3309, 6
      %v3754 = vsel %vm3751, %v3752, %v3753
      %v3755 = vrot.slane %v3310, 6
      %v3756 = vsel %vm3751, %v3753, %v3755
      %v3757 = vrot.slane %v3311, 6
      %v3758 = vsel %vm3751, %v3755, %v3757
      %v3759 = vrot.slane %v3312, 6
      %v3760 = vsel %vm3751, %v3757, %v3759
      %v3761 = vrot.slane %v3313, 6
      %v3762 = vsel %vm3751, %v3759, %v3761
      %v3763 = vrot.slane %v3314, 6
      %v3764 = vsel %vm3751, %v3761, %v3763
      %v3765 = vrot.slane %v3315, 6
      %v3766 = vsel %vm3751, %v3763, %v3765
      %v3767 = vrot.slane %v3316, 6
      %v3768 = vsel %vm3751, %v3765, %v3767
      %v3769 = vrot.slane %v3317, 6
      %v3770 = vsel %vm3751, %v3767, %v3769
      %v3771 = vrot.slane %v3318, 6
      %v3772 = vsel %vm3751, %v3769, %v3771
      %v3773 = vrot.slane %v3319, 6
      %v3774 = vsel %vm3751, %v3771, %v3773
      %v3775 = vrot.slane %v3320, 6
      %v3776 = vsel %vm3751, %v3773, %v3775
      %v3777 = vrot.slane %v3321, 6
      %v3778 = vsel %vm3751, %v3775, %v3777
      %v3779 = vrot.slane %v3322, 6
      %v3780 = vsel %vm3751, %v3777, %v3779
      %v3781 = vrot.slane %v3323, 6
      %v3782 = vsel %vm3751, %v3779, %v3781
      %v3783 = vrot.slane %v3324, 6
      %v3784 = vsel %vm3751, %v3781, %v3783
      %v3785 = vrot.slane %v3610, 6
      %v3786 = vsel %vm3751, %v3783, %v3785
      %v3787 = vrot.slane %v3750, 6
      %v3788 = vsel %vm3751, %v3785, %v3787
      %3789 = vrot.lane.b32.xlu0 %v3752, 32
      %v3790 = vpop.permute.xlu0 %3789
      %3791 = vrot.lane.b32.xlu0 %v3754, 32
      %v3792 = vpop.permute.xlu0 %3791
      %3793 = vrot.lane.b32.xlu0 %v3756, 32
      %v3794 = vpop.permute.xlu0 %3793
      %3795 = vrot.lane.b32.xlu0 %v3758, 32
      %v3796 = vpop.permute.xlu0 %3795
      %3797 = vrot.lane.b32.xlu0 %v3760, 32
      %v3798 = vpop.permute.xlu0 %3797
      %3799 = vrot.lane.b32.xlu0 %v3762, 32
      %v3800 = vpop.permute.xlu0 %3799
      %3801 = vrot.lane.b32.xlu0 %v3764, 32
      %v3802 = vpop.permute.xlu0 %3801
      %3803 = vrot.lane.b32.xlu0 %v3766, 32
      %v3804 = vpop.permute.xlu0 %3803
      %3805 = vrot.lane.b32.xlu0 %v3768, 32
      %v3806 = vpop.permute.xlu0 %3805
      %3807 = vrot.lane.b32.xlu0 %v3770, 32
      %v3808 = vpop.permute.xlu0 %3807
      %3809 = vrot.lane.b32.xlu0 %v3772, 32
      %v3810 = vpop.permute.xlu0 %3809
      %3811 = vrot.lane.b32.xlu0 %v3774, 32
      %v3812 = vpop.permute.xlu0 %3811
      %3813 = vrot.lane.b32.xlu0 %v3776, 32
      %v3814 = vpop.permute.xlu0 %3813
      %3815 = vrot.lane.b32.xlu0 %v3778, 32
      %v3816 = vpop.permute.xlu0 %3815
      %3817 = vrot.lane.b32.xlu0 %v3780, 32
      %v3818 = vpop.permute.xlu0 %3817
      %3819 = vrot.lane.b32.xlu0 %v3782, 32
      %v3820 = vpop.permute.xlu0 %3819
      %3821 = vrot.lane.b32.xlu0 %v3784, 32
      %v3822 = vpop.permute.xlu0 %3821
      %3823 = vrot.lane.b32.xlu0 %v3786, 32
      %v3824 = vpop.permute.xlu0 %3823
      %3825 = vrot.lane.b32.xlu0 %v3788, 32
      %v3826 = vpop.permute.xlu0 %3825
      %v3831 = vunpack.c.l.b16 %v3208
      %v3832 = vunpack.c.l.b16 %v3209
      %v3833 = vunpack.c.l.b16 %v3210
      %v3834 = vunpack.c.l.b16 %v3211
      %v3835 = vpack.c.b16 %v3257, %v3831
      %v3836 = vpack.c.b16 %v3833, %v3832
      %v3837 = vpack.c.b16 %v3834, %v3834
      %v3838 = vrot.slane %v3835, 6
      %v3839 = vsel %vm3751, %v3838, %v3755
      %v3840 = vrot.slane %v3836, 6
      %v3841 = vsel %vm3751, %v3785, %v3840
      %v3842 = vrot.slane %v3837, 6
      %v3843 = vsel %vm3751, %v3840, %v3842
      %3844 = vrot.lane.b32.xlu0 %v3838, 64
      %v3845 = vpop.permute.xlu0 %3844
      %3846 = vrot.lane.b32.xlu0 %v3839, 64
      %v3847 = vpop.permute.xlu0 %3846
      %3848 = vrot.lane.b32.xlu0 %v3758, 64
      %v3849 = vpop.permute.xlu0 %3848
      %3850 = vrot.lane.b32.xlu0 %v3760, 64
      %v3851 = vpop.permute.xlu0 %3850
      %3852 = vrot.lane.b32.xlu0 %v3762, 64
      %v3853 = vpop.permute.xlu0 %3852
      %3854 = vrot.lane.b32.xlu0 %v3764, 64
      %v3855 = vpop.permute.xlu0 %3854
      %3856 = vrot.lane.b32.xlu0 %v3766, 64
      %v3857 = vpop.permute.xlu0 %3856
      %3858 = vrot.lane.b32.xlu0 %v3768, 64
      %v3859 = vpop.permute.xlu0 %3858
      %3860 = vrot.lane.b32.xlu0 %v3770, 64
      %v3861 = vpop.permute.xlu0 %3860
      %3862 = vrot.lane.b32.xlu0 %v3772, 64
      %v3863 = vpop.permute.xlu0 %3862
      %3864 = vrot.lane.b32.xlu0 %v3774, 64
      %v3865 = vpop.permute.xlu0 %3864
      %3866 = vrot.lane.b32.xlu0 %v3776, 64
      %v3867 = vpop.permute.xlu0 %3866
      %3868 = vrot.lane.b32.xlu0 %v3778, 64
      %v3869 = vpop.permute.xlu0 %3868
      %3870 = vrot.lane.b32.xlu0 %v3780, 64
      %v3871 = vpop.permute.xlu0 %3870
      %3872 = vrot.lane.b32.xlu0 %v3782, 64
      %v3873 = vpop.permute.xlu0 %3872
      %3874 = vrot.lane.b32.xlu0 %v3784, 64
      %v3875 = vpop.permute.xlu0 %3874
      %3876 = vrot.lane.b32.xlu0 %v3786, 64
      %v3877 = vpop.permute.xlu0 %3876
      %3878 = vrot.lane.b32.xlu0 %v3841, 64
      %v3879 = vpop.permute.xlu0 %3878
      %3880 = vrot.lane.b32.xlu0 %v3843, 64
      %v3881 = vpop.permute.xlu0 %3880
      %v3883 = vunpack.c.l.b16 %v3212
      %v3884 = vpack.c.b16 %v3257, %v3883
      %vm3885 = vsmask.f32 1280
      %v3887 = vshrl.u32 %v3884, 16
      %v3889 = vrot.slane %v3887, 6
      %v3890 = vshll.u32 %v3884, 16
      %v3892 = vrot.slane %v3890, 7
      %v3893 = vor.u32 %v3889, %v3892
      %v3894 = vrot.slane %v3353, 6
      %v3895 = vrot.slane %v3356, 7
      %v3896 = vor.u32 %v3894, %v3895
      %v3897 = vsel %vm3885, %v3893, %v3896
      %v3898 = vrot.slane %v3362, 6
      %v3899 = vrot.slane %v3365, 7
      %v3900 = vor.u32 %v3898, %v3899
      %v3901 = vsel %vm3885, %v3896, %v3900
      %v3902 = vrot.slane %v3371, 6
      %v3903 = vrot.slane %v3374, 7
      %v3904 = vor.u32 %v3902, %v3903
      %v3905 = vsel %vm3885, %v3900, %v3904
      %v3906 = vrot.slane %v3380, 6
      %v3907 = vrot.slane %v3383, 7
      %v3908 = vor.u32 %v3906, %v3907
      %v3909 = vsel %vm3885, %v3904, %v3908
      %v3910 = vrot.slane %v3389, 6
      %v3911 = vrot.slane %v3392, 7
      %v3912 = vor.u32 %v3910, %v3911
      %v3913 = vsel %vm3885, %v3908, %v3912
      %v3914 = vrot.slane %v3398, 6
      %v3915 = vrot.slane %v3401, 7
      %v3916 = vor.u32 %v3914, %v3915
      %v3917 = vsel %vm3885, %v3912, %v3916
      %v3918 = vrot.slane %v3407, 6
      %v3919 = vrot.slane %v3410, 7
      %v3920 = vor.u32 %v3918, %v3919
      %v3921 = vsel %vm3885, %v3916, %v3920
      %v3922 = vrot.slane %v3416, 6
      %v3923 = vrot.slane %v3419, 7
      %v3924 = vor.u32 %v3922, %v3923
      %v3925 = vsel %vm3885, %v3920, %v3924
      %v3926 = vrot.slane %v3425, 6
      %v3927 = vrot.slane %v3428, 7
      %v3928 = vor.u32 %v3926, %v3927
      %v3929 = vsel %vm3885, %v3924, %v3928
      %v3930 = vrot.slane %v3434, 6
      %v3931 = vrot.slane %v3437, 7
      %v3932 = vor.u32 %v3930, %v3931
      %v3933 = vsel %vm3885, %v3928, %v3932
      %v3934 = vrot.slane %v3443, 6
      %v3935 = vrot.slane %v3446, 7
      %v3936 = vor.u32 %v3934, %v3935
      %v3937 = vsel %vm3885, %v3932, %v3936
      %v3938 = vrot.slane %v3452, 6
      %v3939 = vrot.slane %v3455, 7
      %v3940 = vor.u32 %v3938, %v3939
      %v3941 = vsel %vm3885, %v3936, %v3940
      %v3942 = vrot.slane %v3461, 6
      %v3943 = vrot.slane %v3464, 7
      %v3944 = vor.u32 %v3942, %v3943
      %v3945 = vsel %vm3885, %v3940, %v3944
      %v3946 = vrot.slane %v3470, 6
      %v3947 = vrot.slane %v3473, 7
      %v3948 = vor.u32 %v3946, %v3947
      %v3949 = vsel %vm3885, %v3944, %v3948
      %v3950 = vrot.slane %v3479, 6
      %v3951 = vrot.slane %v3482, 7
      %v3952 = vor.u32 %v3950, %v3951
      %v3953 = vsel %vm3885, %v3948, %v3952
      %v3954 = vrot.slane %v3731, 6
      %v3955 = vrot.slane %v3734, 7
      %v3956 = vor.u32 %v3954, %v3955
      %v3957 = vsel %vm3885, %v3952, %v3956
      %v3959 = vshrl.u32 %v3836, 16
      %v3961 = vrot.slane %v3959, 6
      %v3962 = vshll.u32 %v3836, 16
      %v3964 = vrot.slane %v3962, 7
      %v3965 = vor.u32 %v3961, %v3964
      %v3966 = vsel %vm3885, %v3956, %v3965
      %v3968 = vshrl.u32 %v3837, 16
      %v3970 = vrot.slane %v3968, 6
      %v3971 = vshll.u32 %v3837, 16
      %v3973 = vrot.slane %v3971, 7
      %v3974 = vor.u32 %v3970, %v3973
      %v3975 = vsel %vm3885, %v3965, %v3974
      %3976 = vrot.lane.b32.xlu0 %v3893, 96
      %v3977 = vpop.permute.xlu0 %3976
      %3978 = vrot.lane.b32.xlu0 %v3897, 96
      %v3979 = vpop.permute.xlu0 %3978
      %3980 = vrot.lane.b32.xlu0 %v3901, 96
      %v3981 = vpop.permute.xlu0 %3980
      %3982 = vrot.lane.b32.xlu0 %v3905, 96
      %v3983 = vpop.permute.xlu0 %3982
      %3984 = vrot.lane.b32.xlu0 %v3909, 96
      %v3985 = vpop.permute.xlu0 %3984
      %3986 = vrot.lane.b32.xlu0 %v3913, 96
      %v3987 = vpop.permute.xlu0 %3986
      %3988 = vrot.lane.b32.xlu0 %v3917, 96
      %v3989 = vpop.permute.xlu0 %3988
      %3990 = vrot.lane.b32.xlu0 %v3921, 96
      %v3991 = vpop.permute.xlu0 %3990
      %3992 = vrot.lane.b32.xlu0 %v3925, 96
      %v3993 = vpop.permute.xlu0 %3992
      %3994 = vrot.lane.b32.xlu0 %v3929, 96
      %v3995 = vpop.permute.xlu0 %3994
      %3996 = vrot.lane.b32.xlu0 %v3933, 96
      %v3997 = vpop.permute.xlu0 %3996
      %3998 = vrot.lane.b32.xlu0 %v3937, 96
      %v3999 = vpop.permute.xlu0 %3998
      %4000 = vrot.lane.b32.xlu0 %v3941, 96
      %v4001 = vpop.permute.xlu0 %4000
      %4002 = vrot.lane.b32.xlu0 %v3945, 96
      %v4003 = vpop.permute.xlu0 %4002
      %4004 = vrot.lane.b32.xlu0 %v3949, 96
      %v4005 = vpop.permute.xlu0 %4004
      %4006 = vrot.lane.b32.xlu0 %v3953, 96
      %v4007 = vpop.permute.xlu0 %4006
      %4008 = vrot.lane.b32.xlu0 %v3957, 96
      %v4009 = vpop.permute.xlu0 %4008
      %4010 = vrot.lane.b32.xlu0 %v3966, 96
      %v4011 = vpop.permute.xlu0 %4010
      %4012 = vrot.lane.b32.xlu0 %v3975, 96
      %v4013 = vpop.permute.xlu0 %4012
      %v4015 = vunpack.c.l.b16 %v3213
      %v4016 = vpack.c.b16 %v4015, %v4015
      %v4017 = vrot.slane %v3884, 7
      %v4018 = vrot.slane %v3310, 7
      %v4019 = vsel %vm2978, %v4017, %v4018
      %v4020 = vrot.slane %v3311, 7
      %v4021 = vsel %vm2978, %v4018, %v4020
      %v4022 = vrot.slane %v3312, 7
      %v4023 = vsel %vm2978, %v4020, %v4022
      %v4024 = vrot.slane %v3313, 7
      %v4025 = vsel %vm2978, %v4022, %v4024
      %v4026 = vrot.slane %v3314, 7
      %v4027 = vsel %vm2978, %v4024, %v4026
      %v4028 = vrot.slane %v3315, 7
      %v4029 = vsel %vm2978, %v4026, %v4028
      %v4030 = vrot.slane %v3316, 7
      %v4031 = vsel %vm2978, %v4028, %v4030
      %v4032 = vrot.slane %v3317, 7
      %v4033 = vsel %vm2978, %v4030, %v4032
      %v4034 = vrot.slane %v3318, 7
      %v4035 = vsel %vm2978, %v4032, %v4034
      %v4036 = vrot.slane %v3319, 7
      %v4037 = vsel %vm2978, %v4034, %v4036
      %v4038 = vrot.slane %v3320, 7
      %v4039 = vsel %vm2978, %v4036, %v4038
      %v4040 = vrot.slane %v3321, 7
      %v4041 = vsel %vm2978, %v4038, %v4040
      %v4042 = vrot.slane %v3322, 7
      %v4043 = vsel %vm2978, %v4040, %v4042
      %v4044 = vrot.slane %v3323, 7
      %v4045 = vsel %vm2978, %v4042, %v4044
      %v4046 = vrot.slane %v3324, 7
      %v4047 = vsel %vm2978, %v4044, %v4046
      %v4048 = vrot.slane %v3610, 7
      %v4049 = vsel %vm2978, %v4046, %v4048
      %v4050 = vrot.slane %v3836, 7
      %v4051 = vsel %vm2978, %v4048, %v4050
      %v4052 = vrot.slane %v4016, 7
      %v4053 = vsel %vm2978, %v4050, %v4052
      %v4056 = vsel %vm1913, %v3288, %v3488
      %v4059 = vsel %vm1913, %v3289, %v3490
      %v4062 = vsel %vm1913, %v3290, %v3492
      %v4065 = vsel %vm1913, %v3291, %v3494
      %v4068 = vsel %vm1913, %v3292, %v3496
      %v4071 = vsel %vm1913, %v3293, %v3498
      %v4074 = vsel %vm1913, %v3294, %v3500
      %v4077 = vsel %vm1913, %v3295, %v3502
      %v4080 = vsel %vm1913, %v3296, %v3504
      %v4083 = vsel %vm1913, %v3297, %v3506
      %v4086 = vsel %vm1913, %v3298, %v3508
      %v4089 = vsel %vm1913, %v3299, %v3510
      %v4092 = vsel %vm1913, %v3300, %v3512
      %v4095 = vsel %vm1913, %v3301, %v3514
      %v4098 = vsel %vm1913, %v3302, %v3516
      %v4101 = vsel %vm1913, %v3303, %v3518
      %v4104 = vsel %vm1913, %v3304, %v3520
      %v4107 = vsel %vm1913, %v3305, %v3522
      %v4110 = vsel %vm1913, %v3306, %v3524
      %v4112 = vsel %vm1968, %v4056, %v3567
      %v4114 = vsel %vm1968, %v4059, %v3569
      %v4116 = vsel %vm1968, %v4062, %v3571
      %v4118 = vsel %vm1968, %v4065, %v3573
      %v4120 = vsel %vm1968, %v4068, %v3575
      %v4122 = vsel %vm1968, %v4071, %v3577
      %v4124 = vsel %vm1968, %v4074, %v3579
      %v4126 = vsel %vm1968, %v4077, %v3581
      %v4128 = vsel %vm1968, %v4080, %v3583
      %v4130 = vsel %vm1968, %v4083, %v3585
      %v4132 = vsel %vm1968, %v4086, %v3587
      %v4134 = vsel %vm1968, %v4089, %v3589
      %v4136 = vsel %vm1968, %v4092, %v3591
      %v4138 = vsel %vm1968, %v4095, %v3593
      %v4140 = vsel %vm1968, %v4098, %v3595
      %v4142 = vsel %vm1968, %v4101, %v3597
      %v4144 = vsel %vm1968, %v4104, %v3599
      %v4146 = vsel %vm1968, %v4107, %v3601
      %v4148 = vsel %vm1968, %v4110, %v3603
      %v4150 = vsel %vm2005, %v4112, %v3617
      %v4152 = vsel %vm2005, %v4114, %v3619
      %v4154 = vsel %vm2005, %v4116, %v3621
      %v4156 = vsel %vm2005, %v4118, %v3623
      %v4158 = vsel %vm2005, %v4120, %v3625
      %v4160 = vsel %vm2005, %v4122, %v3627
      %v4162 = vsel %vm2005, %v4124, %v3629
      %v4164 = vsel %vm2005, %v4126, %v3631
      %v4166 = vsel %vm2005, %v4128, %v3633
      %v4168 = vsel %vm2005, %v4130, %v3635
      %v4170 = vsel %vm2005, %v4132, %v3637
      %v4172 = vsel %vm2005, %v4134, %v3639
      %v4174 = vsel %vm2005, %v4136, %v3641
      %v4176 = vsel %vm2005, %v4138, %v3643
      %v4178 = vsel %vm2005, %v4140, %v3645
      %v4180 = vsel %vm2005, %v4142, %v3647
      %v4182 = vsel %vm2005, %v4144, %v3649
      %v4184 = vsel %vm2005, %v4146, %v3651
      %v4186 = vsel %vm2005, %v4148, %v3653
      %v4189 = vsel %vm1913, %v3665, %v3790
      %v4192 = vsel %vm1913, %v3669, %v3792
      %v4195 = vsel %vm1913, %v3673, %v3794
      %v4198 = vsel %vm1913, %v3677, %v3796
      %v4201 = vsel %vm1913, %v3681, %v3798
      %v4204 = vsel %vm1913, %v3685, %v3800
      %v4207 = vsel %vm1913, %v3689, %v3802
      %v4210 = vsel %vm1913, %v3693, %v3804
      %v4213 = vsel %vm1913, %v3697, %v3806
      %v4216 = vsel %vm1913, %v3701, %v3808
      %v4219 = vsel %vm1913, %v3705, %v3810
      %v4222 = vsel %vm1913, %v3709, %v3812
      %v4225 = vsel %vm1913, %v3713, %v3814
      %v4228 = vsel %vm1913, %v3717, %v3816
      %v4231 = vsel %vm1913, %v3721, %v3818
      %v4234 = vsel %vm1913, %v3725, %v3820
      %v4237 = vsel %vm1913, %v3729, %v3822
      %v4240 = vsel %vm1913, %v3738, %v3824
      %v4243 = vsel %vm1913, %v3747, %v3826
      %v4245 = vsel %vm1968, %v4189, %v3845
      %v4247 = vsel %vm1968, %v4192, %v3847
      %v4249 = vsel %vm1968, %v4195, %v3849
      %v4251 = vsel %vm1968, %v4198, %v3851
      %v4253 = vsel %vm1968, %v4201, %v3853
      %v4255 = vsel %vm1968, %v4204, %v3855
      %v4257 = vsel %vm1968, %v4207, %v3857
      %v4259 = vsel %vm1968, %v4210, %v3859
      %v4261 = vsel %vm1968, %v4213, %v3861
      %v4263 = vsel %vm1968, %v4216, %v3863
      %v4265 = vsel %vm1968, %v4219, %v3865
      %v4267 = vsel %vm1968, %v4222, %v3867
      %v4269 = vsel %vm1968, %v4225, %v3869
      %v4271 = vsel %vm1968, %v4228, %v3871
      %v4273 = vsel %vm1968, %v4231, %v3873
      %v4275 = vsel %vm1968, %v4234, %v3875
      %v4277 = vsel %vm1968, %v4237, %v3877
      %v4279 = vsel %vm1968, %v4240, %v3879
      %v4281 = vsel %vm1968, %v4243, %v3881
      %v4283 = vsel %vm2005, %v4245, %v3977
      %v4285 = vsel %vm2005, %v4247, %v3979
      %v4287 = vsel %vm2005, %v4249, %v3981
      %v4289 = vsel %vm2005, %v4251, %v3983
      %v4291 = vsel %vm2005, %v4253, %v3985
      %v4293 = vsel %vm2005, %v4255, %v3987
      %v4295 = vsel %vm2005, %v4257, %v3989
      %v4297 = vsel %vm2005, %v4259, %v3991
      %v4299 = vsel %vm2005, %v4261, %v3993
      %v4301 = vsel %vm2005, %v4263, %v3995
      %v4303 = vsel %vm2005, %v4265, %v3997
      %v4305 = vsel %vm2005, %v4267, %v3999
      %v4307 = vsel %vm2005, %v4269, %v4001
      %v4309 = vsel %vm2005, %v4271, %v4003
      %v4311 = vsel %vm2005, %v4273, %v4005
      %v4313 = vsel %vm2005, %v4275, %v4007
      %v4315 = vsel %vm2005, %v4277, %v4009
      %v4317 = vsel %vm2005, %v4279, %v4011
      %v4319 = vsel %vm2005, %v4281, %v4013
      %vm4320 = vsmask.f32 4352
      %v4321 = vshrl.u32 %v4150, 16
      %v4323 = vrot.slane %v4321, 3
      %v4324 = vshll.u32 %v4150, 16
      %v4326 = vrot.slane %v4324, 4
      %v4327 = vor.u32 %v4323, %v4326
      %v4328 = vshrl.u32 %v4152, 16
      %v4330 = vrot.slane %v4328, 3
      %v4331 = vshll.u32 %v4152, 16
      %v4333 = vrot.slane %v4331, 4
      %v4334 = vor.u32 %v4330, %v4333
      %v4335 = vsel %vm4320, %v4327, %v4334
      %v4336 = vshrl.u32 %v4283, 16
      %v4338 = vrot.slane %v4336, 3
      %v4339 = vshll.u32 %v4283, 16
      %v4341 = vrot.slane %v4339, 4
      %v4342 = vor.u32 %v4338, %v4341
      %v4343 = vshrl.u32 %v4285, 16
      %v4345 = vrot.slane %v4343, 3
      %v4346 = vshll.u32 %v4285, 16
      %v4348 = vrot.slane %v4346, 4
      %v4349 = vor.u32 %v4345, %v4348
      %v4350 = vsel %vm4320, %v4342, %v4349
      %v4352 = vshrl.u32 %v4017, 16
      %v4354 = vrot.slane %v4352, 3
      %v4355 = vshll.u32 %v4017, 16
      %v4357 = vrot.slane %v4355, 4
      %v4358 = vor.u32 %v4354, %v4357
      %v4360 = vshrl.u32 %v4019, 16
      %v4362 = vrot.slane %v4360, 3
      %v4363 = vshll.u32 %v4019, 16
      %v4365 = vrot.slane %v4363, 4
      %v4366 = vor.u32 %v4362, %v4365
      %v4367 = vsel %vm4320, %v4358, %v4366
      %v4368 = vshrl.u32 %v4154, 16
      %v4370 = vrot.slane %v4368, 3
      %v4371 = vshll.u32 %v4154, 16
      %v4373 = vrot.slane %v4371, 4
      %v4374 = vor.u32 %v4370, %v4373
      %v4375 = vsel %vm4320, %v4334, %v4374
      %v4376 = vshrl.u32 %v4287, 16
      %v4378 = vrot.slane %v4376, 3
      %v4379 = vshll.u32 %v4287, 16
      %v4381 = vrot.slane %v4379, 4
      %v4382 = vor.u32 %v4378, %v4381
      %v4383 = vsel %vm4320, %v4349, %v4382
      %v4385 = vshrl.u32 %v4021, 16
      %v4387 = vrot.slane %v4385, 3
      %v4388 = vshll.u32 %v4021, 16
      %v4390 = vrot.slane %v4388, 4
      %v4391 = vor.u32 %v4387, %v4390
      %v4392 = vsel %vm4320, %v4366, %v4391
      %v4393 = vshrl.u32 %v4156, 16
      %v4395 = vrot.slane %v4393, 3
      %v4396 = vshll.u32 %v4156, 16
      %v4398 = vrot.slane %v4396, 4
      %v4399 = vor.u32 %v4395, %v4398
      %v4400 = vsel %vm4320, %v4374, %v4399
      %v4401 = vshrl.u32 %v4289, 16
      %v4403 = vrot.slane %v4401, 3
      %v4404 = vshll.u32 %v4289, 16
      %v4406 = vrot.slane %v4404, 4
      %v4407 = vor.u32 %v4403, %v4406
      %v4408 = vsel %vm4320, %v4382, %v4407
      %v4410 = vshrl.u32 %v4023, 16
      %v4412 = vrot.slane %v4410, 3
      %v4413 = vshll.u32 %v4023, 16
      %v4415 = vrot.slane %v4413, 4
      %v4416 = vor.u32 %v4412, %v4415
      %v4417 = vsel %vm4320, %v4391, %v4416
      %v4418 = vshrl.u32 %v4158, 16
      %v4420 = vrot.slane %v4418, 3
      %v4421 = vshll.u32 %v4158, 16
      %v4423 = vrot.slane %v4421, 4
      %v4424 = vor.u32 %v4420, %v4423
      %v4425 = vsel %vm4320, %v4399, %v4424
      %v4426 = vshrl.u32 %v4291, 16
      %v4428 = vrot.slane %v4426, 3
      %v4429 = vshll.u32 %v4291, 16
      %v4431 = vrot.slane %v4429, 4
      %v4432 = vor.u32 %v4428, %v4431
      %v4433 = vsel %vm4320, %v4407, %v4432
      %v4435 = vshrl.u32 %v4025, 16
      %v4437 = vrot.slane %v4435, 3
      %v4438 = vshll.u32 %v4025, 16
      %v4440 = vrot.slane %v4438, 4
      %v4441 = vor.u32 %v4437, %v4440
      %v4442 = vsel %vm4320, %v4416, %v4441
      %v4443 = vshrl.u32 %v4160, 16
      %v4445 = vrot.slane %v4443, 3
      %v4446 = vshll.u32 %v4160, 16
      %v4448 = vrot.slane %v4446, 4
      %v4449 = vor.u32 %v4445, %v4448
      %v4450 = vsel %vm4320, %v4424, %v4449
      %v4451 = vshrl.u32 %v4293, 16
      %v4453 = vrot.slane %v4451, 3
      %v4454 = vshll.u32 %v4293, 16
      %v4456 = vrot.slane %v4454, 4
      %v4457 = vor.u32 %v4453, %v4456
      %v4458 = vsel %vm4320, %v4432, %v4457
      %v4460 = vshrl.u32 %v4027, 16
      %v4462 = vrot.slane %v4460, 3
      %v4463 = vshll.u32 %v4027, 16
      %v4465 = vrot.slane %v4463, 4
      %v4466 = vor.u32 %v4462, %v4465
      %v4467 = vsel %vm4320, %v4441, %v4466
      %v4468 = vshrl.u32 %v4162, 16
      %v4470 = vrot.slane %v4468, 3
      %v4471 = vshll.u32 %v4162, 16
      %v4473 = vrot.slane %v4471, 4
      %v4474 = vor.u32 %v4470, %v4473
      %v4475 = vsel %vm4320, %v4449, %v4474
      %v4476 = vshrl.u32 %v4295, 16
      %v4478 = vrot.slane %v4476, 3
      %v4479 = vshll.u32 %v4295, 16
      %v4481 = vrot.slane %v4479, 4
      %v4482 = vor.u32 %v4478, %v4481
      %v4483 = vsel %vm4320, %v4457, %v4482
      %v4485 = vshrl.u32 %v4029, 16
      %v4487 = vrot.slane %v4485, 3
      %v4488 = vshll.u32 %v4029, 16
      %v4490 = vrot.slane %v4488, 4
      %v4491 = vor.u32 %v4487, %v4490
      %v4492 = vsel %vm4320, %v4466, %v4491
      %v4493 = vshrl.u32 %v4164, 16
      %v4495 = vrot.slane %v4493, 3
      %v4496 = vshll.u32 %v4164, 16
      %v4498 = vrot.slane %v4496, 4
      %v4499 = vor.u32 %v4495, %v4498
      %v4500 = vsel %vm4320, %v4474, %v4499
      %v4501 = vshrl.u32 %v4297, 16
      %v4503 = vrot.slane %v4501, 3
      %v4504 = vshll.u32 %v4297, 16
      %v4506 = vrot.slane %v4504, 4
      %v4507 = vor.u32 %v4503, %v4506
      %v4508 = vsel %vm4320, %v4482, %v4507
      %v4510 = vshrl.u32 %v4031, 16
      %v4512 = vrot.slane %v4510, 3
      %v4513 = vshll.u32 %v4031, 16
      %v4515 = vrot.slane %v4513, 4
      %v4516 = vor.u32 %v4512, %v4515
      %v4517 = vsel %vm4320, %v4491, %v4516
      %v4518 = vshrl.u32 %v4166, 16
      %v4520 = vrot.slane %v4518, 3
      %v4521 = vshll.u32 %v4166, 16
      %v4523 = vrot.slane %v4521, 4
      %v4524 = vor.u32 %v4520, %v4523
      %v4525 = vsel %vm4320, %v4499, %v4524
      %v4526 = vshrl.u32 %v4299, 16
      %v4528 = vrot.slane %v4526, 3
      %v4529 = vshll.u32 %v4299, 16
      %v4531 = vrot.slane %v4529, 4
      %v4532 = vor.u32 %v4528, %v4531
      %v4533 = vsel %vm4320, %v4507, %v4532
      %v4535 = vshrl.u32 %v4033, 16
      %v4537 = vrot.slane %v4535, 3
      %v4538 = vshll.u32 %v4033, 16
      %v4540 = vrot.slane %v4538, 4
      %v4541 = vor.u32 %v4537, %v4540
      %v4542 = vsel %vm4320, %v4516, %v4541
      %v4543 = vshrl.u32 %v4168, 16
      %v4545 = vrot.slane %v4543, 3
      %v4546 = vshll.u32 %v4168, 16
      %v4548 = vrot.slane %v4546, 4
      %v4549 = vor.u32 %v4545, %v4548
      %v4550 = vsel %vm4320, %v4524, %v4549
      %v4551 = vshrl.u32 %v4301, 16
      %v4553 = vrot.slane %v4551, 3
      %v4554 = vshll.u32 %v4301, 16
      %v4556 = vrot.slane %v4554, 4
      %v4557 = vor.u32 %v4553, %v4556
      %v4558 = vsel %vm4320, %v4532, %v4557
      %v4560 = vshrl.u32 %v4035, 16
      %v4562 = vrot.slane %v4560, 3
      %v4563 = vshll.u32 %v4035, 16
      %v4565 = vrot.slane %v4563, 4
      %v4566 = vor.u32 %v4562, %v4565
      %v4567 = vsel %vm4320, %v4541, %v4566
      %v4568 = vshrl.u32 %v4170, 16
      %v4570 = vrot.slane %v4568, 3
      %v4571 = vshll.u32 %v4170, 16
      %v4573 = vrot.slane %v4571, 4
      %v4574 = vor.u32 %v4570, %v4573
      %v4575 = vsel %vm4320, %v4549, %v4574
      %v4576 = vshrl.u32 %v4303, 16
      %v4578 = vrot.slane %v4576, 3
      %v4579 = vshll.u32 %v4303, 16
      %v4581 = vrot.slane %v4579, 4
      %v4582 = vor.u32 %v4578, %v4581
      %v4583 = vsel %vm4320, %v4557, %v4582
      %v4585 = vshrl.u32 %v4037, 16
      %v4587 = vrot.slane %v4585, 3
      %v4588 = vshll.u32 %v4037, 16
      %v4590 = vrot.slane %v4588, 4
      %v4591 = vor.u32 %v4587, %v4590
      %v4592 = vsel %vm4320, %v4566, %v4591
      %v4593 = vshrl.u32 %v4172, 16
      %v4595 = vrot.slane %v4593, 3
      %v4596 = vshll.u32 %v4172, 16
      %v4598 = vrot.slane %v4596, 4
      %v4599 = vor.u32 %v4595, %v4598
      %v4600 = vsel %vm4320, %v4574, %v4599
      %v4601 = vshrl.u32 %v4305, 16
      %v4603 = vrot.slane %v4601, 3
      %v4604 = vshll.u32 %v4305, 16
      %v4606 = vrot.slane %v4604, 4
      %v4607 = vor.u32 %v4603, %v4606
      %v4608 = vsel %vm4320, %v4582, %v4607
      %v4610 = vshrl.u32 %v4039, 16
      %v4612 = vrot.slane %v4610, 3
      %v4613 = vshll.u32 %v4039, 16
      %v4615 = vrot.slane %v4613, 4
      %v4616 = vor.u32 %v4612, %v4615
      %v4617 = vsel %vm4320, %v4591, %v4616
      %v4618 = vshrl.u32 %v4174, 16
      %v4620 = vrot.slane %v4618, 3
      %v4621 = vshll.u32 %v4174, 16
      %v4623 = vrot.slane %v4621, 4
      %v4624 = vor.u32 %v4620, %v4623
      %v4625 = vsel %vm4320, %v4599, %v4624
      %v4626 = vshrl.u32 %v4307, 16
      %v4628 = vrot.slane %v4626, 3
      %v4629 = vshll.u32 %v4307, 16
      %v4631 = vrot.slane %v4629, 4
      %v4632 = vor.u32 %v4628, %v4631
      %v4633 = vsel %vm4320, %v4607, %v4632
      %v4635 = vshrl.u32 %v4041, 16
      %v4637 = vrot.slane %v4635, 3
      %v4638 = vshll.u32 %v4041, 16
      %v4640 = vrot.slane %v4638, 4
      %v4641 = vor.u32 %v4637, %v4640
      %v4642 = vsel %vm4320, %v4616, %v4641
      %v4643 = vshrl.u32 %v4176, 16
      %v4645 = vrot.slane %v4643, 3
      %v4646 = vshll.u32 %v4176, 16
      %v4648 = vrot.slane %v4646, 4
      %v4649 = vor.u32 %v4645, %v4648
      %v4650 = vsel %vm4320, %v4624, %v4649
      %v4651 = vshrl.u32 %v4309, 16
      %v4653 = vrot.slane %v4651, 3
      %v4654 = vshll.u32 %v4309, 16
      %v4656 = vrot.slane %v4654, 4
      %v4657 = vor.u32 %v4653, %v4656
      %v4658 = vsel %vm4320, %v4632, %v4657
      %v4660 = vshrl.u32 %v4043, 16
      %v4662 = vrot.slane %v4660, 3
      %v4663 = vshll.u32 %v4043, 16
      %v4665 = vrot.slane %v4663, 4
      %v4666 = vor.u32 %v4662, %v4665
      %v4667 = vsel %vm4320, %v4641, %v4666
      %v4668 = vshrl.u32 %v4178, 16
      %v4670 = vrot.slane %v4668, 3
      %v4671 = vshll.u32 %v4178, 16
      %v4673 = vrot.slane %v4671, 4
      %v4674 = vor.u32 %v4670, %v4673
      %v4675 = vsel %vm4320, %v4649, %v4674
      %v4676 = vshrl.u32 %v4311, 16
      %v4678 = vrot.slane %v4676, 3
      %v4679 = vshll.u32 %v4311, 16
      %v4681 = vrot.slane %v4679, 4
      %v4682 = vor.u32 %v4678, %v4681
      %v4683 = vsel %vm4320, %v4657, %v4682
      %v4685 = vshrl.u32 %v4045, 16
      %v4687 = vrot.slane %v4685, 3
      %v4688 = vshll.u32 %v4045, 16
      %v4690 = vrot.slane %v4688, 4
      %v4691 = vor.u32 %v4687, %v4690
      %v4692 = vsel %vm4320, %v4666, %v4691
      %v4693 = vshrl.u32 %v4180, 16
      %v4695 = vrot.slane %v4693, 3
      %v4696 = vshll.u32 %v4180, 16
      %v4698 = vrot.slane %v4696, 4
      %v4699 = vor.u32 %v4695, %v4698
      %v4700 = vsel %vm4320, %v4674, %v4699
      %v4701 = vshrl.u32 %v4313, 16
      %v4703 = vrot.slane %v4701, 3
      %v4704 = vshll.u32 %v4313, 16
      %v4706 = vrot.slane %v4704, 4
      %v4707 = vor.u32 %v4703, %v4706
      %v4708 = vsel %vm4320, %v4682, %v4707
      %v4710 = vshrl.u32 %v4047, 16
      %v4712 = vrot.slane %v4710, 3
      %v4713 = vshll.u32 %v4047, 16
      %v4715 = vrot.slane %v4713, 4
      %v4716 = vor.u32 %v4712, %v4715
      %v4717 = vsel %vm4320, %v4691, %v4716
      %v4718 = vshrl.u32 %v4182, 16
      %v4720 = vrot.slane %v4718, 3
      %v4721 = vshll.u32 %v4182, 16
      %v4723 = vrot.slane %v4721, 4
      %v4724 = vor.u32 %v4720, %v4723
      %v4725 = vsel %vm4320, %v4699, %v4724
      %v4726 = vshrl.u32 %v4315, 16
      %v4728 = vrot.slane %v4726, 3
      %v4729 = vshll.u32 %v4315, 16
      %v4731 = vrot.slane %v4729, 4
      %v4732 = vor.u32 %v4728, %v4731
      %v4733 = vsel %vm4320, %v4707, %v4732
      %v4735 = vshrl.u32 %v4049, 16
      %v4737 = vrot.slane %v4735, 3
      %v4738 = vshll.u32 %v4049, 16
      %v4740 = vrot.slane %v4738, 4
      %v4741 = vor.u32 %v4737, %v4740
      %v4742 = vsel %vm4320, %v4716, %v4741
      %v4743 = vshrl.u32 %v4184, 16
      %v4745 = vrot.slane %v4743, 3
      %v4746 = vshll.u32 %v4184, 16
      %v4748 = vrot.slane %v4746, 4
      %v4749 = vor.u32 %v4745, %v4748
      %v4750 = vsel %vm4320, %v4724, %v4749
      %v4751 = vshrl.u32 %v4317, 16
      %v4753 = vrot.slane %v4751, 3
      %v4754 = vshll.u32 %v4317, 16
      %v4756 = vrot.slane %v4754, 4
      %v4757 = vor.u32 %v4753, %v4756
      %v4758 = vsel %vm4320, %v4732, %v4757
      %v4760 = vshrl.u32 %v4051, 16
      %v4762 = vrot.slane %v4760, 3
      %v4763 = vshll.u32 %v4051, 16
      %v4765 = vrot.slane %v4763, 4
      %v4766 = vor.u32 %v4762, %v4765
      %v4767 = vsel %vm4320, %v4741, %v4766
      %v4768 = vshrl.u32 %v4186, 16
      %v4770 = vrot.slane %v4768, 3
      %v4771 = vshll.u32 %v4186, 16
      %v4773 = vrot.slane %v4771, 4
      %v4774 = vor.u32 %v4770, %v4773
      %v4775 = vsel %vm4320, %v4749, %v4774
      %v4776 = vshrl.u32 %v4319, 16
      %v4778 = vrot.slane %v4776, 3
      %v4779 = vshll.u32 %v4319, 16
      %v4781 = vrot.slane %v4779, 4
      %v4782 = vor.u32 %v4778, %v4781
      %v4783 = vsel %vm4320, %v4757, %v4782
      %v4785 = vshrl.u32 %v4053, 16
      %v4787 = vrot.slane %v4785, 3
      %v4788 = vshll.u32 %v4053, 16
      %v4790 = vrot.slane %v4788, 4
      %v4791 = vor.u32 %v4787, %v4790
      %v4792 = vsel %vm4320, %v4766, %v4791
      %v4865 = vunpack.c.l.b16 %v1201
      %v4866 = vunpack.c.l.b16 %v1202
      %v4867 = vunpack.c.l.b16 %v1203
      %v4868 = vunpack.c.l.b16 %v1204
      %v4869 = vunpack.c.l.b16 %v1205
      %v4870 = vunpack.c.l.b16 %v1206
      %v4871 = vunpack.c.l.b16 %v1207
      %v4872 = vunpack.c.l.b16 %v1208
      %v4873 = vunpack.c.l.b16 %v1209
      %v4874 = vunpack.c.l.b16 %v1210
      %v4875 = vunpack.c.l.b16 %v1211
      %v4876 = vunpack.c.l.b16 %v1212
      %v4877 = vunpack.c.l.b16 %v1213
      %v4878 = vunpack.c.l.b16 %v1214
      %v4879 = vunpack.c.l.b16 %v1215
      %v4880 = vunpack.c.l.b16 %v1216
      %v4881 = vunpack.c.l.b16 %v1217
      %v4882 = vunpack.c.l.b16 %v1218
      %v4883 = vunpack.c.l.b16 %v1219
      %v4884 = vunpack.c.l.b16 %v1220
      %v4885 = vunpack.c.l.b16 %v1221
      %v4886 = vunpack.c.l.b16 %v1222
      %v4887 = vunpack.c.l.b16 %v1223
      %v4888 = vunpack.c.l.b16 %v1224
      %v4889 = vunpack.c.l.b16 %v1225
      %v4890 = vunpack.c.l.b16 %v1226
      %v4891 = vunpack.c.l.b16 %v1227
      %v4892 = vunpack.c.l.b16 %v1228
      %v4893 = vunpack.c.l.b16 %v1229
      %v4894 = vunpack.c.l.b16 %v1230
      %v4895 = vunpack.c.l.b16 %v1231
      %v4896 = vunpack.c.l.b16 %v1232
      %v4897 = vunpack.c.l.b16 %v1233
      %v4898 = vunpack.c.l.b16 %v1234
      %v4899 = vunpack.c.l.b16 %v1235
      %v4900 = vunpack.c.l.b16 %v1236
      %v4901 = vpack.c.b16 %v4866, %v4865
      %v4902 = vpack.c.b16 %v4868, %v4867
      %v4903 = vpack.c.b16 %v4870, %v4869
      %v4904 = vpack.c.b16 %v4872, %v4871
      %v4905 = vpack.c.b16 %v4874, %v4873
      %v4906 = vpack.c.b16 %v4876, %v4875
      %v4907 = vpack.c.b16 %v4878, %v4877
      %v4908 = vpack.c.b16 %v4880, %v4879
      %v4909 = vpack.c.b16 %v4882, %v4881
      %v4910 = vpack.c.b16 %v4884, %v4883
      %v4911 = vpack.c.b16 %v4886, %v4885
      %v4912 = vpack.c.b16 %v4888, %v4887
      %v4913 = vpack.c.b16 %v4890, %v4889
      %v4914 = vpack.c.b16 %v4892, %v4891
      %v4915 = vpack.c.b16 %v4894, %v4893
      %v4916 = vpack.c.b16 %v4896, %v4895
      %v4917 = vpack.c.b16 %v4898, %v4897
      %v4918 = vpack.c.b16 %v4900, %v4899
      %v4938 = vsel %vm1913, %v4367, 0
      %v4941 = vsel %vm1913, %v4392, 0
      %v4944 = vsel %vm1913, %v4417, 0
      %v4947 = vsel %vm1913, %v4442, 0
      %v4950 = vsel %vm1913, %v4467, 0
      %v4953 = vsel %vm1913, %v4492, 0
      %v4956 = vsel %vm1913, %v4517, 0
      %v4959 = vsel %vm1913, %v4542, 0
      %v4962 = vsel %vm1913, %v4567, 0
      %v4965 = vsel %vm1913, %v4592, 0
      %v4968 = vsel %vm1913, %v4617, 0
      %v4971 = vsel %vm1913, %v4642, 0
      %v4974 = vsel %vm1913, %v4667, 0
      %v4977 = vsel %vm1913, %v4692, 0
      %v4980 = vsel %vm1913, %v4717, 0
      %v4983 = vsel %vm1913, %v4742, 0
      %v4986 = vsel %vm1913, %v4767, 0
      %v4989 = vsel %vm1913, %v4792, 0
      %4991 = vmatprep.subr.bf16.mxu0 0
      %4992 = vmatpush1.bf16.msra.mxu0 %v4908
      %4993 = vmatprep.subr.bf16.mxu0 0
      %4994 = vmatpush1.bf16.msra.mxu0 %v4907
      %4995 = vmatprep.subr.bf16.mxu0 0
      %4996 = vmatpush1.bf16.msra.mxu0 %v4906
      %4997 = vmatprep.subr.bf16.mxu0 0
      %4998 = vmatpush1.bf16.msra.mxu0 %v4905
      %4999 = vmatprep.subr.bf16.mxu0 0
      %5000 = vmatpush1.bf16.msra.mxu0 %v4904
      %5001 = vmatprep.subr.bf16.mxu0 0
      %5002 = vmatpush1.bf16.msra.mxu0 %v4903
      %5003 = vmatprep.subr.bf16.mxu0 0
      %5004 = vmatpush1.bf16.msra.mxu0 %v4902
      %5005 = vmatprep.subr.bf16.mxu0 0
      %5006 = vmatpush1.bf16.msra.mxu0 %v4901
      %5007 = vmatprep.subr.bf16.mxu0 0
      %5008 = vmatpush2.bf16.msra.mxu0 %v4916
      %5009 = vmatprep.subr.bf16.mxu0 0
      %5010 = vmatpush2.bf16.msra.mxu0 %v4915
      %5011 = vmatprep.subr.bf16.mxu0 0
      %5012 = vmatpush2.bf16.msra.mxu0 %v4914
      %5013 = vmatprep.subr.bf16.mxu0 0
      %5014 = vmatpush2.bf16.msra.mxu0 %v4913
      %5015 = vmatprep.subr.bf16.mxu0 0
      %5016 = vmatpush2.bf16.msra.mxu0 %v4912
      %5017 = vmatprep.subr.bf16.mxu0 0
      %5018 = vmatpush2.bf16.msra.mxu0 %v4911
      %5019 = vmatprep.subr.bf16.mxu0 0
      %5020 = vmatpush2.bf16.msra.mxu0 %v4910
      %5021 = vmatprep.subr.bf16.mxu0 0
      %5022 = vmatpush2.bf16.msra.mxu0 %v4909
      %5023 = vmatprep.mubr.bf16.mxu0 %v4350
      %5024 = vmatmul.mubr.bf16.gmra.mxu0 %v4335
      %v5025 = vpop.f32.mrf.mxu0
      %v5026 = vadd.f32 0.0, %v5025
      %v5027 = vpop.f32.mrf.mxu0
      %v5028 = vpop.f32.mrf.mxu0
      %v5029 = vadd.f32 0.0, %v5028
      %v5030 = vpop.f32.mrf.mxu0
      %5031 = vmatprep.mubr.bf16.mxu0 %v4383
      %5032 = vmatmul.mubr.bf16.gmra.mxu0 %v4375
      %v5033 = vpop.f32.mrf.mxu0
      %v5034 = vadd.f32 0.0, %v5033
      %v5035 = vpop.f32.mrf.mxu0
      %v5036 = vpop.f32.mrf.mxu0
      %v5037 = vadd.f32 0.0, %v5036
      %v5038 = vpop.f32.mrf.mxu0
      %5039 = vmatprep.mubr.bf16.mxu0 %v4408
      %5040 = vmatmul.mubr.bf16.gmra.mxu0 %v4400
      %v5041 = vpop.f32.mrf.mxu0
      %v5042 = vadd.f32 0.0, %v5041
      %v5043 = vpop.f32.mrf.mxu0
      %v5044 = vpop.f32.mrf.mxu0
      %v5045 = vadd.f32 0.0, %v5044
      %v5046 = vpop.f32.mrf.mxu0
      %5047 = vmatprep.mubr.bf16.mxu0 %v4433
      %5048 = vmatmul.mubr.bf16.gmra.mxu0 %v4425
      %v5049 = vpop.f32.mrf.mxu0
      %v5050 = vadd.f32 0.0, %v5049
      %v5051 = vpop.f32.mrf.mxu0
      %v5052 = vpop.f32.mrf.mxu0
      %v5053 = vadd.f32 0.0, %v5052
      %v5054 = vpop.f32.mrf.mxu0
      %5055 = vmatprep.mubr.bf16.mxu0 %v4458
      %5056 = vmatmul.mubr.bf16.gmra.mxu0 %v4450
      %v5057 = vpop.f32.mrf.mxu0
      %v5058 = vadd.f32 0.0, %v5057
      %v5059 = vpop.f32.mrf.mxu0
      %v5060 = vpop.f32.mrf.mxu0
      %v5061 = vadd.f32 0.0, %v5060
      %v5062 = vpop.f32.mrf.mxu0
      %5063 = vmatprep.mubr.bf16.mxu0 %v4483
      %5064 = vmatmul.mubr.bf16.gmra.mxu0 %v4475
      %v5065 = vpop.f32.mrf.mxu0
      %v5066 = vadd.f32 0.0, %v5065
      %v5067 = vpop.f32.mrf.mxu0
      %v5068 = vpop.f32.mrf.mxu0
      %v5069 = vadd.f32 0.0, %v5068
      %v5070 = vpop.f32.mrf.mxu0
      %5071 = vmatprep.mubr.bf16.mxu0 %v4508
      %5072 = vmatmul.mubr.bf16.gmra.mxu0 %v4500
      %v5073 = vpop.f32.mrf.mxu0
      %v5074 = vadd.f32 0.0, %v5073
      %v5075 = vpop.f32.mrf.mxu0
      %v5076 = vpop.f32.mrf.mxu0
      %v5077 = vadd.f32 0.0, %v5076
      %v5078 = vpop.f32.mrf.mxu0
      %5079 = vmatprep.mubr.bf16.mxu0 %v4533
      %5080 = vmatmul.mubr.bf16.gmra.mxu0 %v4525
      %v5081 = vpop.f32.mrf.mxu0
      %v5082 = vadd.f32 0.0, %v5081
      %v5083 = vpop.f32.mrf.mxu0
      %v5084 = vpop.f32.mrf.mxu0
      %v5085 = vadd.f32 0.0, %v5084
      %v5086 = vpop.f32.mrf.mxu0
      %5087 = vmatprep.mubr.bf16.mxu0 %v4558
      %5088 = vmatmul.mubr.bf16.gmra.mxu0 %v4550
      %v5089 = vpop.f32.mrf.mxu0
      %v5090 = vadd.f32 0.0, %v5089
      %v5091 = vpop.f32.mrf.mxu0
      %v5092 = vpop.f32.mrf.mxu0
      %v5093 = vadd.f32 0.0, %v5092
      %v5094 = vpop.f32.mrf.mxu0
      %5095 = vmatprep.mubr.bf16.mxu0 %v4583
      %5096 = vmatmul.mubr.bf16.gmra.mxu0 %v4575
      %v5097 = vpop.f32.mrf.mxu0
      %v5098 = vadd.f32 0.0, %v5097
      %v5099 = vpop.f32.mrf.mxu0
      %v5100 = vpop.f32.mrf.mxu0
      %v5101 = vadd.f32 0.0, %v5100
      %v5102 = vpop.f32.mrf.mxu0
      %5103 = vmatprep.mubr.bf16.mxu0 %v4608
      %5104 = vmatmul.mubr.bf16.gmra.mxu0 %v4600
      %v5105 = vpop.f32.mrf.mxu0
      %v5106 = vadd.f32 0.0, %v5105
      %v5107 = vpop.f32.mrf.mxu0
      %v5108 = vpop.f32.mrf.mxu0
      %v5109 = vadd.f32 0.0, %v5108
      %v5110 = vpop.f32.mrf.mxu0
      %5111 = vmatprep.mubr.bf16.mxu0 %v4633
      %5112 = vmatmul.mubr.bf16.gmra.mxu0 %v4625
      %v5113 = vpop.f32.mrf.mxu0
      %v5114 = vadd.f32 0.0, %v5113
      %v5115 = vpop.f32.mrf.mxu0
      %v5116 = vpop.f32.mrf.mxu0
      %v5117 = vadd.f32 0.0, %v5116
      %v5118 = vpop.f32.mrf.mxu0
      %5119 = vmatprep.mubr.bf16.mxu0 %v4658
      %5120 = vmatmul.mubr.bf16.gmra.mxu0 %v4650
      %v5121 = vpop.f32.mrf.mxu0
      %v5122 = vadd.f32 0.0, %v5121
      %v5123 = vpop.f32.mrf.mxu0
      %v5124 = vpop.f32.mrf.mxu0
      %v5125 = vadd.f32 0.0, %v5124
      %v5126 = vpop.f32.mrf.mxu0
      %5127 = vmatprep.mubr.bf16.mxu0 %v4683
      %5128 = vmatmul.mubr.bf16.gmra.mxu0 %v4675
      %v5129 = vpop.f32.mrf.mxu0
      %v5130 = vadd.f32 0.0, %v5129
      %v5131 = vpop.f32.mrf.mxu0
      %v5132 = vpop.f32.mrf.mxu0
      %v5133 = vadd.f32 0.0, %v5132
      %v5134 = vpop.f32.mrf.mxu0
      %5135 = vmatprep.mubr.bf16.mxu0 %v4708
      %5136 = vmatmul.mubr.bf16.gmra.mxu0 %v4700
      %v5137 = vpop.f32.mrf.mxu0
      %v5138 = vadd.f32 0.0, %v5137
      %v5139 = vpop.f32.mrf.mxu0
      %v5140 = vpop.f32.mrf.mxu0
      %v5141 = vadd.f32 0.0, %v5140
      %v5142 = vpop.f32.mrf.mxu0
      %5143 = vmatprep.mubr.bf16.mxu0 %v4733
      %5144 = vmatmul.mubr.bf16.gmra.mxu0 %v4725
      %v5145 = vpop.f32.mrf.mxu0
      %v5146 = vadd.f32 0.0, %v5145
      %v5147 = vpop.f32.mrf.mxu0
      %v5148 = vpop.f32.mrf.mxu0
      %v5149 = vadd.f32 0.0, %v5148
      %v5150 = vpop.f32.mrf.mxu0
      %5151 = vmatprep.mubr.bf16.mxu0 %v4758
      %5152 = vmatmul.mubr.bf16.gmra.mxu0 %v4750
      %v5153 = vpop.f32.mrf.mxu0
      %v5154 = vadd.f32 0.0, %v5153
      %v5155 = vpop.f32.mrf.mxu0
      %v5156 = vpop.f32.mrf.mxu0
      %v5157 = vadd.f32 0.0, %v5156
      %v5158 = vpop.f32.mrf.mxu0
      %5159 = vmatprep.mubr.bf16.mxu0 %v4783
      %5160 = vmatmul.mubr.bf16.gmra.mxu0 %v4775
      %v5161 = vpop.f32.mrf.mxu0
      %v5162 = vadd.f32 0.0, %v5161
      %v5163 = vpop.f32.mrf.mxu0
      %v5164 = vpop.f32.mrf.mxu0
      %v5165 = vadd.f32 0.0, %v5164
      %v5166 = vpop.f32.mrf.mxu0
      %5167 = vdwg.mxu0
      %5168 = vmatprep.subr.bf16.mxu0 0
      %5169 = vmatpush1.bf16.msra.mxu0 0
      %5170 = vmatprep.subr.bf16.mxu0 0
      %5171 = vmatpush1.bf16.msra.mxu0 0
      %5172 = vmatprep.subr.bf16.mxu0 0
      %5173 = vmatpush1.bf16.msra.mxu0 0
      %5174 = vmatprep.subr.bf16.mxu0 0
      %5175 = vmatpush1.bf16.msra.mxu0 0
      %5176 = vmatprep.subr.bf16.mxu0 0
      %5177 = vmatpush1.bf16.msra.mxu0 0
      %5178 = vmatprep.subr.bf16.mxu0 0
      %5179 = vmatpush1.bf16.msra.mxu0 0
      %5180 = vmatprep.subr.bf16.mxu0 0
      %5181 = vmatpush1.bf16.msra.mxu0 %v4918
      %5182 = vmatprep.subr.bf16.mxu0 0
      %5183 = vmatpush1.bf16.msra.mxu0 %v4917
      %5184 = vmatprep.subr.bf16.mxu0 0
      %5185 = vmatpush2.bf16.msra.mxu0 0
      %5186 = vmatprep.subr.bf16.mxu0 0
      %5187 = vmatpush2.bf16.msra.mxu0 0
      %5188 = vmatprep.subr.bf16.mxu0 0
      %5189 = vmatpush2.bf16.msra.mxu0 0
      %5190 = vmatprep.subr.bf16.mxu0 0
      %5191 = vmatpush2.bf16.msra.mxu0 0
      %5192 = vmatprep.subr.bf16.mxu0 0
      %5193 = vmatpush2.bf16.msra.mxu0 0
      %5194 = vmatprep.subr.bf16.mxu0 0
      %5195 = vmatpush2.bf16.msra.mxu0 0
      %5196 = vmatprep.subr.bf16.mxu0 0
      %5197 = vmatpush2.bf16.msra.mxu0 0
      %5198 = vmatprep.subr.bf16.mxu0 0
      %5199 = vmatpush2.bf16.msra.mxu0 0
      %5200 = vmatprep.mubr.bf16.mxu0 0
      %5201 = vmatmul.mubr.bf16.gmra.mxu0 %v4938
      %v5202 = vpop.f32.mrf.mxu0
      %v5203 = vadd.f32 %v5026, %v5202
      %v5204 = vpop.f32.mrf.mxu0
      %v5205 = vpop.f32.mrf.mxu0
      %v5206 = vadd.f32 %v5029, %v5205
      %v5207 = vpop.f32.mrf.mxu0
      %5208 = vmatprep.mubr.bf16.mxu0 0
      %5209 = vmatmul.mubr.bf16.gmra.mxu0 %v4941
      %v5210 = vpop.f32.mrf.mxu0
      %v5211 = vadd.f32 %v5034, %v5210
      %v5212 = vpop.f32.mrf.mxu0
      %v5213 = vpop.f32.mrf.mxu0
      %v5214 = vadd.f32 %v5037, %v5213
      %v5215 = vpop.f32.mrf.mxu0
      %5216 = vmatprep.mubr.bf16.mxu0 0
      %5217 = vmatmul.mubr.bf16.gmra.mxu0 %v4944
      %v5218 = vpop.f32.mrf.mxu0
      %v5219 = vadd.f32 %v5042, %v5218
      %v5220 = vpop.f32.mrf.mxu0
      %v5221 = vpop.f32.mrf.mxu0
      %v5222 = vadd.f32 %v5045, %v5221
      %v5223 = vpop.f32.mrf.mxu0
      %5224 = vmatprep.mubr.bf16.mxu0 0
      %5225 = vmatmul.mubr.bf16.gmra.mxu0 %v4947
      %v5226 = vpop.f32.mrf.mxu0
      %v5227 = vadd.f32 %v5050, %v5226
      %v5228 = vpop.f32.mrf.mxu0
      %v5229 = vpop.f32.mrf.mxu0
      %v5230 = vadd.f32 %v5053, %v5229
      %v5231 = vpop.f32.mrf.mxu0
      %5232 = vmatprep.mubr.bf16.mxu0 0
      %5233 = vmatmul.mubr.bf16.gmra.mxu0 %v4950
      %v5234 = vpop.f32.mrf.mxu0
      %v5235 = vadd.f32 %v5058, %v5234
      %v5236 = vpop.f32.mrf.mxu0
      %v5237 = vpop.f32.mrf.mxu0
      %v5238 = vadd.f32 %v5061, %v5237
      %v5239 = vpop.f32.mrf.mxu0
      %5240 = vmatprep.mubr.bf16.mxu0 0
      %5241 = vmatmul.mubr.bf16.gmra.mxu0 %v4953
      %v5242 = vpop.f32.mrf.mxu0
      %v5243 = vadd.f32 %v5066, %v5242
      %v5244 = vpop.f32.mrf.mxu0
      %v5245 = vpop.f32.mrf.mxu0
      %v5246 = vadd.f32 %v5069, %v5245
      %v5247 = vpop.f32.mrf.mxu0
      %5248 = vmatprep.mubr.bf16.mxu0 0
      %5249 = vmatmul.mubr.bf16.gmra.mxu0 %v4956
      %v5250 = vpop.f32.mrf.mxu0
      %v5251 = vadd.f32 %v5074, %v5250
      %v5252 = vpop.f32.mrf.mxu0
      %v5253 = vpop.f32.mrf.mxu0
      %v5254 = vadd.f32 %v5077, %v5253
      %v5255 = vpop.f32.mrf.mxu0
      %5256 = vmatprep.mubr.bf16.mxu0 0
      %5257 = vmatmul.mubr.bf16.gmra.mxu0 %v4959
      %v5258 = vpop.f32.mrf.mxu0
      %v5259 = vadd.f32 %v5082, %v5258
      %v5260 = vpop.f32.mrf.mxu0
      %v5261 = vpop.f32.mrf.mxu0
      %v5262 = vadd.f32 %v5085, %v5261
      %v5263 = vpop.f32.mrf.mxu0
      %5264 = vmatprep.mubr.bf16.mxu0 0
      %5265 = vmatmul.mubr.bf16.gmra.mxu0 %v4962
      %v5266 = vpop.f32.mrf.mxu0
      %v5267 = vadd.f32 %v5090, %v5266
      %v5268 = vpop.f32.mrf.mxu0
      %v5269 = vpop.f32.mrf.mxu0
      %v5270 = vadd.f32 %v5093, %v5269
      %v5271 = vpop.f32.mrf.mxu0
      %5272 = vmatprep.mubr.bf16.mxu0 0
      %5273 = vmatmul.mubr.bf16.gmra.mxu0 %v4965
      %v5274 = vpop.f32.mrf.mxu0
      %v5275 = vadd.f32 %v5098, %v5274
      %v5276 = vpop.f32.mrf.mxu0
      %v5277 = vpop.f32.mrf.mxu0
      %v5278 = vadd.f32 %v5101, %v5277
      %v5279 = vpop.f32.mrf.mxu0
      %5280 = vmatprep.mubr.bf16.mxu0 0
      %5281 = vmatmul.mubr.bf16.gmra.mxu0 %v4968
      %v5282 = vpop.f32.mrf.mxu0
      %v5283 = vadd.f32 %v5106, %v5282
      %v5284 = vpop.f32.mrf.mxu0
      %v5285 = vpop.f32.mrf.mxu0
      %v5286 = vadd.f32 %v5109, %v5285
      %v5287 = vpop.f32.mrf.mxu0
      %5288 = vmatprep.mubr.bf16.mxu0 0
      %5289 = vmatmul.mubr.bf16.gmra.mxu0 %v4971
      %v5290 = vpop.f32.mrf.mxu0
      %v5291 = vadd.f32 %v5114, %v5290
      %v5292 = vpop.f32.mrf.mxu0
      %v5293 = vpop.f32.mrf.mxu0
      %v5294 = vadd.f32 %v5117, %v5293
      %v5295 = vpop.f32.mrf.mxu0
      %5296 = vmatprep.mubr.bf16.mxu0 0
      %5297 = vmatmul.mubr.bf16.gmra.mxu0 %v4974
      %v5298 = vpop.f32.mrf.mxu0
      %v5299 = vadd.f32 %v5122, %v5298
      %v5300 = vpop.f32.mrf.mxu0
      %v5301 = vpop.f32.mrf.mxu0
      %v5302 = vadd.f32 %v5125, %v5301
      %v5303 = vpop.f32.mrf.mxu0
      %5304 = vmatprep.mubr.bf16.mxu0 0
      %5305 = vmatmul.mubr.bf16.gmra.mxu0 %v4977
      %v5306 = vpop.f32.mrf.mxu0
      %v5307 = vadd.f32 %v5130, %v5306
      %v5308 = vpop.f32.mrf.mxu0
      %v5309 = vpop.f32.mrf.mxu0
      %v5310 = vadd.f32 %v5133, %v5309
      %v5311 = vpop.f32.mrf.mxu0
      %5312 = vmatprep.mubr.bf16.mxu0 0
      %5313 = vmatmul.mubr.bf16.gmra.mxu0 %v4980
      %v5314 = vpop.f32.mrf.mxu0
      %v5315 = vadd.f32 %v5138, %v5314
      %v5316 = vpop.f32.mrf.mxu0
      %v5317 = vpop.f32.mrf.mxu0
      %v5318 = vadd.f32 %v5141, %v5317
      %v5319 = vpop.f32.mrf.mxu0
      %5320 = vmatprep.mubr.bf16.mxu0 0
      %5321 = vmatmul.mubr.bf16.gmra.mxu0 %v4983
      %v5322 = vpop.f32.mrf.mxu0
      %v5323 = vadd.f32 %v5146, %v5322
      %v5324 = vpop.f32.mrf.mxu0
      %v5325 = vpop.f32.mrf.mxu0
      %v5326 = vadd.f32 %v5149, %v5325
      %v5327 = vpop.f32.mrf.mxu0
      %5328 = vmatprep.mubr.bf16.mxu0 0
      %5329 = vmatmul.mubr.bf16.gmra.mxu0 %v4986
      %v5330 = vpop.f32.mrf.mxu0
      %v5331 = vadd.f32 %v5154, %v5330
      %v5332 = vpop.f32.mrf.mxu0
      %v5333 = vpop.f32.mrf.mxu0
      %v5334 = vadd.f32 %v5157, %v5333
      %v5335 = vpop.f32.mrf.mxu0
      %5336 = vmatprep.mubr.bf16.mxu0 0
      %5337 = vmatmul.mubr.bf16.gmra.mxu0 %v4989
      %v5338 = vpop.f32.mrf.mxu0
      %v5339 = vadd.f32 %v5162, %v5338
      %v5340 = vpop.f32.mrf.mxu0
      %v5341 = vpop.f32.mrf.mxu0
      %v5342 = vadd.f32 %v5165, %v5341
      %v5343 = vpop.f32.mrf.mxu0
      %5344 = vdwg.mxu0
      %v5345 = vld [vmem:[#allocation2 + $0x1a] sm:$0xff]
      %v5346 = vld [vmem:[#allocation2 + $0x22] sm:$0xff]
      %v5347 = vld [vmem:[#allocation2 + $0x2a] sm:$0xff]
      %v5348 = vld [vmem:[#allocation2 + $0x32] sm:$0xff]
      %v5349 = vld [vmem:[#allocation2 + $0x3a] sm:$0xff]
      %v5350 = vld [vmem:[#allocation2 + $0x42] sm:$0xff]
      %v5351 = vld [vmem:[#allocation2 + $0x4a] sm:$0xff]
      %v5352 = vld [vmem:[#allocation2 + $0x52] sm:$0xff]
      %v5353 = vld [vmem:[#allocation2 + $0x5a] sm:$0xff]
      %v5354 = vld [vmem:[#allocation2 + $0x62] sm:$0xff]
      %v5355 = vld [vmem:[#allocation2 + $0x6a] sm:$0xff]
      %v5356 = vld [vmem:[#allocation2 + $0x72] sm:$0xff]
      %v5357 = vld [vmem:[#allocation2 + $0x7a] sm:$0xff]
      %v5358 = vld [vmem:[#allocation2 + $0x82] sm:$0xff]
      %v5359 = vld [vmem:[#allocation2 + $0x8a] sm:$0xff]
      %v5360 = vld [vmem:[#allocation2 + $0x92] sm:$0xff]
      %v5361 = vld [vmem:[#allocation2 + $0x9a] sm:$0xff]
      %v5362 = vld [vmem:[#allocation2 + $0xa2] sm:$0xff]
      %v5363 = vld [vmem:[#allocation2 + $0xaa] sm:$0xff]
      %v5364 = vld [vmem:[#allocation2 + $0xb2] sm:$0xff]
      %v5365 = vld [vmem:[#allocation2 + $0xba] sm:$0xff]
      %v5366 = vld [vmem:[#allocation2 + $0xc2] sm:$0xff]
      %v5367 = vld [vmem:[#allocation2 + $0xca] sm:$0xff]
      %v5368 = vld [vmem:[#allocation2 + $0xd2] sm:$0xff]
      %v5369 = vld [vmem:[#allocation2 + $0xda] sm:$0xff]
      %v5370 = vld [vmem:[#allocation2 + $0xe2] sm:$0xff]
      %v5371 = vld [vmem:[#allocation2 + $0xea] sm:$0xff]
      %v5372 = vld [vmem:[#allocation2 + $0xf2] sm:$0xff]
      %v5373 = vld [vmem:[#allocation2 + $0xfa] sm:$0xff]
      %v5374 = vld [vmem:[#allocation2 + $0x102] sm:$0xff]
      %v5375 = vld [vmem:[#allocation2 + $0x10a] sm:$0xff]
      %v5376 = vld [vmem:[#allocation2 + $0x112] sm:$0xff]
      %v5377 = vld [vmem:[#allocation2 + $0x11a] sm:$0xff]
      %v5378 = vld [vmem:[#allocation2 + $0x122] sm:$0xff]
      %v5379 = vld [vmem:[#allocation2 + $0x12a] sm:$0xff]
      %v5380 = vld [vmem:[#allocation2 + $0x132] sm:$0xff]
      %v5381 = vadd.f32 %v5345, %v5203
      %v5382 = vadd.f32 %v5346, %v5206
      %v5383 = vadd.f32 %v5347, %v5211
      %v5384 = vadd.f32 %v5348, %v5214
      %v5385 = vadd.f32 %v5349, %v5219
      %v5386 = vadd.f32 %v5350, %v5222
      %v5387 = vadd.f32 %v5351, %v5227
      %v5388 = vadd.f32 %v5352, %v5230
      %v5389 = vadd.f32 %v5353, %v5235
      %v5390 = vadd.f32 %v5354, %v5238
      %v5391 = vadd.f32 %v5355, %v5243
      %v5392 = vadd.f32 %v5356, %v5246
      %v5393 = vadd.f32 %v5357, %v5251
      %v5394 = vadd.f32 %v5358, %v5254
      %v5395 = vadd.f32 %v5359, %v5259
      %v5396 = vadd.f32 %v5360, %v5262
      %v5397 = vadd.f32 %v5361, %v5267
      %v5398 = vadd.f32 %v5362, %v5270
      %v5399 = vadd.f32 %v5363, %v5275
      %v5400 = vadd.f32 %v5364, %v5278
      %v5401 = vadd.f32 %v5365, %v5283
      %v5402 = vadd.f32 %v5366, %v5286
      %v5403 = vadd.f32 %v5367, %v5291
      %v5404 = vadd.f32 %v5368, %v5294
      %v5405 = vadd.f32 %v5369, %v5299
      %v5406 = vadd.f32 %v5370, %v5302
      %v5407 = vadd.f32 %v5371, %v5307
      %v5408 = vadd.f32 %v5372, %v5310
      %v5409 = vadd.f32 %v5373, %v5315
      %v5410 = vadd.f32 %v5374, %v5318
      %v5411 = vadd.f32 %v5375, %v5323
      %v5412 = vadd.f32 %v5376, %v5326
      %v5413 = vadd.f32 %v5377, %v5331
      %v5414 = vadd.f32 %v5378, %v5334
      %v5415 = vadd.f32 %v5379, %v5339
      %v5416 = vadd.f32 %v5380, %v5342
      %v5418 = vlaneseq
      %v5419 = vshrl.u32 %v5418, 7
      %v5420 = vsub.s32 0, %v5419
      %v5421 = vrot.slane %v1238, %v5420
      %v5423 = vadd.f32 %v5381, %v5421
      %v5424 = vadd.f32 %v5382, %v5421
      %v5425 = vadd.f32 %v5383, %v5421
      %v5426 = vadd.f32 %v5384, %v5421
      %v5427 = vadd.f32 %v5385, %v5421
      %v5428 = vadd.f32 %v5386, %v5421
      %v5429 = vadd.f32 %v5387, %v5421
      %v5430 = vadd.f32 %v5388, %v5421
      %v5431 = vadd.f32 %v5389, %v5421
      %v5432 = vadd.f32 %v5390, %v5421
      %v5433 = vadd.f32 %v5391, %v5421
      %v5434 = vadd.f32 %v5392, %v5421
      %v5435 = vadd.f32 %v5393, %v5421
      %v5436 = vadd.f32 %v5394, %v5421
      %v5437 = vadd.f32 %v5395, %v5421
      %v5438 = vadd.f32 %v5396, %v5421
      %v5439 = vadd.f32 %v5397, %v5421
      %v5440 = vadd.f32 %v5398, %v5421
      %v5441 = vadd.f32 %v5399, %v5421
      %v5442 = vadd.f32 %v5400, %v5421
      %v5443 = vadd.f32 %v5401, %v5421
      %v5444 = vadd.f32 %v5402, %v5421
      %v5445 = vadd.f32 %v5403, %v5421
      %v5446 = vadd.f32 %v5404, %v5421
      %v5447 = vadd.f32 %v5405, %v5421
      %v5448 = vadd.f32 %v5406, %v5421
      %v5449 = vadd.f32 %v5407, %v5421
      %v5450 = vadd.f32 %v5408, %v5421
      %v5451 = vadd.f32 %v5409, %v5421
      %v5452 = vadd.f32 %v5410, %v5421
      %v5453 = vadd.f32 %v5411, %v5421
      %v5454 = vadd.f32 %v5412, %v5421
      %v5455 = vadd.f32 %v5413, %v5421
      %v5456 = vadd.f32 %v5414, %v5421
      %v5457 = vadd.f32 %v5415, %v5421
      %v5458 = vadd.f32 %v5416, %v5421
      %v5459 = vsel %vm2798, %v5423, 0.0
      %v5460 = vsel %vm2799, %v5424, 0.0
      %v5461 = vsel %vm2800, %v5425, 0.0
      %v5462 = vsel %vm2801, %v5426, 0.0
      %v5463 = vsel %vm2802, %v5427, 0.0
      %v5464 = vsel %vm2803, %v5428, 0.0
      %v5465 = vsel %vm2804, %v5429, 0.0
      %v5466 = vsel %vm2805, %v5430, 0.0
      %v5467 = vsel %vm2806, %v5431, 0.0
      %v5468 = vsel %vm2807, %v5432, 0.0
      %v5469 = vsel %vm2808, %v5433, 0.0
      %v5470 = vsel %vm2809, %v5434, 0.0
      %v5471 = vsel %vm2810, %v5435, 0.0
      %v5472 = vsel %vm2811, %v5436, 0.0
      %v5473 = vsel %vm2812, %v5437, 0.0
      %v5474 = vsel %vm2813, %v5438, 0.0
      %v5475 = vsel %vm2814, %v5439, 0.0
      %v5476 = vsel %vm2815, %v5440, 0.0
      %v5477 = vsel %vm2816, %v5441, 0.0
      %v5478 = vsel %vm2817, %v5442, 0.0
      %v5479 = vsel %vm2818, %v5443, 0.0
      %v5480 = vsel %vm2819, %v5444, 0.0
      %v5481 = vsel %vm2820, %v5445, 0.0
      %v5482 = vsel %vm2821, %v5446, 0.0
      %v5483 = vsel %vm2822, %v5447, 0.0
      %v5484 = vsel %vm2823, %v5448, 0.0
      %v5485 = vsel %vm2824, %v5449, 0.0
      %v5486 = vsel %vm2825, %v5450, 0.0
      %v5487 = vsel %vm2826, %v5451, 0.0
      %v5488 = vsel %vm2827, %v5452, 0.0
      %v5489 = vsel %vm2828, %v5453, 0.0
      %v5490 = vsel %vm2829, %v5454, 0.0
      %v5491 = vsel %vm2830, %v5455, 0.0
      %v5492 = vsel %vm2831, %v5456, 0.0
      %v5493 = vsel %vm2832, %v5457, 0.0
      %v5494 = vsel %vm2833, %v5458, 0.0
      %5495 = vst.msk [vmem:[#allocation2 + $0x1a] sm:$0xff] %vm1913, %v5459
      %5496 = vst.msk [vmem:[#allocation2 + $0x22] sm:$0xff] %vm1913, %v5460
      %5497 = vst.msk [vmem:[#allocation2 + $0x2a] sm:$0xff] %vm1913, %v5461
      %5498 = vst.msk [vmem:[#allocation2 + $0x32] sm:$0xff] %vm1913, %v5462
      %5499 = vst.msk [vmem:[#allocation2 + $0x3a] sm:$0xff] %vm1913, %v5463
      %5500 = vst.msk [vmem:[#allocation2 + $0x42] sm:$0xff] %vm1913, %v5464
      %5501 = vst.msk [vmem:[#allocation2 + $0x4a] sm:$0xff] %vm1913, %v5465
      %5502 = vst.msk [vmem:[#allocation2 + $0x52] sm:$0xff] %vm1913, %v5466
      %5503 = vst.msk [vmem:[#allocation2 + $0x5a] sm:$0xff] %vm1913, %v5467
      %5504 = vst.msk [vmem:[#allocation2 + $0x62] sm:$0xff] %vm1913, %v5468
      %5505 = vst.msk [vmem:[#allocation2 + $0x6a] sm:$0xff] %vm1913, %v5469
      %5506 = vst.msk [vmem:[#allocation2 + $0x72] sm:$0xff] %vm1913, %v5470
      %5507 = vst.msk [vmem:[#allocation2 + $0x7a] sm:$0xff] %vm1913, %v5471
      %5508 = vst.msk [vmem:[#allocation2 + $0x82] sm:$0xff] %vm1913, %v5472
      %5509 = vst.msk [vmem:[#allocation2 + $0x8a] sm:$0xff] %vm1913, %v5473
      %5510 = vst.msk [vmem:[#allocation2 + $0x92] sm:$0xff] %vm1913, %v5474
      %5511 = vst.msk [vmem:[#allocation2 + $0x9a] sm:$0xff] %vm1913, %v5475
      %5512 = vst.msk [vmem:[#allocation2 + $0xa2] sm:$0xff] %vm1913, %v5476
      %5513 = vst.msk [vmem:[#allocation2 + $0xaa] sm:$0xff] %vm1913, %v5477
      %5514 = vst.msk [vmem:[#allocation2 + $0xb2] sm:$0xff] %vm1913, %v5478
      %5515 = vst.msk [vmem:[#allocation2 + $0xba] sm:$0xff] %vm1913, %v5479
      %5516 = vst.msk [vmem:[#allocation2 + $0xc2] sm:$0xff] %vm1913, %v5480
      %5517 = vst.msk [vmem:[#allocation2 + $0xca] sm:$0xff] %vm1913, %v5481
      %5518 = vst.msk [vmem:[#allocation2 + $0xd2] sm:$0xff] %vm1913, %v5482
      %5519 = vst.msk [vmem:[#allocation2 + $0xda] sm:$0xff] %vm1913, %v5483
      %5520 = vst.msk [vmem:[#allocation2 + $0xe2] sm:$0xff] %vm1913, %v5484
      %5521 = vst.msk [vmem:[#allocation2 + $0xea] sm:$0xff] %vm1913, %v5485
      %5522 = vst.msk [vmem:[#allocation2 + $0xf2] sm:$0xff] %vm1913, %v5486
      %5523 = vst.msk [vmem:[#allocation2 + $0xfa] sm:$0xff] %vm1913, %v5487
      %5524 = vst.msk [vmem:[#allocation2 + $0x102] sm:$0xff] %vm1913, %v5488
      %5525 = vst.msk [vmem:[#allocation2 + $0x10a] sm:$0xff] %vm1913, %v5489
      %5526 = vst.msk [vmem:[#allocation2 + $0x112] sm:$0xff] %vm1913, %v5490
      %5527 = vst.msk [vmem:[#allocation2 + $0x11a] sm:$0xff] %vm1913, %v5491
      %5528 = vst.msk [vmem:[#allocation2 + $0x122] sm:$0xff] %vm1913, %v5492
      %5529 = vst.msk [vmem:[#allocation2 + $0x12a] sm:$0xff] %vm1913, %v5493
      %5530 = vst.msk [vmem:[#allocation2 + $0x132] sm:$0xff] %vm1913, %v5494
      %p5531 = scmp.eq.s32.totalorder %s21, 3
      // Predicated region
      $region45: #{content_extractor_forward.1} parent=39 // pred_check
        %p5532 = pneg %p5531
      $region46: #{content_extractor_forward.1} parent=39 // pred_check_branch
        %5534 = sbr.rel (%p5532) target = $region48
      $region47: #{content_extractor_forward.1} parent=39 // pred_region
        %v5535 = vld [vmem:[#allocation2 + $0x8] sm:$0xff]
        %v5536 = vld [vmem:[#allocation2 + $0x10] sm:$0xff]
        %v5537 = vld [vmem:[#allocation2 + $0x18] sm:$0xff]
        %v5538 = vld [vmem:[#allocation2 + $0x20] sm:$0xff]
        %v5539 = vld [vmem:[#allocation2 + $0x28] sm:$0xff]
        %v5540 = vld [vmem:[#allocation2 + $0x30] sm:$0xff]
        %v5541 = vld [vmem:[#allocation2 + $0x38] sm:$0xff]
        %v5542 = vld [vmem:[#allocation2 + $0x40] sm:$0xff]
        %v5543 = vld [vmem:[#allocation2 + $0x48] sm:$0xff]
        %v5544 = vld [vmem:[#allocation2 + $0x50] sm:$0xff]
        %v5545 = vld [vmem:[#allocation2 + $0x58] sm:$0xff]
        %v5546 = vld [vmem:[#allocation2 + $0x60] sm:$0xff]
        %v5547 = vld [vmem:[#allocation2 + $0x68] sm:$0xff]
        %v5548 = vld [vmem:[#allocation2 + $0x70] sm:$0xff]
        %v5549 = vld [vmem:[#allocation2 + $0x78] sm:$0xff]
        %v5550 = vld [vmem:[#allocation2 + $0x80] sm:$0xff]
        %v5551 = vld [vmem:[#allocation2 + $0x88] sm:$0xff]
        %v5552 = vld [vmem:[#allocation2 + $0x90] sm:$0xff]
        %v5553 = vld [vmem:[#allocation2 + $0x98] sm:$0xff]
        %v5554 = vld [vmem:[#allocation2 + $0xa0] sm:$0xff]
        %v5555 = vld [vmem:[#allocation2 + $0xa8] sm:$0xff]
        %v5556 = vld [vmem:[#allocation2 + $0xb0] sm:$0xff]
        %v5557 = vld [vmem:[#allocation2 + $0xb8] sm:$0xff]
        %v5558 = vld [vmem:[#allocation2 + $0xc0] sm:$0xff]
        %v5559 = vld [vmem:[#allocation2 + $0xc8] sm:$0xff]
        %v5560 = vld [vmem:[#allocation2 + $0xd0] sm:$0xff]
        %v5561 = vld [vmem:[#allocation2 + $0xd8] sm:$0xff]
        %v5562 = vld [vmem:[#allocation2 + $0xe0] sm:$0xff]
        %v5563 = vld [vmem:[#allocation2 + $0xe8] sm:$0xff]
        %v5564 = vld [vmem:[#allocation2 + $0xf0] sm:$0xff]
        %v5565 = vld [vmem:[#allocation2 + $0xf8] sm:$0xff]
        %v5566 = vld [vmem:[#allocation2 + $0x100] sm:$0xff]
        %v5567 = vld [vmem:[#allocation2 + $0x108] sm:$0xff]
        %v5568 = vld [vmem:[#allocation2 + $0x110] sm:$0xff]
        %v5569 = vld [vmem:[#allocation2 + $0x118] sm:$0xff]
        %v5570 = vld [vmem:[#allocation2 + $0x120] sm:$0xff]
        %v5571 = vld [vmem:[#allocation2 + $0x128] sm:$0xff]
        %v5572 = vld [vmem:[#allocation2 + $0x130] sm:$0xff]
        %v5573 = vld [vmem:[#allocation2 + $0x138] sm:$0xff]
        %v5574 = vld [vmem:[#allocation2 + $0x140] sm:$0xff]
        %v5575 = vld [vmem:[#allocation2 + $0x148] sm:$0xf]
        %v5576 = vpack.c.bf16 %v5536, %v5535
        %v5577 = vpack.c.bf16 %v5538, %v5537
        %v5578 = vpack.c.bf16 %v5540, %v5539
        %v5579 = vpack.c.bf16 %v5542, %v5541
        %v5580 = vpack.c.bf16 %v5544, %v5543
        %v5581 = vpack.c.bf16 %v5546, %v5545
        %v5582 = vpack.c.bf16 %v5548, %v5547
        %v5583 = vpack.c.bf16 %v5550, %v5549
        %v5584 = vpack.c.bf16 %v5552, %v5551
        %v5585 = vpack.c.bf16 %v5554, %v5553
        %v5586 = vpack.c.bf16 %v5556, %v5555
        %v5587 = vpack.c.bf16 %v5558, %v5557
        %v5588 = vpack.c.bf16 %v5560, %v5559
        %v5589 = vpack.c.bf16 %v5562, %v5561
        %v5590 = vpack.c.bf16 %v5564, %v5563
        %v5591 = vpack.c.bf16 %v5566, %v5565
        %v5592 = vpack.c.bf16 %v5568, %v5567
        %v5593 = vpack.c.bf16 %v5570, %v5569
        %v5594 = vpack.c.bf16 %v5572, %v5571
        %v5595 = vpack.c.bf16 %v5574, %v5573
        %v5596 = vpack.c.bf16 %v5575, %v5575
        %v5618 = vunpack.c.l.b16 %v5576
        %v5619 = vunpack.c.h.b16 %v5576
        %v5620 = vunpack.c.l.b16 %v5577
        %v5621 = vunpack.c.h.b16 %v5577
        %v5622 = vunpack.c.l.b16 %v5578
        %v5623 = vunpack.c.h.b16 %v5578
        %v5624 = vunpack.c.l.b16 %v5579
        %v5625 = vunpack.c.h.b16 %v5579
        %v5626 = vunpack.c.l.b16 %v5580
        %v5627 = vunpack.c.h.b16 %v5580
        %v5628 = vunpack.c.l.b16 %v5581
        %v5629 = vunpack.c.h.b16 %v5581
        %v5630 = vunpack.c.l.b16 %v5582
        %v5631 = vunpack.c.h.b16 %v5582
        %v5632 = vunpack.c.l.b16 %v5583
        %v5633 = vunpack.c.h.b16 %v5583
        %v5634 = vunpack.c.l.b16 %v5584
        %v5635 = vunpack.c.h.b16 %v5584
        %v5636 = vunpack.c.l.b16 %v5585
        %v5637 = vunpack.c.h.b16 %v5585
        %v5638 = vunpack.c.l.b16 %v5586
        %v5639 = vunpack.c.h.b16 %v5586
        %v5640 = vunpack.c.l.b16 %v5587
        %v5641 = vunpack.c.h.b16 %v5587
        %v5642 = vunpack.c.l.b16 %v5588
        %v5643 = vunpack.c.h.b16 %v5588
        %v5644 = vunpack.c.l.b16 %v5589
        %v5645 = vunpack.c.h.b16 %v5589
        %v5646 = vunpack.c.l.b16 %v5590
        %v5647 = vunpack.c.h.b16 %v5590
        %v5648 = vunpack.c.l.b16 %v5591
        %v5649 = vunpack.c.h.b16 %v5591
        %v5650 = vunpack.c.l.b16 %v5592
        %v5651 = vunpack.c.h.b16 %v5592
        %v5652 = vunpack.c.l.b16 %v5593
        %v5653 = vunpack.c.h.b16 %v5593
        %v5654 = vunpack.c.l.b16 %v5594
        %v5655 = vunpack.c.h.b16 %v5594
        %v5656 = vunpack.c.l.b16 %v5595
        %v5657 = vunpack.c.h.b16 %v5595
        %v5658 = vunpack.c.l.b16 %v5596
        %v5659 = vpack.c.b16 %v5618, %v5618
        %v5660 = vpack.c.b16 %v5619, %v5619
        %v5661 = vpack.c.b16 %v5620, %v5620
        %v5662 = vpack.c.b16 %v5621, %v5621
        %v5663 = vpack.c.b16 %v5622, %v5622
        %v5664 = vpack.c.b16 %v5623, %v5623
        %v5665 = vpack.c.b16 %v5624, %v5624
        %v5666 = vpack.c.b16 %v5625, %v5625
        %v5667 = vpack.c.b16 %v5626, %v5626
        %v5668 = vpack.c.b16 %v5627, %v5627
        %v5669 = vpack.c.b16 %v5628, %v5628
        %v5670 = vpack.c.b16 %v5629, %v5629
        %v5671 = vpack.c.b16 %v5630, %v5630
        %v5672 = vpack.c.b16 %v5631, %v5631
        %v5673 = vpack.c.b16 %v5632, %v5632
        %v5674 = vpack.c.b16 %v5633, %v5633
        %v5675 = vpack.c.b16 %v5634, %v5634
        %v5676 = vpack.c.b16 %v5635, %v5635
        %v5677 = vpack.c.b16 %v5636, %v5636
        %v5678 = vpack.c.b16 %v5637, %v5637
        %v5679 = vpack.c.b16 %v5638, %v5638
        %v5680 = vpack.c.b16 %v5639, %v5639
        %v5681 = vpack.c.b16 %v5640, %v5640
        %v5682 = vpack.c.b16 %v5641, %v5641
        %v5683 = vpack.c.b16 %v5642, %v5642
        %v5684 = vpack.c.b16 %v5643, %v5643
        %v5685 = vpack.c.b16 %v5644, %v5644
        %v5686 = vpack.c.b16 %v5645, %v5645
        %v5687 = vpack.c.b16 %v5646, %v5646
        %v5688 = vpack.c.b16 %v5647, %v5647
        %v5689 = vpack.c.b16 %v5648, %v5648
        %v5690 = vpack.c.b16 %v5649, %v5649
        %v5691 = vpack.c.b16 %v5650, %v5650
        %v5692 = vpack.c.b16 %v5651, %v5651
        %v5693 = vpack.c.b16 %v5652, %v5652
        %v5694 = vpack.c.b16 %v5653, %v5653
        %v5695 = vpack.c.b16 %v5654, %v5654
        %v5696 = vpack.c.b16 %v5655, %v5655
        %v5697 = vpack.c.b16 %v5656, %v5656
        %v5698 = vpack.c.b16 %v5657, %v5657
        %v5699 = vpack.c.b16 %v5658, %v5658
        %5741 = vst.msk [vmem:[%s304] sm:$0xf] %vm3127, %v5659
        %5742 = vst.msk [vmem:[%s304 + $0x4] sm:$0xf] %vm3127, %v5660
        %5743 = vst.msk [vmem:[%s304 + $0x8] sm:$0xf] %vm3127, %v5661
        %5744 = vst.msk [vmem:[%s304 + $0xc] sm:$0xf] %vm3127, %v5662
        %5745 = vst.msk [vmem:[%s304 + $0x10] sm:$0xf] %vm3127, %v5663
        %5746 = vst.msk [vmem:[%s304 + $0x14] sm:$0xf] %vm3127, %v5664
        %5747 = vst.msk [vmem:[%s304 + $0x18] sm:$0xf] %vm3127, %v5665
        %5748 = vst.msk [vmem:[%s304 + $0x1c] sm:$0xf] %vm3127, %v5666
        %5749 = vst.msk [vmem:[%s304 + $0x20] sm:$0xf] %vm3127, %v5667
        %5750 = vst.msk [vmem:[%s304 + $0x24] sm:$0xf] %vm3127, %v5668
        %5751 = vst.msk [vmem:[%s304 + $0x28] sm:$0xf] %vm3127, %v5669
        %5752 = vst.msk [vmem:[%s304 + $0x2c] sm:$0xf] %vm3127, %v5670
        %5753 = vst.msk [vmem:[%s304 + $0x30] sm:$0xf] %vm3127, %v5671
        %5754 = vst.msk [vmem:[%s304 + $0x34] sm:$0xf] %vm3127, %v5672
        %5755 = vst.msk [vmem:[%s304 + $0x38] sm:$0xf] %vm3127, %v5673
        %5756 = vst.msk [vmem:[%s304 + $0x3c] sm:$0xf] %vm3127, %v5674
        %5757 = vst.msk [vmem:[%s304 + $0x40] sm:$0xf] %vm3127, %v5675
        %5758 = vst.msk [vmem:[%s304 + $0x44] sm:$0xf] %vm3127, %v5676
        %5759 = vst.msk [vmem:[%s304 + $0x48] sm:$0xf] %vm3127, %v5677
        %5760 = vst.msk [vmem:[%s304 + $0x4c] sm:$0xf] %vm3127, %v5678
        %5761 = vst.msk [vmem:[%s304 + $0x50] sm:$0xf] %vm3127, %v5679
        %5762 = vst.msk [vmem:[%s304 + $0x54] sm:$0xf] %vm3127, %v5680
        %5763 = vst.msk [vmem:[%s304 + $0x58] sm:$0xf] %vm3127, %v5681
        %5764 = vst.msk [vmem:[%s304 + $0x5c] sm:$0xf] %vm3127, %v5682
        %5765 = vst.msk [vmem:[%s304 + $0x60] sm:$0xf] %vm3127, %v5683
        %5766 = vst.msk [vmem:[%s304 + $0x64] sm:$0xf] %vm3127, %v5684
        %5767 = vst.msk [vmem:[%s304 + $0x68] sm:$0xf] %vm3127, %v5685
        %5768 = vst.msk [vmem:[%s304 + $0x6c] sm:$0xf] %vm3127, %v5686
        %5769 = vst.msk [vmem:[%s304 + $0x70] sm:$0xf] %vm3127, %v5687
        %5770 = vst.msk [vmem:[%s304 + $0x74] sm:$0xf] %vm3127, %v5688
        %5771 = vst.msk [vmem:[%s304 + $0x78] sm:$0xf] %vm3127, %v5689
        %5772 = vst.msk [vmem:[%s304 + $0x7c] sm:$0xf] %vm3127, %v5690
        %5773 = vst.msk [vmem:[%s304 + $0x80] sm:$0xf] %vm3127, %v5691
        %5774 = vst.msk [vmem:[%s304 + $0x84] sm:$0xf] %vm3127, %v5692
        %5775 = vst.msk [vmem:[%s304 + $0x88] sm:$0xf] %vm3127, %v5693
        %5776 = vst.msk [vmem:[%s304 + $0x8c] sm:$0xf] %vm3127, %v5694
        %5777 = vst.msk [vmem:[%s304 + $0x90] sm:$0xf] %vm3127, %v5695
        %5778 = vst.msk [vmem:[%s304 + $0x94] sm:$0xf] %vm3127, %v5696
        %5779 = vst.msk [vmem:[%s304 + $0x98] sm:$0xf] %vm3127, %v5697
        %5780 = vst.msk [vmem:[%s304 + $0x9c] sm:$0xf] %vm3127, %v5698
        %vm5781 = vcmask 254976
        %5782 = vst.msk [vmem:[%s304 + $0xa0] sm:$0x3] %vm5781, %v5699
      $region48: #{content_extractor_forward.1} parent=39 // pred_fallthru
        _
      %p5783 = scmp.lt.s32.totalorder %s20, 1
      %s5784 = scalar_select %p5783, %s20, 1
      %s5785 = smul.addr %s5784, 41
      %s5786 = smul.addr %s5785, 4
      %s5787 = scalar_lea.vmem %s5, %s5786
      // Predicated region
      $region49: #{content_extractor_forward.1} parent=39 // pred_check
        %p5788 = pneg %p176
      $region50: #{content_extractor_forward.1} parent=39 // pred_check_branch
        %5790 = sbr.rel (%p5788) target = $region52
      $region51: #{content_extractor_forward.1} parent=39 // pred_region
        _
      $region52: #{content_extractor_forward.1} parent=39 // pred_fallthru
        _
    $region40: #{content_extractor_forward.1} parent=5 // pred_fallthru
      _
    %p5791 = scmp.le.s32.totalorder 2, %s11
    // Predicated region
    $region53: #{content_extractor_forward.1} parent=5 // pred_check
      %p5792 = pneg %p5791
    $region54: #{content_extractor_forward.1} parent=5 // pred_check_branch
      %5794 = sbr.rel (%p5792) target = $region56
    $region55: #{content_extractor_forward.1} parent=5 // pred_region
      %s5795 = ssub.s32 %s11, 2
      // Predicated region
      $region57: #{content_extractor_forward.1} parent=55 // pred_check
        %p5796 = pneg %p182
      $region58: #{content_extractor_forward.1} parent=55 // pred_check_branch
        %5798 = sbr.rel (%p5796) target = $region60
      $region59: #{content_extractor_forward.1} parent=55 // pred_region
        %p5799 = scmp.lt.s32.totalorder %s22, 1
        %s5800 = scalar_select %p5799, %s22, 1
        %s5801 = smul.addr %s5800, 41
        %s5802 = smul.addr %s5801, 4
        %s5803 = scalar_lea.vmem %s5, %s5802
      $region60: #{content_extractor_forward.1} parent=55 // pred_fallthru
        _
    $region56: #{content_extractor_forward.1} parent=5 // pred_fallthru
      _
  $region6: #{content_extractor_forward.1} parent=0 // loop_footer
    %s15 = sadd.s32 1, %s11
  $region7: #{content_extractor_forward.1} parent=0 // loop_footer_branch
    %10 = sbr.rel target = $region3
  $region8: #{content_extractor_forward.1} parent=0 // loop_exit
    _

</llo_original>
